<compile_context>
chip_gen: v7x
topology: tpu7x:2x2x1
jax: 0.10.0
libtpu: 0.0.40
codegen_flags: <defaults>
</compile_context>

<pallas_src>
import math
from collections import namedtuple
from functools import partial

import numpy as np
import jax
import jax.numpy as jnp
from jax import lax
from jax.experimental import pallas as pl
from jax.experimental.pallas import tpu as pltpu

# ------------------------- config (small synthetic) -------------------------
VOCAB = 64
VOCAB_PAD = 128             # lane-dense lm_head output; sliced back to VOCAB
D_MODEL = 32
N_LAYER = 2
ATTN_LAYERS = (1,)          # mamba_config.attn_layers -> layer 1 is MHA
N_HEADS = 4
HEAD_DIM = D_MODEL // N_HEADS
D_FF = 64
D_INNER = 2 * D_MODEL
D_STATE = 16
D_CONV = 4
DT_RANK = max(D_MODEL // 16, 1)
PAD_TOKEN_ID = 0
EPS = 1e-6

_VMEM = lambda: pl.BlockSpec(memory_space=pltpu.MemorySpace.VMEM)
_SMEM = lambda: pl.BlockSpec(memory_space=pltpu.MemorySpace.SMEM)


def _rms(x, w):
    var = jnp.mean(x * x, axis=-1, keepdims=True)
    return x * lax.rsqrt(var + EPS) * w


def _silu(x):
    return x * jax.nn.sigmoid(x)


def _bf(x):
    return x.astype(jnp.bfloat16)


# --------------------------- fused whole-model kernel -------------------------
def _model_kernel(last_idx_ref,                      # SMEM (n_rows,) int32
                  h_ref, pos_ref, cos_ref, sin_ref,  # activations / tables
                  m_norm, m_in_proj, m_conv_w, m_conv_b, m_x_proj,
                  m_dt_w, m_dt_b, m_A_T, m_D, m_out_proj,
                  a_ln1, a_qkvp, a_o, a_ln2, a_gu, a_dn,
                  norm_f, lm_head,
                  o_ref,
                  h_fin_ref):                        # VMEM scratch (T, D_MODEL)
    T = h_ref.shape[0]
    pos = pos_ref[...]                               # (T, 1) int32
    keep = (pos != 0).astype(jnp.float32)            # scan-state reset at seq starts

    # ------------------------- Mamba decoder layer -------------------------
    def mamba_block(h):
        hn = _rms(h, m_norm[...])
        xz = jnp.dot(_bf(hn), m_in_proj[...], preferred_element_type=jnp.float32)
        x = xz[:, :D_INNER]
        z = xz[:, D_INNER:]

        # causal depthwise conv + SiLU.  Token t-k contributes only when
        # pos[t] >= k, so there is no leak across sequence boundaries and the
        # zero-padded shift is provably correct.
        # TODO(synk): swap the pad+slice shift for pltpu.roll(x, k, axis=0)
        # (XLU slot) once the rotate direction is verified on-device.
        w_all = m_conv_w[...]                        # (D_CONV, D_INNER)
        acc = w_all[0:1, :] * x
        for k in range(1, D_CONV):
            xs = jnp.concatenate(
                [jnp.zeros((k, D_INNER), jnp.float32), x[:T - k, :]], axis=0)
            valid = (pos >= k).astype(jnp.float32)   # (T, 1)
            acc = acc + w_all[k:k + 1, :] * (xs * valid)
        xc = _silu(acc + m_conv_b[...])

        # x_proj: columns laid out [B | C | dt_raw] (aligned lane offsets)
        x_dbl = jnp.dot(_bf(xc), m_x_proj[...], preferred_element_type=jnp.float32)
        B_m = x_dbl[:, :D_STATE]
        C_m = x_dbl[:, D_STATE:2 * D_STATE]

        # dt_proj with K = DT_RANK = 2: two VPU broadcast-FMAs (no MXU dot),
        # then a numerically safe softplus.
        dt = m_dt_b[...]
        for r in range(DT_RANK):
            dt = dt + x_dbl[:, 2 * D_STATE + r:2 * D_STATE + r + 1] * m_dt_w[r:r + 1, :]
        dt = jnp.maximum(dt, 0.0) + jnp.log(1.0 + jnp.exp(-jnp.abs(dt)))
        dtx = dt * xc

        # Selective scan, block-vectorized: dA / dBx for every token are
        # computed up front; the serial recurrence is just 2 VALU ops/token on
        # a register-resident (D_STATE, D_INNER) state (no VMEM scratch).
        A_T = m_A_T[...]                                            # (S, Din)
        dA = jnp.exp(dt[:, None, :] * A_T[None, :, :]) * keep[:, :, None]   # (T,S,Din)
        dBx = B_m[:, :, None] * dtx[:, None, :]                             # (T,S,Din)
        st = jnp.zeros((D_STATE, D_INNER), jnp.float32)
        sts = []
        for t in range(T):      # TODO(synk): chunked (Mamba2) scan for long T
            st = st * dA[t] + dBx[t]
            sts.append(st)
        sts = jnp.stack(sts, axis=0)                                # (T,S,Din)
        y = jnp.sum(C_m[:, :, None] * sts, axis=1)                  # (T, Din)

        y = (y + m_D[...] * xc) * _silu(z)
        return h + jnp.dot(_bf(y), m_out_proj[...],
                           preferred_element_type=jnp.float32)

    # -------------------------- MHA decoder layer ---------------------------
    cos = cos_ref[...]                               # (T, D_MODEL)
    sin = sin_ref[...]                               # (T, D_MODEL), sign folded in
    row_i = lax.broadcasted_iota(jnp.int32, (T, T), 0)
    col_i = lax.broadcasted_iota(jnp.int32, (T, T), 1)
    # block-diagonal causal mask from positions (varlen): key j visible to
    # query i iff  i - pos[i] <= j <= i
    visible = jnp.logical_and(col_i <= row_i, col_i >= row_i - pos)

    def mha_block(h):
        hn = _rms(h, a_ln1[...])
        # one fused projection producing q | k | v | q@P | k@P, where P is the
        # rotate-half partner permutation folded into the weights -> RoPE is
        # purely elementwise and batched over all heads.
        qkvp = jnp.dot(_bf(hn), a_qkvp[...], preferred_element_type=jnp.float32)
        q = qkvp[:, 0 * D_MODEL:1 * D_MODEL]
        k = qkvp[:, 1 * D_MODEL:2 * D_MODEL]
        v = qkvp[:, 2 * D_MODEL:3 * D_MODEL]
        qp = qkvp[:, 3 * D_MODEL:4 * D_MODEL]
        kp = qkvp[:, 4 * D_MODEL:5 * D_MODEL]
        q = q * cos + qp * sin
        k = k * cos + kp * sin

        scale = 1.0 / math.sqrt(HEAD_DIM)
        qh = jnp.stack([q[:, i * HEAD_DIM:(i + 1) * HEAD_DIM]
                        for i in range(N_HEADS)], axis=0)           # (H,T,Dh)
        kh = jnp.stack([k[:, i * HEAD_DIM:(i + 1) * HEAD_DIM]
                        for i in range(N_HEADS)], axis=0)
        vh = jnp.stack([v[:, i * HEAD_DIM:(i + 1) * HEAD_DIM]
                        for i in range(N_HEADS)], axis=0)

        s = jnp.einsum('hqd,hkd->hqk', _bf(qh), _bf(kh),
                       preferred_element_type=jnp.float32) * scale  # (H,T,T)
        s = jnp.where(visible[None, :, :], s, -1e30)                # select mask
        m = jnp.max(s, axis=-1, keepdims=True)
        e = jnp.exp(s - m)
        pr = e * pl.reciprocal(jnp.sum(e, axis=-1, keepdims=True), approx=True)
        o3 = jnp.einsum('hqk,hkd->hqd', _bf(pr), _bf(vh),
                        preferred_element_type=jnp.float32)          # (H,T,Dh)
        attn = jnp.concatenate([o3[i] for i in range(N_HEADS)], axis=-1)
        h = h + jnp.dot(_bf(attn), a_o[...], preferred_element_type=jnp.float32)

        # RMSNorm + fused SwiGLU MLP
        hn2 = _rms(h, a_ln2[...])
        gu = jnp.dot(_bf(hn2), a_gu[...], preferred_element_type=jnp.float32)
        act = _silu(gu[:, :D_FF]) * gu[:, D_FF:]
        return h + jnp.dot(_bf(act), a_dn[...], preferred_element_type=jnp.float32)

    # ------------------------------ layer stack -----------------------------
    # TODO(synk): a real checkpoint would pass stacked per-layer weights; here
    # there is exactly one Mamba layer and one MHA layer.
    h = h_ref[...]
    for layer_idx in range(N_LAYER):
        h = mha_block(h) if layer_idx in ATTN_LAYERS else mamba_block(h)

    # final RMSNorm commutes with the per-token last-token gather -> gather the
    # bsz*num_last_tokens rows first, then one lane-dense (rows, 128) head matmul.
    h_fin_ref[...] = h
    n_rows = last_idx_ref.shape[0]
    rows = [h_fin_ref[pl.ds(last_idx_ref[r], 1), :] for r in range(n_rows)]
    hlast = jnp.concatenate(rows, axis=0) if n_rows > 1 else rows[0]
    xn = _rms(hlast, norm_f[...])
    o_ref[...] = jnp.dot(_bf(xn), lm_head[...], preferred_element_type=jnp.float32)


def model_forward(p, h, pos_col, cos, sin, last_idx):
    T = h.shape[0]
    n_rows = last_idx.shape[0]
    return pl.pallas_call(
        _model_kernel,
        out_shape=jax.ShapeDtypeStruct((n_rows, VOCAB_PAD), jnp.float32),
        in_specs=[_SMEM()] + [_VMEM()] * 22,
        out_specs=_VMEM(),
        scratch_shapes=[pltpu.VMEM((T, D_MODEL), jnp.float32)],
    )(last_idx, h, pos_col, cos, sin,
      p["m_norm"], p["m_in_proj"], p["m_conv_w"], p["m_conv_b"], p["m_x_proj"],
      p["m_dt_w"], p["m_dt_b"], p["m_A_T"], p["m_D"], p["m_out_proj"],
      p["a_ln1"], p["a_qkvp"], p["a_o"], p["a_ln2"], p["a_gate_up"], p["a_down"],
      p["norm_f"], p["lm_head"])


# ------------------------------- JAX glue ------------------------------------
@partial(jax.jit, static_argnames=("num_last_tokens",))
def _forward_core(params, tokens, pos, last_idx, num_last_tokens):
    n_rows = last_idx.shape[0]
    B = n_rows // num_last_tokens
    pos_col = pos[:, None].astype(jnp.int32)                 # (T, 1)

    # RoPE tables over the head-contiguous D_MODEL lane order, rotate-half
    # sign folded into the sin table (cheap O(T*D) glue).
    half = HEAD_DIM // 2
    lane = np.arange(D_MODEL)
    p_local = lane % HEAD_DIM
    inv_freq = 1.0 / (10000.0 ** ((p_local % half).astype(np.float32) / half))
    sign = np.where(p_local < half, -1.0, 1.0).astype(np.float32)
    ang = pos.astype(jnp.float32)[:, None] * jnp.asarray(inv_freq)[None, :]
    cos_full = jnp.cos(ang)
    sin_signed = jnp.sin(ang) * jnp.asarray(sign)[None, :]

    # embed_tokens (gather glue)
    h = jnp.take(params["embed"], tokens, axis=0)            # (T, D_MODEL) f32

    logits = model_forward(params, h, pos_col, cos_full, sin_signed, last_idx)
    logits = logits[:, :VOCAB]                               # drop lane padding
    return logits.reshape(B, num_last_tokens, VOCAB)


CausalLMOutput = namedtuple("CausalLMOutput", ["logits"])


class InferenceParams:
    def __init__(self):
        self.seqlen_offset = 0
        self.lengths_per_sample = None


def forward(params, input_ids, inference_params, num_last_tokens,
            pad_token_id=PAD_TOKEN_ID):
    assert inference_params.seqlen_offset == 0 and num_last_tokens > 0
    ids = np.array(input_ids)
    B, S = ids.shape

    # ---- unpad_input_ids (host-side glue; data-dependent shapes) ----
    attention_mask = ids != pad_token_id
    seq_lengths = attention_mask.sum(1).astype(np.int32)
    cu_seqlens = np.zeros(B + 1, np.int32)
    cu_seqlens[1:] = np.cumsum(seq_lengths)
    flat_ids = ids[attention_mask].astype(np.int32)
    position_ids = (np.cumsum(attention_mask, axis=1) - 1)[attention_mask]
    position_ids = position_ids.astype(np.int32)

    # Bucket the padded length to a power of two (>= 16) so different batches
    # hit the same compiled kernel.  Padding tokens are appended at the END
    # and get pos == 0 (isolated one-token "sequences"): they reset the scan
    # state and self-attend only, so they cannot influence real tokens.
    T_real = int(flat_ids.shape[0])
    T_pad = max(16, 1 << (T_real - 1).bit_length())
    npad = T_pad - T_real
    flat_ids = np.concatenate([flat_ids, np.full(npad, pad_token_id, np.int32)])
    position_ids = np.concatenate([position_ids, np.zeros(npad, np.int32)])

    # get_last_n_states gather indices (refer to real, pre-padding rows)
    end_indices = cu_seqlens[1:] - 1
    offsets = np.arange(-num_last_tokens + 1, 1, dtype=np.int32)
    last_idx = (end_indices[:, None] + offsets[None, :]).reshape(-1).astype(np.int32)

    logits = _forward_core(params, jnp.asarray(flat_ids),
                           jnp.asarray(position_ids),
                           jnp.asarray(last_idx), num_last_tokens)

    if inference_params.lengths_per_sample is None:
        inference_params.lengths_per_sample = np.zeros(B, np.int32)
    inference_params.lengths_per_sample = (
        inference_params.lengths_per_sample + seq_lengths)

    return CausalLMOutput(logits=logits)


# ----------------------------- parameter init --------------------------------
def init_params(key):
    ks = jax.random.split(key, 16)
    bf = jnp.bfloat16

    def n(i, shape, scale=0.02):
        return scale * jax.random.normal(ks[i], shape, dtype=jnp.float32)

    p = {}
    p["embed"] = n(0, (VOCAB, D_MODEL), 1.0)
    # Mamba layer 0
    p["m_norm"] = jnp.ones((1, D_MODEL), jnp.float32)
    p["m_in_proj"] = n(1, (D_MODEL, 2 * D_INNER)).astype(bf)
    p["m_conv_w"] = n(2, (D_CONV, D_INNER), 0.1)
    p["m_conv_b"] = jnp.zeros((1, D_INNER), jnp.float32)
    p["m_x_proj"] = n(3, (D_INNER, 2 * D_STATE + DT_RANK)).astype(bf)  # [B|C|dt]
    p["m_dt_w"] = n(4, (DT_RANK, D_INNER), 0.1)
    p["m_dt_b"] = jnp.full((1, D_INNER), -2.0, jnp.float32)
    A = jnp.tile(jnp.arange(1, D_STATE + 1, dtype=jnp.float32)[None, :],
                 (D_INNER, 1))                               # A_log = log(A)
    p["m_A_T"] = (-A).T                                      # (-exp(A_log)).T
    p["m_D"] = jnp.ones((1, D_INNER), jnp.float32)
    p["m_out_proj"] = n(5, (D_INNER, D_MODEL)).astype(bf)
    # MHA layer 1: fused [Wq | Wk | Wv | Wq@P | Wk@P], P = rotate-half partner
    # permutation (d -> d XOR half within each head) folded into the weights.
    p["a_ln1"] = jnp.ones((1, D_MODEL), jnp.float32)
    wq, wk, wv = (n(6, (D_MODEL, D_MODEL)), n(7, (D_MODEL, D_MODEL)),
                  n(8, (D_MODEL, D_MODEL)))
    half = HEAD_DIM // 2
    perm = np.arange(D_MODEL) ^ half
    P = np.zeros((D_MODEL, D_MODEL), np.float32)
    P[np.arange(D_MODEL), perm] = 1.0
    P = jnp.asarray(P)
    p["a_qkvp"] = jnp.concatenate([wq, wk, wv, wq @ P, wk @ P], axis=1).astype(bf)
    p["a_o"] = n(9, (D_MODEL, D_MODEL)).astype(bf)
    p["a_ln2"] = jnp.ones((1, D_MODEL), jnp.float32)
    p["a_gate_up"] = jnp.concatenate(
        [n(10, (D_MODEL, D_FF)), n(11, (D_MODEL, D_FF))], axis=1).astype(bf)
    p["a_down"] = n(12, (D_FF, D_MODEL)).astype(bf)
    # head: lm_head padded to 128 output lanes (lane-dense store)
    p["norm_f"] = jnp.ones((1, D_MODEL), jnp.float32)
    w_head = jnp.concatenate(
        [n(13, (D_MODEL, VOCAB)),
         jnp.zeros((D_MODEL, VOCAB_PAD - VOCAB), jnp.float32)], axis=1)
    p["lm_head"] = w_head.astype(bf)
    return p


# ---------------------------------- main --------------------------------------
if __name__ == "__main__":
    key = jax.random.PRNGKey(0)
    pkey, dkey = jax.random.split(key)
    params = init_params(pkey)

    B, S = 2, 8
    ids = np.array(jax.random.randint(dkey, (B, S), 1, VOCAB, dtype=jnp.int32))
    ids[1, 6:] = PAD_TOKEN_ID          # sequence lengths: [8, 6]

    inference_params = InferenceParams()
    out = forward(params, ids, inference_params, num_last_tokens=1)
    jax.block_until_ready(out.logits)

    assert out.logits.shape == (B, 1, VOCAB)
    assert bool(jnp.all(jnp.isfinite(out.logits)))
    assert tuple(inference_params.lengths_per_sample.tolist()) == (8, 6)
    print("KERNEL_OK")
</pallas_src>

<mosaic_0001>
module attributes {stable_mosaic.version = 11 : i64} {
  func.func @_model_kernel(%arg0: memref<2xi32, #tpu.memory_space<smem>>, %arg1: memref<16x32xf32, #tpu.memory_space<vmem>>, %arg2: memref<16x1xi32, #tpu.memory_space<vmem>>, %arg3: memref<16x32xf32, #tpu.memory_space<vmem>>, %arg4: memref<16x32xf32, #tpu.memory_space<vmem>>, %arg5: memref<1x32xf32, #tpu.memory_space<vmem>>, %arg6: memref<32x128xbf16, #tpu.memory_space<vmem>>, %arg7: memref<4x64xf32, #tpu.memory_space<vmem>>, %arg8: memref<1x64xf32, #tpu.memory_space<vmem>>, %arg9: memref<64x34xbf16, #tpu.memory_space<vmem>>, %arg10: memref<2x64xf32, #tpu.memory_space<vmem>>, %arg11: memref<1x64xf32, #tpu.memory_space<vmem>>, %arg12: memref<16x64xf32, #tpu.memory_space<vmem>>, %arg13: memref<1x64xf32, #tpu.memory_space<vmem>>, %arg14: memref<64x32xbf16, #tpu.memory_space<vmem>>, %arg15: memref<1x32xf32, #tpu.memory_space<vmem>>, %arg16: memref<32x160xbf16, #tpu.memory_space<vmem>>, %arg17: memref<32x32xbf16, #tpu.memory_space<vmem>>, %arg18: memref<1x32xf32, #tpu.memory_space<vmem>>, %arg19: memref<32x128xbf16, #tpu.memory_space<vmem>>, %arg20: memref<64x32xbf16, #tpu.memory_space<vmem>>, %arg21: memref<1x32xf32, #tpu.memory_space<vmem>>, %arg22: memref<32x128xbf16, #tpu.memory_space<vmem>>, %arg23: memref<2x128xf32, #tpu.memory_space<vmem>>, %arg24: memref<16x32xf32, #tpu.memory_space<vmem>>) attributes {dimension_semantics = [], scalar_prefetch = 0 : i64, scratch_operands = 1 : i64, tpu.core_type = #tpu.core_type<tc>} {
    %c0 = arith.constant 0 : index
    %c0_0 = arith.constant 0 : index
    %0 = vector.load %arg2[%c0, %c0_0] : memref<16x1xi32, #tpu.memory_space<vmem>>, vector<16x1xi32>
    %c0_i32 = arith.constant 0 : i32
    %1 = vector.broadcast %c0_i32 : i32 to vector<16x1xi32>
    %2 = arith.cmpi ne, %0, %1 : vector<16x1xi32>
    %3 = arith.extui %2 : vector<16x1xi1> to vector<16x1xi32>
    %4 = arith.sitofp %3 : vector<16x1xi32> to vector<16x1xf32>
    %c0_1 = arith.constant 0 : index
    %c0_2 = arith.constant 0 : index
    %5 = vector.load %arg3[%c0_1, %c0_2] : memref<16x32xf32, #tpu.memory_space<vmem>>, vector<16x32xf32>
    %c0_3 = arith.constant 0 : index
    %c0_4 = arith.constant 0 : index
    %6 = vector.load %arg4[%c0_3, %c0_4] : memref<16x32xf32, #tpu.memory_space<vmem>>, vector<16x32xf32>
    %7 = tpu.iota {dimensions = array<i32: 0>} : vector<16x16xi32>
    %8 = tpu.iota {dimensions = array<i32: 1>} : vector<16x16xi32>
    %9 = arith.cmpi sle, %8, %7 : vector<16x16xi32>
    %10 = vector.broadcast %0 : vector<16x1xi32> to vector<16x16xi32>
    %11 = arith.subi %7, %10 : vector<16x16xi32>
    %12 = arith.cmpi sge, %8, %11 : vector<16x16xi32>
    %13 = arith.andi %9, %12 : vector<16x16xi1>
    %c0_5 = arith.constant 0 : index
    %c0_6 = arith.constant 0 : index
    %14 = vector.load %arg1[%c0_5, %c0_6] : memref<16x32xf32, #tpu.memory_space<vmem>>, vector<16x32xf32>
    %c0_7 = arith.constant 0 : index
    %c0_8 = arith.constant 0 : index
    %15 = vector.load %arg5[%c0_7, %c0_8] : memref<1x32xf32, #tpu.memory_space<vmem>>, vector<1x32xf32>
    %16 = arith.mulf %14, %14 : vector<16x32xf32>
    %cst = arith.constant dense<0.000000e+00> : vector<16xf32>
    %17 = vector.multi_reduction <add>, %16, %cst [1] : vector<16x32xf32> to vector<16xf32>
    %18 = vector.shape_cast %17 : vector<16xf32> to vector<16x1xf32>
    %cst_9 = arith.constant 3.200000e+01 : f32
    %19 = vector.broadcast %cst_9 : f32 to vector<16x1xf32>
    %20 = arith.divf %18, %19 : vector<16x1xf32>
    %cst_10 = arith.constant 9.99999997E-7 : f32
    %21 = vector.broadcast %cst_10 : f32 to vector<16x1xf32>
    %22 = arith.addf %20, %21 : vector<16x1xf32>
    %23 = math.rsqrt %22 : vector<16x1xf32>
    %24 = vector.broadcast %23 : vector<16x1xf32> to vector<16x32xf32>
    %25 = arith.mulf %14, %24 : vector<16x32xf32>
    %26 = vector.broadcast %15 : vector<1x32xf32> to vector<16x32xf32>
    %27 = arith.mulf %25, %26 : vector<16x32xf32>
    %28 = arith.truncf %27 : vector<16x32xf32> to vector<16x32xbf16>
    %c0_11 = arith.constant 0 : index
    %c0_12 = arith.constant 0 : index
    %29 = vector.load %arg6[%c0_11, %c0_12] : memref<32x128xbf16, #tpu.memory_space<vmem>>, vector<32x128xbf16>
    %cst_13 = arith.constant dense<0.000000e+00> : vector<16x128xf32>
    %30 = tpu.matmul %28, %29, %cst_13 {dimension_numbers = #tpu.dot_dimension_numbers<[1], [0], [0], [1], [0, 0, 1, 1], [], []>} : vector<16x32xbf16>, vector<32x128xbf16>, vector<16x128xf32> -> vector<16x128xf32>
    %31 = vector.extract_strided_slice %30 {offsets = [0, 0], sizes = [16, 64], strides = [1, 1]} : vector<16x128xf32> to vector<16x64xf32>
    %32 = vector.extract_strided_slice %30 {offsets = [0, 64], sizes = [16, 64], strides = [1, 1]} : vector<16x128xf32> to vector<16x64xf32>
    %c0_14 = arith.constant 0 : index
    %c0_15 = arith.constant 0 : index
    %33 = vector.load %arg7[%c0_14, %c0_15] : memref<4x64xf32, #tpu.memory_space<vmem>>, vector<4x64xf32>
    %34 = vector.extract_strided_slice %33 {offsets = [0, 0], sizes = [1, 64], strides = [1, 1]} : vector<4x64xf32> to vector<1x64xf32>
    %35 = vector.broadcast %34 : vector<1x64xf32> to vector<16x64xf32>
    %36 = arith.mulf %35, %31 : vector<16x64xf32>
    %cst_16 = arith.constant 0.000000e+00 : f32
    %37 = vector.broadcast %cst_16 : f32 to vector<1x64xf32>
    %38 = vector.extract_strided_slice %31 {offsets = [0, 0], sizes = [15, 64], strides = [1, 1]} : vector<16x64xf32> to vector<15x64xf32>
    %39 = tpu.concatenate %37, %38 in 0 : vector<1x64xf32>, vector<15x64xf32> -> vector<16x64xf32>
    %c1_i32 = arith.constant 1 : i32
    %40 = vector.broadcast %c1_i32 : i32 to vector<16x1xi32>
    %41 = arith.cmpi sge, %0, %40 : vector<16x1xi32>
    %42 = arith.extui %41 : vector<16x1xi1> to vector<16x1xi32>
    %43 = arith.sitofp %42 : vector<16x1xi32> to vector<16x1xf32>
    %44 = vector.extract_strided_slice %33 {offsets = [1, 0], sizes = [1, 64], strides = [1, 1]} : vector<4x64xf32> to vector<1x64xf32>
    %45 = vector.broadcast %43 : vector<16x1xf32> to vector<16x64xf32>
    %46 = arith.mulf %39, %45 : vector<16x64xf32>
    %47 = vector.broadcast %44 : vector<1x64xf32> to vector<16x64xf32>
    %48 = arith.mulf %47, %46 : vector<16x64xf32>
    %49 = arith.addf %36, %48 : vector<16x64xf32>
    %cst_17 = arith.constant 0.000000e+00 : f32
    %50 = vector.broadcast %cst_17 : f32 to vector<2x64xf32>
    %51 = vector.extract_strided_slice %31 {offsets = [0, 0], sizes = [14, 64], strides = [1, 1]} : vector<16x64xf32> to vector<14x64xf32>
    %52 = tpu.concatenate %50, %51 in 0 : vector<2x64xf32>, vector<14x64xf32> -> vector<16x64xf32>
    %c2_i32 = arith.constant 2 : i32
    %53 = vector.broadcast %c2_i32 : i32 to vector<16x1xi32>
    %54 = arith.cmpi sge, %0, %53 : vector<16x1xi32>
    %55 = arith.extui %54 : vector<16x1xi1> to vector<16x1xi32>
    %56 = arith.sitofp %55 : vector<16x1xi32> to vector<16x1xf32>
    %57 = vector.extract_strided_slice %33 {offsets = [2, 0], sizes = [1, 64], strides = [1, 1]} : vector<4x64xf32> to vector<1x64xf32>
    %58 = vector.broadcast %56 : vector<16x1xf32> to vector<16x64xf32>
    %59 = arith.mulf %52, %58 : vector<16x64xf32>
    %60 = vector.broadcast %57 : vector<1x64xf32> to vector<16x64xf32>
    %61 = arith.mulf %60, %59 : vector<16x64xf32>
    %62 = arith.addf %49, %61 : vector<16x64xf32>
    %cst_18 = arith.constant 0.000000e+00 : f32
    %63 = vector.broadcast %cst_18 : f32 to vector<3x64xf32>
    %64 = vector.extract_strided_slice %31 {offsets = [0, 0], sizes = [13, 64], strides = [1, 1]} : vector<16x64xf32> to vector<13x64xf32>
    %65 = tpu.concatenate %63, %64 in 0 : vector<3x64xf32>, vector<13x64xf32> -> vector<16x64xf32>
    %c3_i32 = arith.constant 3 : i32
    %66 = vector.broadcast %c3_i32 : i32 to vector<16x1xi32>
    %67 = arith.cmpi sge, %0, %66 : vector<16x1xi32>
    %68 = arith.extui %67 : vector<16x1xi1> to vector<16x1xi32>
    %69 = arith.sitofp %68 : vector<16x1xi32> to vector<16x1xf32>
    %70 = vector.extract_strided_slice %33 {offsets = [3, 0], sizes = [1, 64], strides = [1, 1]} : vector<4x64xf32> to vector<1x64xf32>
    %71 = vector.broadcast %69 : vector<16x1xf32> to vector<16x64xf32>
    %72 = arith.mulf %65, %71 : vector<16x64xf32>
    %73 = vector.broadcast %70 : vector<1x64xf32> to vector<16x64xf32>
    %74 = arith.mulf %73, %72 : vector<16x64xf32>
    %75 = arith.addf %62, %74 : vector<16x64xf32>
    %c0_19 = arith.constant 0 : index
    %c0_20 = arith.constant 0 : index
    %76 = vector.load %arg8[%c0_19, %c0_20] : memref<1x64xf32, #tpu.memory_space<vmem>>, vector<1x64xf32>
    %77 = vector.broadcast %76 : vector<1x64xf32> to vector<16x64xf32>
    %78 = arith.addf %75, %77 : vector<16x64xf32>
    %79 = arith.negf %78 : vector<16x64xf32>
    %80 = math.exp %79 : vector<16x64xf32>
    %cst_21 = arith.constant 1.000000e+00 : f32
    %81 = vector.broadcast %cst_21 : f32 to vector<16x64xf32>
    %82 = arith.addf %81, %80 : vector<16x64xf32>
    %83 = arith.divf %81, %82 : vector<16x64xf32>
    %84 = arith.mulf %78, %83 : vector<16x64xf32>
    %85 = arith.truncf %84 : vector<16x64xf32> to vector<16x64xbf16>
    %c0_22 = arith.constant 0 : index
    %c0_23 = arith.constant 0 : index
    %86 = vector.load %arg9[%c0_22, %c0_23] : memref<64x34xbf16, #tpu.memory_space<vmem>>, vector<64x34xbf16>
    %cst_24 = arith.constant dense<0.000000e+00> : vector<16x34xf32>
    %87 = tpu.matmul %85, %86, %cst_24 {dimension_numbers = #tpu.dot_dimension_numbers<[1], [0], [0], [1], [0, 0, 1, 1], [], []>} : vector<16x64xbf16>, vector<64x34xbf16>, vector<16x34xf32> -> vector<16x34xf32>
    %88 = vector.extract_strided_slice %87 {offsets = [0, 0], sizes = [16, 16], strides = [1, 1]} : vector<16x34xf32> to vector<16x16xf32>
    %89 = vector.extract_strided_slice %87 {offsets = [0, 16], sizes = [16, 16], strides = [1, 1]} : vector<16x34xf32> to vector<16x16xf32>
    %c0_25 = arith.constant 0 : index
    %c0_26 = arith.constant 0 : index
    %90 = vector.load %arg11[%c0_25, %c0_26] : memref<1x64xf32, #tpu.memory_space<vmem>>, vector<1x64xf32>
    %91 = vector.extract_strided_slice %87 {offsets = [0, 32], sizes = [16, 1], strides = [1, 1]} : vector<16x34xf32> to vector<16x1xf32>
    %c0_27 = arith.constant 0 : index
    %c0_28 = arith.constant 0 : index
    %92 = vector.load %arg10[%c0_27, %c0_28] : memref<2x64xf32, #tpu.memory_space<vmem>>, vector<1x64xf32>
    %93 = vector.broadcast %91 : vector<16x1xf32> to vector<16x64xf32>
    %94 = vector.broadcast %92 : vector<1x64xf32> to vector<16x64xf32>
    %95 = arith.mulf %93, %94 : vector<16x64xf32>
    %96 = vector.broadcast %90 : vector<1x64xf32> to vector<16x64xf32>
    %97 = arith.addf %96, %95 : vector<16x64xf32>
    %98 = vector.extract_strided_slice %87 {offsets = [0, 33], sizes = [16, 1], strides = [1, 1]} : vector<16x34xf32> to vector<16x1xf32>
    %c1 = arith.constant 1 : index
    %c0_29 = arith.constant 0 : index
    %99 = vector.load %arg10[%c1, %c0_29] : memref<2x64xf32, #tpu.memory_space<vmem>>, vector<1x64xf32>
    %100 = vector.broadcast %98 : vector<16x1xf32> to vector<16x64xf32>
    %101 = vector.broadcast %99 : vector<1x64xf32> to vector<16x64xf32>
    %102 = arith.mulf %100, %101 : vector<16x64xf32>
    %103 = arith.addf %97, %102 : vector<16x64xf32>
    %cst_30 = arith.constant 0.000000e+00 : f32
    %104 = vector.broadcast %cst_30 : f32 to vector<16x64xf32>
    %105 = arith.maximumf %103, %104 : vector<16x64xf32>
    %106 = math.absf %103 : vector<16x64xf32>
    %cst_31 = arith.constant 0.000000e+00 : f32
    %107 = vector.broadcast %cst_31 : f32 to vector<16x64xf32>
    %108 = arith.subf %107, %106 : vector<16x64xf32>
    %109 = math.exp %108 : vector<16x64xf32>
    %cst_32 = arith.constant 1.000000e+00 : f32
    %110 = vector.broadcast %cst_32 : f32 to vector<16x64xf32>
    %111 = arith.addf %110, %109 : vector<16x64xf32>
    %112 = math.log %111 : vector<16x64xf32>
    %113 = arith.addf %105, %112 : vector<16x64xf32>
    %114 = arith.mulf %113, %84 : vector<16x64xf32>
    %c0_33 = arith.constant 0 : index
    %c0_34 = arith.constant 0 : index
    %115 = vector.load %arg12[%c0_33, %c0_34] : memref<16x64xf32, #tpu.memory_space<vmem>>, vector<16x64xf32>
    %116 = vector.shape_cast %113 : vector<16x64xf32> to vector<16x1x64xf32>
    %117 = vector.shape_cast %115 : vector<16x64xf32> to vector<1x16x64xf32>
    %118 = vector.broadcast %116 : vector<16x1x64xf32> to vector<16x16x64xf32>
    %119 = vector.broadcast %117 : vector<1x16x64xf32> to vector<16x16x64xf32>
    %120 = arith.mulf %118, %119 : vector<16x16x64xf32>
    %121 = math.exp %120 : vector<16x16x64xf32>
    %122 = vector.shape_cast %4 : vector<16x1xf32> to vector<16x1x1xf32>
    %123 = vector.broadcast %122 : vector<16x1x1xf32> to vector<16x16x64xf32>
    %124 = arith.mulf %121, %123 : vector<16x16x64xf32>
    %125 = vector.shape_cast %88 : vector<16x16xf32> to vector<16x16x1xf32>
    %126 = vector.shape_cast %114 : vector<16x64xf32> to vector<16x1x64xf32>
    %127 = vector.broadcast %125 : vector<16x16x1xf32> to vector<16x16x64xf32>
    %128 = vector.broadcast %126 : vector<16x1x64xf32> to vector<16x16x64xf32>
    %129 = arith.mulf %127, %128 : vector<16x16x64xf32>
    %cst_35 = arith.constant 0.000000e+00 : f32
    %130 = vector.broadcast %cst_35 : f32 to vector<16x64xf32>
    %131 = vector.extract_strided_slice %124 {offsets = [0, 0, 0], sizes = [1, 16, 64], strides = [1, 1, 1]} : vector<16x16x64xf32> to vector<1x16x64xf32>
    %132 = vector.shape_cast %131 : vector<1x16x64xf32> to vector<16x64xf32>
    %133 = arith.mulf %130, %132 : vector<16x64xf32>
    %134 = vector.extract_strided_slice %129 {offsets = [0, 0, 0], sizes = [1, 16, 64], strides = [1, 1, 1]} : vector<16x16x64xf32> to vector<1x16x64xf32>
    %135 = vector.shape_cast %134 : vector<1x16x64xf32> to vector<16x64xf32>
    %136 = arith.addf %133, %135 : vector<16x64xf32>
    %137 = vector.extract_strided_slice %124 {offsets = [1, 0, 0], sizes = [1, 16, 64], strides = [1, 1, 1]} : vector<16x16x64xf32> to vector<1x16x64xf32>
    %138 = vector.shape_cast %137 : vector<1x16x64xf32> to vector<16x64xf32>
    %139 = arith.mulf %136, %138 : vector<16x64xf32>
    %140 = vector.extract_strided_slice %129 {offsets = [1, 0, 0], sizes = [1, 16, 64], strides = [1, 1, 1]} : vector<16x16x64xf32> to vector<1x16x64xf32>
    %141 = vector.shape_cast %140 : vector<1x16x64xf32> to vector<16x64xf32>
    %142 = arith.addf %139, %141 : vector<16x64xf32>
    %143 = vector.extract_strided_slice %124 {offsets = [2, 0, 0], sizes = [1, 16, 64], strides = [1, 1, 1]} : vector<16x16x64xf32> to vector<1x16x64xf32>
    %144 = vector.shape_cast %143 : vector<1x16x64xf32> to vector<16x64xf32>
    %145 = arith.mulf %142, %144 : vector<16x64xf32>
    %146 = vector.extract_strided_slice %129 {offsets = [2, 0, 0], sizes = [1, 16, 64], strides = [1, 1, 1]} : vector<16x16x64xf32> to vector<1x16x64xf32>
    %147 = vector.shape_cast %146 : vector<1x16x64xf32> to vector<16x64xf32>
    %148 = arith.addf %145, %147 : vector<16x64xf32>
    %149 = vector.extract_strided_slice %124 {offsets = [3, 0, 0], sizes = [1, 16, 64], strides = [1, 1, 1]} : vector<16x16x64xf32> to vector<1x16x64xf32>
    %150 = vector.shape_cast %149 : vector<1x16x64xf32> to vector<16x64xf32>
    %151 = arith.mulf %148, %150 : vector<16x64xf32>
    %152 = vector.extract_strided_slice %129 {offsets = [3, 0, 0], sizes = [1, 16, 64], strides = [1, 1, 1]} : vector<16x16x64xf32> to vector<1x16x64xf32>
    %153 = vector.shape_cast %152 : vector<1x16x64xf32> to vector<16x64xf32>
    %154 = arith.addf %151, %153 : vector<16x64xf32>
    %155 = vector.extract_strided_slice %124 {offsets = [4, 0, 0], sizes = [1, 16, 64], strides = [1, 1, 1]} : vector<16x16x64xf32> to vector<1x16x64xf32>
    %156 = vector.shape_cast %155 : vector<1x16x64xf32> to vector<16x64xf32>
    %157 = arith.mulf %154, %156 : vector<16x64xf32>
    %158 = vector.extract_strided_slice %129 {offsets = [4, 0, 0], sizes = [1, 16, 64], strides = [1, 1, 1]} : vector<16x16x64xf32> to vector<1x16x64xf32>
    %159 = vector.shape_cast %158 : vector<1x16x64xf32> to vector<16x64xf32>
    %160 = arith.addf %157, %159 : vector<16x64xf32>
    %161 = vector.extract_strided_slice %124 {offsets = [5, 0, 0], sizes = [1, 16, 64], strides = [1, 1, 1]} : vector<16x16x64xf32> to vector<1x16x64xf32>
    %162 = vector.shape_cast %161 : vector<1x16x64xf32> to vector<16x64xf32>
    %163 = arith.mulf %160, %162 : vector<16x64xf32>
    %164 = vector.extract_strided_slice %129 {offsets = [5, 0, 0], sizes = [1, 16, 64], strides = [1, 1, 1]} : vector<16x16x64xf32> to vector<1x16x64xf32>
    %165 = vector.shape_cast %164 : vector<1x16x64xf32> to vector<16x64xf32>
    %166 = arith.addf %163, %165 : vector<16x64xf32>
    %167 = vector.extract_strided_slice %124 {offsets = [6, 0, 0], sizes = [1, 16, 64], strides = [1, 1, 1]} : vector<16x16x64xf32> to vector<1x16x64xf32>
    %168 = vector.shape_cast %167 : vector<1x16x64xf32> to vector<16x64xf32>
    %169 = arith.mulf %166, %168 : vector<16x64xf32>
    %170 = vector.extract_strided_slice %129 {offsets = [6, 0, 0], sizes = [1, 16, 64], strides = [1, 1, 1]} : vector<16x16x64xf32> to vector<1x16x64xf32>
    %171 = vector.shape_cast %170 : vector<1x16x64xf32> to vector<16x64xf32>
    %172 = arith.addf %169, %171 : vector<16x64xf32>
    %173 = vector.extract_strided_slice %124 {offsets = [7, 0, 0], sizes = [1, 16, 64], strides = [1, 1, 1]} : vector<16x16x64xf32> to vector<1x16x64xf32>
    %174 = vector.shape_cast %173 : vector<1x16x64xf32> to vector<16x64xf32>
    %175 = arith.mulf %172, %174 : vector<16x64xf32>
    %176 = vector.extract_strided_slice %129 {offsets = [7, 0, 0], sizes = [1, 16, 64], strides = [1, 1, 1]} : vector<16x16x64xf32> to vector<1x16x64xf32>
    %177 = vector.shape_cast %176 : vector<1x16x64xf32> to vector<16x64xf32>
    %178 = arith.addf %175, %177 : vector<16x64xf32>
    %179 = vector.extract_strided_slice %124 {offsets = [8, 0, 0], sizes = [1, 16, 64], strides = [1, 1, 1]} : vector<16x16x64xf32> to vector<1x16x64xf32>
    %180 = vector.shape_cast %179 : vector<1x16x64xf32> to vector<16x64xf32>
    %181 = arith.mulf %178, %180 : vector<16x64xf32>
    %182 = vector.extract_strided_slice %129 {offsets = [8, 0, 0], sizes = [1, 16, 64], strides = [1, 1, 1]} : vector<16x16x64xf32> to vector<1x16x64xf32>
    %183 = vector.shape_cast %182 : vector<1x16x64xf32> to vector<16x64xf32>
    %184 = arith.addf %181, %183 : vector<16x64xf32>
    %185 = vector.extract_strided_slice %124 {offsets = [9, 0, 0], sizes = [1, 16, 64], strides = [1, 1, 1]} : vector<16x16x64xf32> to vector<1x16x64xf32>
    %186 = vector.shape_cast %185 : vector<1x16x64xf32> to vector<16x64xf32>
    %187 = arith.mulf %184, %186 : vector<16x64xf32>
    %188 = vector.extract_strided_slice %129 {offsets = [9, 0, 0], sizes = [1, 16, 64], strides = [1, 1, 1]} : vector<16x16x64xf32> to vector<1x16x64xf32>
    %189 = vector.shape_cast %188 : vector<1x16x64xf32> to vector<16x64xf32>
    %190 = arith.addf %187, %189 : vector<16x64xf32>
    %191 = vector.extract_strided_slice %124 {offsets = [10, 0, 0], sizes = [1, 16, 64], strides = [1, 1, 1]} : vector<16x16x64xf32> to vector<1x16x64xf32>
    %192 = vector.shape_cast %191 : vector<1x16x64xf32> to vector<16x64xf32>
    %193 = arith.mulf %190, %192 : vector<16x64xf32>
    %194 = vector.extract_strided_slice %129 {offsets = [10, 0, 0], sizes = [1, 16, 64], strides = [1, 1, 1]} : vector<16x16x64xf32> to vector<1x16x64xf32>
    %195 = vector.shape_cast %194 : vector<1x16x64xf32> to vector<16x64xf32>
    %196 = arith.addf %193, %195 : vector<16x64xf32>
    %197 = vector.extract_strided_slice %124 {offsets = [11, 0, 0], sizes = [1, 16, 64], strides = [1, 1, 1]} : vector<16x16x64xf32> to vector<1x16x64xf32>
    %198 = vector.shape_cast %197 : vector<1x16x64xf32> to vector<16x64xf32>
    %199 = arith.mulf %196, %198 : vector<16x64xf32>
    %200 = vector.extract_strided_slice %129 {offsets = [11, 0, 0], sizes = [1, 16, 64], strides = [1, 1, 1]} : vector<16x16x64xf32> to vector<1x16x64xf32>
    %201 = vector.shape_cast %200 : vector<1x16x64xf32> to vector<16x64xf32>
    %202 = arith.addf %199, %201 : vector<16x64xf32>
    %203 = vector.extract_strided_slice %124 {offsets = [12, 0, 0], sizes = [1, 16, 64], strides = [1, 1, 1]} : vector<16x16x64xf32> to vector<1x16x64xf32>
    %204 = vector.shape_cast %203 : vector<1x16x64xf32> to vector<16x64xf32>
    %205 = arith.mulf %202, %204 : vector<16x64xf32>
    %206 = vector.extract_strided_slice %129 {offsets = [12, 0, 0], sizes = [1, 16, 64], strides = [1, 1, 1]} : vector<16x16x64xf32> to vector<1x16x64xf32>
    %207 = vector.shape_cast %206 : vector<1x16x64xf32> to vector<16x64xf32>
    %208 = arith.addf %205, %207 : vector<16x64xf32>
    %209 = vector.extract_strided_slice %124 {offsets = [13, 0, 0], sizes = [1, 16, 64], strides = [1, 1, 1]} : vector<16x16x64xf32> to vector<1x16x64xf32>
    %210 = vector.shape_cast %209 : vector<1x16x64xf32> to vector<16x64xf32>
    %211 = arith.mulf %208, %210 : vector<16x64xf32>
    %212 = vector.extract_strided_slice %129 {offsets = [13, 0, 0], sizes = [1, 16, 64], strides = [1, 1, 1]} : vector<16x16x64xf32> to vector<1x16x64xf32>
    %213 = vector.shape_cast %212 : vector<1x16x64xf32> to vector<16x64xf32>
    %214 = arith.addf %211, %213 : vector<16x64xf32>
    %215 = vector.extract_strided_slice %124 {offsets = [14, 0, 0], sizes = [1, 16, 64], strides = [1, 1, 1]} : vector<16x16x64xf32> to vector<1x16x64xf32>
    %216 = vector.shape_cast %215 : vector<1x16x64xf32> to vector<16x64xf32>
    %217 = arith.mulf %214, %216 : vector<16x64xf32>
    %218 = vector.extract_strided_slice %129 {offsets = [14, 0, 0], sizes = [1, 16, 64], strides = [1, 1, 1]} : vector<16x16x64xf32> to vector<1x16x64xf32>
    %219 = vector.shape_cast %218 : vector<1x16x64xf32> to vector<16x64xf32>
    %220 = arith.addf %217, %219 : vector<16x64xf32>
    %221 = vector.extract_strided_slice %124 {offsets = [15, 0, 0], sizes = [1, 16, 64], strides = [1, 1, 1]} : vector<16x16x64xf32> to vector<1x16x64xf32>
    %222 = vector.shape_cast %221 : vector<1x16x64xf32> to vector<16x64xf32>
    %223 = arith.mulf %220, %222 : vector<16x64xf32>
    %224 = vector.extract_strided_slice %129 {offsets = [15, 0, 0], sizes = [1, 16, 64], strides = [1, 1, 1]} : vector<16x16x64xf32> to vector<1x16x64xf32>
    %225 = vector.shape_cast %224 : vector<1x16x64xf32> to vector<16x64xf32>
    %226 = arith.addf %223, %225 : vector<16x64xf32>
    %227 = vector.shape_cast %136 : vector<16x64xf32> to vector<1x16x64xf32>
    %228 = vector.shape_cast %142 : vector<16x64xf32> to vector<1x16x64xf32>
    %229 = vector.shape_cast %148 : vector<16x64xf32> to vector<1x16x64xf32>
    %230 = vector.shape_cast %154 : vector<16x64xf32> to vector<1x16x64xf32>
    %231 = vector.shape_cast %160 : vector<16x64xf32> to vector<1x16x64xf32>
    %232 = vector.shape_cast %166 : vector<16x64xf32> to vector<1x16x64xf32>
    %233 = vector.shape_cast %172 : vector<16x64xf32> to vector<1x16x64xf32>
    %234 = vector.shape_cast %178 : vector<16x64xf32> to vector<1x16x64xf32>
    %235 = vector.shape_cast %184 : vector<16x64xf32> to vector<1x16x64xf32>
    %236 = vector.shape_cast %190 : vector<16x64xf32> to vector<1x16x64xf32>
    %237 = vector.shape_cast %196 : vector<16x64xf32> to vector<1x16x64xf32>
    %238 = vector.shape_cast %202 : vector<16x64xf32> to vector<1x16x64xf32>
    %239 = vector.shape_cast %208 : vector<16x64xf32> to vector<1x16x64xf32>
    %240 = vector.shape_cast %214 : vector<16x64xf32> to vector<1x16x64xf32>
    %241 = vector.shape_cast %220 : vector<16x64xf32> to vector<1x16x64xf32>
    %242 = vector.shape_cast %226 : vector<16x64xf32> to vector<1x16x64xf32>
    %243 = tpu.concatenate %227, %228, %229, %230, %231, %232, %233, %234, %235, %236, %237, %238, %239, %240, %241, %242 in 0 : vector<1x16x64xf32>, vector<1x16x64xf32>, vector<1x16x64xf32>, vector<1x16x64xf32>, vector<1x16x64xf32>, vector<1x16x64xf32>, vector<1x16x64xf32>, vector<1x16x64xf32>, vector<1x16x64xf32>, vector<1x16x64xf32>, vector<1x16x64xf32>, vector<1x16x64xf32>, vector<1x16x64xf32>, vector<1x16x64xf32>, vector<1x16x64xf32>, vector<1x16x64xf32> -> vector<16x16x64xf32>
    %244 = vector.shape_cast %89 : vector<16x16xf32> to vector<16x16x1xf32>
    %245 = vector.broadcast %244 : vector<16x16x1xf32> to vector<16x16x64xf32>
    %246 = arith.mulf %245, %243 : vector<16x16x64xf32>
    %cst_36 = arith.constant dense<0.000000e+00> : vector<16x64xf32>
    %247 = vector.multi_reduction <add>, %246, %cst_36 [1] : vector<16x16x64xf32> to vector<16x64xf32>
    %c0_37 = arith.constant 0 : index
    %c0_38 = arith.constant 0 : index
    %248 = vector.load %arg13[%c0_37, %c0_38] : memref<1x64xf32, #tpu.memory_space<vmem>>, vector<1x64xf32>
    %249 = vector.broadcast %248 : vector<1x64xf32> to vector<16x64xf32>
    %250 = arith.mulf %249, %84 : vector<16x64xf32>
    %251 = arith.addf %247, %250 : vector<16x64xf32>
    %252 = arith.negf %32 : vector<16x64xf32>
    %253 = math.exp %252 : vector<16x64xf32>
    %cst_39 = arith.constant 1.000000e+00 : f32
    %254 = vector.broadcast %cst_39 : f32 to vector<16x64xf32>
    %255 = arith.addf %254, %253 : vector<16x64xf32>
    %256 = arith.divf %254, %255 : vector<16x64xf32>
    %257 = arith.mulf %32, %256 : vector<16x64xf32>
    %258 = arith.mulf %251, %257 : vector<16x64xf32>
    %259 = arith.truncf %258 : vector<16x64xf32> to vector<16x64xbf16>
    %c0_40 = arith.constant 0 : index
    %c0_41 = arith.constant 0 : index
    %260 = vector.load %arg14[%c0_40, %c0_41] : memref<64x32xbf16, #tpu.memory_space<vmem>>, vector<64x32xbf16>
    %cst_42 = arith.constant dense<0.000000e+00> : vector<16x32xf32>
    %261 = tpu.matmul %259, %260, %cst_42 {dimension_numbers = #tpu.dot_dimension_numbers<[1], [0], [0], [1], [0, 0, 1, 1], [], []>} : vector<16x64xbf16>, vector<64x32xbf16>, vector<16x32xf32> -> vector<16x32xf32>
    %262 = arith.addf %14, %261 : vector<16x32xf32>
    %c0_43 = arith.constant 0 : index
    %c0_44 = arith.constant 0 : index
    %263 = vector.load %arg15[%c0_43, %c0_44] : memref<1x32xf32, #tpu.memory_space<vmem>>, vector<1x32xf32>
    %264 = arith.mulf %262, %262 : vector<16x32xf32>
    %cst_45 = arith.constant dense<0.000000e+00> : vector<16xf32>
    %265 = vector.multi_reduction <add>, %264, %cst_45 [1] : vector<16x32xf32> to vector<16xf32>
    %266 = vector.shape_cast %265 : vector<16xf32> to vector<16x1xf32>
    %cst_46 = arith.constant 3.200000e+01 : f32
    %267 = vector.broadcast %cst_46 : f32 to vector<16x1xf32>
    %268 = arith.divf %266, %267 : vector<16x1xf32>
    %cst_47 = arith.constant 9.99999997E-7 : f32
    %269 = vector.broadcast %cst_47 : f32 to vector<16x1xf32>
    %270 = arith.addf %268, %269 : vector<16x1xf32>
    %271 = math.rsqrt %270 : vector<16x1xf32>
    %272 = vector.broadcast %271 : vector<16x1xf32> to vector<16x32xf32>
    %273 = arith.mulf %262, %272 : vector<16x32xf32>
    %274 = vector.broadcast %263 : vector<1x32xf32> to vector<16x32xf32>
    %275 = arith.mulf %273, %274 : vector<16x32xf32>
    %276 = arith.truncf %275 : vector<16x32xf32> to vector<16x32xbf16>
    %c0_48 = arith.constant 0 : index
    %c0_49 = arith.constant 0 : index
    %277 = vector.load %arg16[%c0_48, %c0_49] : memref<32x160xbf16, #tpu.memory_space<vmem>>, vector<32x160xbf16>
    %cst_50 = arith.constant dense<0.000000e+00> : vector<16x160xf32>
    %278 = tpu.matmul %276, %277, %cst_50 {dimension_numbers = #tpu.dot_dimension_numbers<[1], [0], [0], [1], [0, 0, 1, 1], [], []>} : vector<16x32xbf16>, vector<32x160xbf16>, vector<16x160xf32> -> vector<16x160xf32>
    %279 = vector.extract_strided_slice %278 {offsets = [0, 0], sizes = [16, 32], strides = [1, 1]} : vector<16x160xf32> to vector<16x32xf32>
    %280 = vector.extract_strided_slice %278 {offsets = [0, 32], sizes = [16, 32], strides = [1, 1]} : vector<16x160xf32> to vector<16x32xf32>
    %281 = vector.extract_strided_slice %278 {offsets = [0, 64], sizes = [16, 32], strides = [1, 1]} : vector<16x160xf32> to vector<16x32xf32>
    %282 = vector.extract_strided_slice %278 {offsets = [0, 96], sizes = [16, 32], strides = [1, 1]} : vector<16x160xf32> to vector<16x32xf32>
    %283 = vector.extract_strided_slice %278 {offsets = [0, 128], sizes = [16, 32], strides = [1, 1]} : vector<16x160xf32> to vector<16x32xf32>
    %284 = arith.mulf %279, %5 : vector<16x32xf32>
    %285 = arith.mulf %282, %6 : vector<16x32xf32>
    %286 = arith.addf %284, %285 : vector<16x32xf32>
    %287 = arith.mulf %280, %5 : vector<16x32xf32>
    %288 = arith.mulf %283, %6 : vector<16x32xf32>
    %289 = arith.addf %287, %288 : vector<16x32xf32>
    %290 = vector.extract_strided_slice %286 {offsets = [0, 0], sizes = [16, 8], strides = [1, 1]} : vector<16x32xf32> to vector<16x8xf32>
    %291 = vector.extract_strided_slice %286 {offsets = [0, 8], sizes = [16, 8], strides = [1, 1]} : vector<16x32xf32> to vector<16x8xf32>
    %292 = vector.extract_strided_slice %286 {offsets = [0, 16], sizes = [16, 8], strides = [1, 1]} : vector<16x32xf32> to vector<16x8xf32>
    %293 = vector.extract_strided_slice %286 {offsets = [0, 24], sizes = [16, 8], strides = [1, 1]} : vector<16x32xf32> to vector<16x8xf32>
    %294 = vector.shape_cast %290 : vector<16x8xf32> to vector<1x16x8xf32>
    %295 = vector.shape_cast %291 : vector<16x8xf32> to vector<1x16x8xf32>
    %296 = vector.shape_cast %292 : vector<16x8xf32> to vector<1x16x8xf32>
    %297 = vector.shape_cast %293 : vector<16x8xf32> to vector<1x16x8xf32>
    %298 = tpu.concatenate %294, %295, %296, %297 in 0 : vector<1x16x8xf32>, vector<1x16x8xf32>, vector<1x16x8xf32>, vector<1x16x8xf32> -> vector<4x16x8xf32>
    %299 = vector.extract_strided_slice %289 {offsets = [0, 0], sizes = [16, 8], strides = [1, 1]} : vector<16x32xf32> to vector<16x8xf32>
    %300 = vector.extract_strided_slice %289 {offsets = [0, 8], sizes = [16, 8], strides = [1, 1]} : vector<16x32xf32> to vector<16x8xf32>
    %301 = vector.extract_strided_slice %289 {offsets = [0, 16], sizes = [16, 8], strides = [1, 1]} : vector<16x32xf32> to vector<16x8xf32>
    %302 = vector.extract_strided_slice %289 {offsets = [0, 24], sizes = [16, 8], strides = [1, 1]} : vector<16x32xf32> to vector<16x8xf32>
    %303 = vector.shape_cast %299 : vector<16x8xf32> to vector<1x16x8xf32>
    %304 = vector.shape_cast %300 : vector<16x8xf32> to vector<1x16x8xf32>
    %305 = vector.shape_cast %301 : vector<16x8xf32> to vector<1x16x8xf32>
    %306 = vector.shape_cast %302 : vector<16x8xf32> to vector<1x16x8xf32>
    %307 = tpu.concatenate %303, %304, %305, %306 in 0 : vector<1x16x8xf32>, vector<1x16x8xf32>, vector<1x16x8xf32>, vector<1x16x8xf32> -> vector<4x16x8xf32>
    %308 = vector.extract_strided_slice %281 {offsets = [0, 0], sizes = [16, 8], strides = [1, 1]} : vector<16x32xf32> to vector<16x8xf32>
    %309 = vector.extract_strided_slice %281 {offsets = [0, 8], sizes = [16, 8], strides = [1, 1]} : vector<16x32xf32> to vector<16x8xf32>
    %310 = vector.extract_strided_slice %281 {offsets = [0, 16], sizes = [16, 8], strides = [1, 1]} : vector<16x32xf32> to vector<16x8xf32>
    %311 = vector.extract_strided_slice %281 {offsets = [0, 24], sizes = [16, 8], strides = [1, 1]} : vector<16x32xf32> to vector<16x8xf32>
    %312 = vector.shape_cast %308 : vector<16x8xf32> to vector<1x16x8xf32>
    %313 = vector.shape_cast %309 : vector<16x8xf32> to vector<1x16x8xf32>
    %314 = vector.shape_cast %310 : vector<16x8xf32> to vector<1x16x8xf32>
    %315 = vector.shape_cast %311 : vector<16x8xf32> to vector<1x16x8xf32>
    %316 = tpu.concatenate %312, %313, %314, %315 in 0 : vector<1x16x8xf32>, vector<1x16x8xf32>, vector<1x16x8xf32>, vector<1x16x8xf32> -> vector<4x16x8xf32>
    %317 = arith.truncf %298 : vector<4x16x8xf32> to vector<4x16x8xbf16>
    %318 = arith.truncf %307 : vector<4x16x8xf32> to vector<4x16x8xbf16>
    "tpu.trace_start"() <{level = 10 : i32, message = "hqd,hkd->hqk"}> : () -> ()
    %cst_51 = arith.constant dense<0.000000e+00> : vector<4x16x16xf32>
    %319 = tpu.matmul %317, %318, %cst_51 {dimension_numbers = #tpu.dot_dimension_numbers<[2], [2], [1], [1], [0, 0, 0, 1, 1, 1], [0], [0]>} : vector<4x16x8xbf16>, vector<4x16x8xbf16>, vector<4x16x16xf32> -> vector<4x16x16xf32>
    "tpu.trace_stop"() : () -> ()
    %cst_52 = arith.constant 0.353553385 : f32
    %320 = vector.broadcast %cst_52 : f32 to vector<4x16x16xf32>
    %321 = arith.mulf %319, %320 : vector<4x16x16xf32>
    %322 = vector.shape_cast %13 : vector<16x16xi1> to vector<1x16x16xi1>
    %cst_53 = arith.constant -1.000000e+30 : f32
    %323 = vector.shape_cast %322 : vector<1x16x16xi1> to vector<1x16x16xi1>
    %324 = vector.broadcast %323 : vector<1x16x16xi1> to vector<4x16x16xi1>
    %325 = vector.broadcast %cst_53 : f32 to vector<4x16x16xf32>
    %326 = arith.select %324, %321, %325 : vector<4x16x16xi1>, vector<4x16x16xf32>
    %cst_54 = arith.constant dense<0xFF800000> : vector<4x16xf32>
    %327 = vector.multi_reduction <maximumf>, %326, %cst_54 [2] : vector<4x16x16xf32> to vector<4x16xf32>
    %328 = vector.shape_cast %327 : vector<4x16xf32> to vector<4x16x1xf32>
    %329 = vector.broadcast %328 : vector<4x16x1xf32> to vector<4x16x16xf32>
    %330 = arith.subf %326, %329 : vector<4x16x16xf32>
    %331 = math.exp %330 : vector<4x16x16xf32>
    %cst_55 = arith.constant dense<0.000000e+00> : vector<4x16xf32>
    %332 = vector.multi_reduction <add>, %331, %cst_55 [2] : vector<4x16x16xf32> to vector<4x16xf32>
    %333 = vector.shape_cast %332 : vector<4x16xf32> to vector<4x16x1xf32>
    %334 = tpu.reciprocal %333 {approx = true} : vector<4x16x1xf32> -> vector<4x16x1xf32>
    %335 = vector.broadcast %334 : vector<4x16x1xf32> to vector<4x16x16xf32>
    %336 = arith.mulf %331, %335 : vector<4x16x16xf32>
    %337 = arith.truncf %336 : vector<4x16x16xf32> to vector<4x16x16xbf16>
    %338 = arith.truncf %316 : vector<4x16x8xf32> to vector<4x16x8xbf16>
    "tpu.trace_start"() <{level = 10 : i32, message = "hqk,hkd->hqd"}> : () -> ()
    %cst_56 = arith.constant dense<0.000000e+00> : vector<4x16x8xf32>
    %339 = tpu.matmul %337, %338, %cst_56 {dimension_numbers = #tpu.dot_dimension_numbers<[2], [1], [1], [2], [0, 0, 0, 1, 1, 2], [0], [0]>} : vector<4x16x16xbf16>, vector<4x16x8xbf16>, vector<4x16x8xf32> -> vector<4x16x8xf32>
    "tpu.trace_stop"() : () -> ()
    %340 = vector.extract_strided_slice %339 {offsets = [0, 0, 0], sizes = [1, 16, 8], strides = [1, 1, 1]} : vector<4x16x8xf32> to vector<1x16x8xf32>
    %341 = vector.shape_cast %340 : vector<1x16x8xf32> to vector<16x8xf32>
    %342 = vector.extract_strided_slice %339 {offsets = [1, 0, 0], sizes = [1, 16, 8], strides = [1, 1, 1]} : vector<4x16x8xf32> to vector<1x16x8xf32>
    %343 = vector.shape_cast %342 : vector<1x16x8xf32> to vector<16x8xf32>
    %344 = vector.extract_strided_slice %339 {offsets = [2, 0, 0], sizes = [1, 16, 8], strides = [1, 1, 1]} : vector<4x16x8xf32> to vector<1x16x8xf32>
    %345 = vector.shape_cast %344 : vector<1x16x8xf32> to vector<16x8xf32>
    %346 = vector.extract_strided_slice %339 {offsets = [3, 0, 0], sizes = [1, 16, 8], strides = [1, 1, 1]} : vector<4x16x8xf32> to vector<1x16x8xf32>
    %347 = vector.shape_cast %346 : vector<1x16x8xf32> to vector<16x8xf32>
    %348 = tpu.concatenate %341, %343, %345, %347 in 1 : vector<16x8xf32>, vector<16x8xf32>, vector<16x8xf32>, vector<16x8xf32> -> vector<16x32xf32>
    %349 = arith.truncf %348 : vector<16x32xf32> to vector<16x32xbf16>
    %c0_57 = arith.constant 0 : index
    %c0_58 = arith.constant 0 : index
    %350 = vector.load %arg17[%c0_57, %c0_58] : memref<32x32xbf16, #tpu.memory_space<vmem>>, vector<32x32xbf16>
    %cst_59 = arith.constant dense<0.000000e+00> : vector<16x32xf32>
    %351 = tpu.matmul %349, %350, %cst_59 {dimension_numbers = #tpu.dot_dimension_numbers<[1], [0], [0], [1], [0, 0, 1, 1], [], []>} : vector<16x32xbf16>, vector<32x32xbf16>, vector<16x32xf32> -> vector<16x32xf32>
    %352 = arith.addf %262, %351 : vector<16x32xf32>
    %c0_60 = arith.constant 0 : index
    %c0_61 = arith.constant 0 : index
    %353 = vector.load %arg18[%c0_60, %c0_61] : memref<1x32xf32, #tpu.memory_space<vmem>>, vector<1x32xf32>
    %354 = arith.mulf %352, %352 : vector<16x32xf32>
    %cst_62 = arith.constant dense<0.000000e+00> : vector<16xf32>
    %355 = vector.multi_reduction <add>, %354, %cst_62 [1] : vector<16x32xf32> to vector<16xf32>
    %356 = vector.shape_cast %355 : vector<16xf32> to vector<16x1xf32>
    %cst_63 = arith.constant 3.200000e+01 : f32
    %357 = vector.broadcast %cst_63 : f32 to vector<16x1xf32>
    %358 = arith.divf %356, %357 : vector<16x1xf32>
    %cst_64 = arith.constant 9.99999997E-7 : f32
    %359 = vector.broadcast %cst_64 : f32 to vector<16x1xf32>
    %360 = arith.addf %358, %359 : vector<16x1xf32>
    %361 = math.rsqrt %360 : vector<16x1xf32>
    %362 = vector.broadcast %361 : vector<16x1xf32> to vector<16x32xf32>
    %363 = arith.mulf %352, %362 : vector<16x32xf32>
    %364 = vector.broadcast %353 : vector<1x32xf32> to vector<16x32xf32>
    %365 = arith.mulf %363, %364 : vector<16x32xf32>
    %366 = arith.truncf %365 : vector<16x32xf32> to vector<16x32xbf16>
    %c0_65 = arith.constant 0 : index
    %c0_66 = arith.constant 0 : index
    %367 = vector.load %arg19[%c0_65, %c0_66] : memref<32x128xbf16, #tpu.memory_space<vmem>>, vector<32x128xbf16>
    %cst_67 = arith.constant dense<0.000000e+00> : vector<16x128xf32>
    %368 = tpu.matmul %366, %367, %cst_67 {dimension_numbers = #tpu.dot_dimension_numbers<[1], [0], [0], [1], [0, 0, 1, 1], [], []>} : vector<16x32xbf16>, vector<32x128xbf16>, vector<16x128xf32> -> vector<16x128xf32>
    %369 = vector.extract_strided_slice %368 {offsets = [0, 0], sizes = [16, 64], strides = [1, 1]} : vector<16x128xf32> to vector<16x64xf32>
    %370 = arith.negf %369 : vector<16x64xf32>
    %371 = math.exp %370 : vector<16x64xf32>
    %cst_68 = arith.constant 1.000000e+00 : f32
    %372 = vector.broadcast %cst_68 : f32 to vector<16x64xf32>
    %373 = arith.addf %372, %371 : vector<16x64xf32>
    %374 = arith.divf %372, %373 : vector<16x64xf32>
    %375 = arith.mulf %369, %374 : vector<16x64xf32>
    %376 = vector.extract_strided_slice %368 {offsets = [0, 64], sizes = [16, 64], strides = [1, 1]} : vector<16x128xf32> to vector<16x64xf32>
    %377 = arith.mulf %375, %376 : vector<16x64xf32>
    %378 = arith.truncf %377 : vector<16x64xf32> to vector<16x64xbf16>
    %c0_69 = arith.constant 0 : index
    %c0_70 = arith.constant 0 : index
    %379 = vector.load %arg20[%c0_69, %c0_70] : memref<64x32xbf16, #tpu.memory_space<vmem>>, vector<64x32xbf16>
    %cst_71 = arith.constant dense<0.000000e+00> : vector<16x32xf32>
    %380 = tpu.matmul %378, %379, %cst_71 {dimension_numbers = #tpu.dot_dimension_numbers<[1], [0], [0], [1], [0, 0, 1, 1], [], []>} : vector<16x64xbf16>, vector<64x32xbf16>, vector<16x32xf32> -> vector<16x32xf32>
    %381 = arith.addf %352, %380 : vector<16x32xf32>
    %c0_72 = arith.constant 0 : index
    %c0_73 = arith.constant 0 : index
    %382 = vector.load %arg24[%c0_72, %c0_73] : memref<16x32xf32, #tpu.memory_space<vmem>>, vector<16x32xf32>
    tpu.vector_store %arg24[%c0_72, %c0_73], %381 {strides = array<i32>} : memref<16x32xf32, #tpu.memory_space<vmem>>, vector<16x32xf32>,
    %c0_74 = arith.constant 0 : index
    %383 = memref.load %arg0[%c0_74] : memref<2xi32, #tpu.memory_space<smem>>
    %384 = arith.index_cast %383 : i32 to index
    %c0_75 = arith.constant 0 : index
    %385 = vector.load %arg24[%384, %c0_75] : memref<16x32xf32, #tpu.memory_space<vmem>>, vector<1x32xf32>
    %c1_76 = arith.constant 1 : index
    %386 = memref.load %arg0[%c1_76] : memref<2xi32, #tpu.memory_space<smem>>
    %387 = arith.index_cast %386 : i32 to index
    %c0_77 = arith.constant 0 : index
    %388 = vector.load %arg24[%387, %c0_77] : memref<16x32xf32, #tpu.memory_space<vmem>>, vector<1x32xf32>
    %389 = tpu.concatenate %385, %388 in 0 : vector<1x32xf32>, vector<1x32xf32> -> vector<2x32xf32>
    %c0_78 = arith.constant 0 : index
    %c0_79 = arith.constant 0 : index
    %390 = vector.load %arg21[%c0_78, %c0_79] : memref<1x32xf32, #tpu.memory_space<vmem>>, vector<1x32xf32>
    %391 = arith.mulf %389, %389 : vector<2x32xf32>
    %cst_80 = arith.constant dense<0.000000e+00> : vector<2xf32>
    %392 = vector.multi_reduction <add>, %391, %cst_80 [1] : vector<2x32xf32> to vector<2xf32>
    %393 = vector.shape_cast %392 : vector<2xf32> to vector<2x1xf32>
    %cst_81 = arith.constant 3.200000e+01 : f32
    %394 = vector.broadcast %cst_81 : f32 to vector<2x1xf32>
    %395 = arith.divf %393, %394 : vector<2x1xf32>
    %cst_82 = arith.constant 9.99999997E-7 : f32
    %396 = vector.broadcast %cst_82 : f32 to vector<2x1xf32>
    %397 = arith.addf %395, %396 : vector<2x1xf32>
    %398 = math.rsqrt %397 : vector<2x1xf32>
    %399 = vector.broadcast %398 : vector<2x1xf32> to vector<2x32xf32>
    %400 = arith.mulf %389, %399 : vector<2x32xf32>
    %401 = vector.broadcast %390 : vector<1x32xf32> to vector<2x32xf32>
    %402 = arith.mulf %400, %401 : vector<2x32xf32>
    %403 = arith.truncf %402 : vector<2x32xf32> to vector<2x32xbf16>
    %c0_83 = arith.constant 0 : index
    %c0_84 = arith.constant 0 : index
    %404 = vector.load %arg22[%c0_83, %c0_84] : memref<32x128xbf16, #tpu.memory_space<vmem>>, vector<32x128xbf16>
    %cst_85 = arith.constant dense<0.000000e+00> : vector<2x128xf32>
    %405 = tpu.matmul %403, %404, %cst_85 {dimension_numbers = #tpu.dot_dimension_numbers<[1], [0], [0], [1], [0, 0, 1, 1], [], []>} : vector<2x32xbf16>, vector<32x128xbf16>, vector<2x128xf32> -> vector<2x128xf32>
    %c0_86 = arith.constant 0 : index
    %c0_87 = arith.constant 0 : index
    %406 = vector.load %arg23[%c0_86, %c0_87] : memref<2x128xf32, #tpu.memory_space<vmem>>, vector<2x128xf32>
    tpu.vector_store %arg23[%c0_86, %c0_87], %405 {strides = array<i32>} : memref<2x128xf32, #tpu.memory_space<vmem>>, vector<2x128xf32>,
    return
  }
}

</mosaic_0001>

<llo_original>
// kernel: _forward_core.1
$region0: #{_forward_core.1}
  #allocation0 [shape = 'u32[]', space=smem, size = 0x4, offset = 0x4, fixed_abs, tag = 'smem constant byte address 0x4 - core index']
  #allocation1 [shape = 'u32[144,128]{1,0:T(1,128)}', space=vmem, size = 0x12000, scoped, tag = 'internal scratch']
  #allocation2 [shape = 'f32[16,32]{1,0:T(8,128)}', space=vmem, size = 0x2000, scoped, tag = 'scratch operand']
  %s0 = inlined_call_operand.vmem [shape: s32[2], index: 0, kind: input, shape index: {}]
  %s1 = inlined_call_operand.vmem [shape: f32[16,32], index: 1, kind: input, shape index: {}]
  %s2 = inlined_call_operand.vmem [shape: s32[16,1], index: 2, kind: input, shape index: {}]
  %s3 = inlined_call_operand.vmem [shape: f32[16,32], index: 3, kind: input, shape index: {}]
  %s4 = inlined_call_operand.vmem [shape: f32[16,32], index: 4, kind: input, shape index: {}]
  %s5 = inlined_call_operand.vmem [shape: f32[1,32], index: 5, kind: input, shape index: {}]
  %s6 = inlined_call_operand.vmem [shape: bf16[32,128], index: 6, kind: input, shape index: {}]
  %s7 = inlined_call_operand.vmem [shape: f32[4,64], index: 7, kind: input, shape index: {}]
  %s8 = inlined_call_operand.vmem [shape: f32[1,64], index: 8, kind: input, shape index: {}]
  %s9 = inlined_call_operand.vmem [shape: bf16[64,34], index: 9, kind: input, shape index: {}]
  %s10 = inlined_call_operand.vmem [shape: f32[2,64], index: 10, kind: input, shape index: {}]
  %s11 = inlined_call_operand.vmem [shape: f32[1,64], index: 11, kind: input, shape index: {}]
  %s12 = inlined_call_operand.vmem [shape: f32[16,64], index: 12, kind: input, shape index: {}]
  %s13 = inlined_call_operand.vmem [shape: f32[1,64], index: 13, kind: input, shape index: {}]
  %s14 = inlined_call_operand.vmem [shape: bf16[64,32], index: 14, kind: input, shape index: {}]
  %s15 = inlined_call_operand.vmem [shape: f32[1,32], index: 15, kind: input, shape index: {}]
  %s16 = inlined_call_operand.vmem [shape: bf16[32,160], index: 16, kind: input, shape index: {}]
  %s17 = inlined_call_operand.vmem [shape: bf16[32,32], index: 17, kind: input, shape index: {}]
  %s18 = inlined_call_operand.vmem [shape: f32[1,32], index: 18, kind: input, shape index: {}]
  %s19 = inlined_call_operand.vmem [shape: bf16[32,128], index: 19, kind: input, shape index: {}]
  %s20 = inlined_call_operand.vmem [shape: bf16[64,32], index: 20, kind: input, shape index: {}]
  %s21 = inlined_call_operand.vmem [shape: f32[1,32], index: 21, kind: input, shape index: {}]
  %s22 = inlined_call_operand.vmem [shape: bf16[32,128], index: 22, kind: input, shape index: {}]
  %s23 = inlined_call_operand.hbm [shape: f32[2,128], index: 23, kind: output, shape index: {}]
  %s24 = sld [smem:[#allocation0]]
  $region106: #{_forward_core.1} parent=0
    _
  %s26 = ssub.s32 1, %s24
  %s27 = scalar_select 0, %s26, %s24
  $region1: #{_forward_core.1} parent=0
    #allocation3 [shape = 'u8[512]{0}', space=smem, size = 0x200, scoped, tag = 'input window, operand 0, single buffered']
    #allocation4 [shape = 's32[1]{0}', space=sflag, size = 0x4, scoped, tag = 'scoped memory for _forward_core.1']
    #allocation5 [shape = 's32[1]{0}', space=sflag, size = 0x4, scoped, tag = 'scoped memory for _forward_core.1']
    #allocation6 [shape = 'u8[1024]{0}', space=vmem, size = 0x400, scoped, tag = 'output window, operand 0, single buffered']
    %28 = vsyncpa [#allocation5], 0
    %29 = vsyncpa [#allocation4], 0
    // Predicated region
    $region2: #{_forward_core.1} parent=1 // pred_check
      _
    $region3: #{_forward_core.1} parent=1 // pred_check_branch
      %31 = sbr.rel (0) target = $region5
    $region4: #{_forward_core.1} parent=1 // pred_region
      %s33 = ssub.s32 16, 16
      %34 = vsyncadd [#allocation5], %s33
      %s36 = sshll.u32 %s0, 4
      %s37 = int_to_ptr.vmem [resolvable:$true] %s36
      %39 = dma.vmem_to_smem %s37, 16, [#allocation3], [#allocation5]
    $region5: #{_forward_core.1} parent=1 // pred_fallthru
      _
    // Predicated region
    $region6: #{_forward_core.1} parent=1 // pred_check
      _
    $region7: #{_forward_core.1} parent=1 // pred_check_branch
      %41 = sbr.rel (0) target = $region9
    $region8: #{_forward_core.1} parent=1 // pred_region
      _
    $region9: #{_forward_core.1} parent=1 // pred_fallthru
      _
    // Predicated region
    $region10: #{_forward_core.1} parent=1 // pred_check
      _
    $region11: #{_forward_core.1} parent=1 // pred_check_branch
      %43 = sbr.rel (0) target = $region13
    $region12: #{_forward_core.1} parent=1 // pred_region
      _
    $region13: #{_forward_core.1} parent=1 // pred_fallthru
      _
    // Predicated region
    $region14: #{_forward_core.1} parent=1 // pred_check
      _
    $region15: #{_forward_core.1} parent=1 // pred_check_branch
      %45 = sbr.rel (0) target = $region17
    $region16: #{_forward_core.1} parent=1 // pred_region
      _
    $region17: #{_forward_core.1} parent=1 // pred_fallthru
      _
    // Predicated region
    $region18: #{_forward_core.1} parent=1 // pred_check
      _
    $region19: #{_forward_core.1} parent=1 // pred_check_branch
      %47 = sbr.rel (0) target = $region21
    $region20: #{_forward_core.1} parent=1 // pred_region
      _
    $region21: #{_forward_core.1} parent=1 // pred_fallthru
      _
    // Predicated region
    $region22: #{_forward_core.1} parent=1 // pred_check
      _
    $region23: #{_forward_core.1} parent=1 // pred_check_branch
      %49 = sbr.rel (0) target = $region25
    $region24: #{_forward_core.1} parent=1 // pred_region
      _
    $region25: #{_forward_core.1} parent=1 // pred_fallthru
      _
    // Predicated region
    $region26: #{_forward_core.1} parent=1 // pred_check
      _
    $region27: #{_forward_core.1} parent=1 // pred_check_branch
      %51 = sbr.rel (0) target = $region29
    $region28: #{_forward_core.1} parent=1 // pred_region
      _
    $region29: #{_forward_core.1} parent=1 // pred_fallthru
      _
    // Predicated region
    $region30: #{_forward_core.1} parent=1 // pred_check
      _
    $region31: #{_forward_core.1} parent=1 // pred_check_branch
      %53 = sbr.rel (0) target = $region33
    $region32: #{_forward_core.1} parent=1 // pred_region
      _
    $region33: #{_forward_core.1} parent=1 // pred_fallthru
      _
    // Predicated region
    $region34: #{_forward_core.1} parent=1 // pred_check
      _
    $region35: #{_forward_core.1} parent=1 // pred_check_branch
      %55 = sbr.rel (0) target = $region37
    $region36: #{_forward_core.1} parent=1 // pred_region
      _
    $region37: #{_forward_core.1} parent=1 // pred_fallthru
      _
    // Predicated region
    $region38: #{_forward_core.1} parent=1 // pred_check
      _
    $region39: #{_forward_core.1} parent=1 // pred_check_branch
      %57 = sbr.rel (0) target = $region41
    $region40: #{_forward_core.1} parent=1 // pred_region
      _
    $region41: #{_forward_core.1} parent=1 // pred_fallthru
      _
    // Predicated region
    $region42: #{_forward_core.1} parent=1 // pred_check
      _
    $region43: #{_forward_core.1} parent=1 // pred_check_branch
      %59 = sbr.rel (0) target = $region45
    $region44: #{_forward_core.1} parent=1 // pred_region
      _
    $region45: #{_forward_core.1} parent=1 // pred_fallthru
      _
    // Predicated region
    $region46: #{_forward_core.1} parent=1 // pred_check
      _
    $region47: #{_forward_core.1} parent=1 // pred_check_branch
      %61 = sbr.rel (0) target = $region49
    $region48: #{_forward_core.1} parent=1 // pred_region
      _
    $region49: #{_forward_core.1} parent=1 // pred_fallthru
      _
    // Predicated region
    $region50: #{_forward_core.1} parent=1 // pred_check
      _
    $region51: #{_forward_core.1} parent=1 // pred_check_branch
      %63 = sbr.rel (0) target = $region53
    $region52: #{_forward_core.1} parent=1 // pred_region
      _
    $region53: #{_forward_core.1} parent=1 // pred_fallthru
      _
    // Predicated region
    $region54: #{_forward_core.1} parent=1 // pred_check
      _
    $region55: #{_forward_core.1} parent=1 // pred_check_branch
      %65 = sbr.rel (0) target = $region57
    $region56: #{_forward_core.1} parent=1 // pred_region
      _
    $region57: #{_forward_core.1} parent=1 // pred_fallthru
      _
    // Predicated region
    $region58: #{_forward_core.1} parent=1 // pred_check
      _
    $region59: #{_forward_core.1} parent=1 // pred_check_branch
      %67 = sbr.rel (0) target = $region61
    $region60: #{_forward_core.1} parent=1 // pred_region
      _
    $region61: #{_forward_core.1} parent=1 // pred_fallthru
      _
    // Predicated region
    $region62: #{_forward_core.1} parent=1 // pred_check
      _
    $region63: #{_forward_core.1} parent=1 // pred_check_branch
      %69 = sbr.rel (0) target = $region65
    $region64: #{_forward_core.1} parent=1 // pred_region
      _
    $region65: #{_forward_core.1} parent=1 // pred_fallthru
      _
    // Predicated region
    $region66: #{_forward_core.1} parent=1 // pred_check
      _
    $region67: #{_forward_core.1} parent=1 // pred_check_branch
      %71 = sbr.rel (0) target = $region69
    $region68: #{_forward_core.1} parent=1 // pred_region
      _
    $region69: #{_forward_core.1} parent=1 // pred_fallthru
      _
    // Predicated region
    $region70: #{_forward_core.1} parent=1 // pred_check
      _
    $region71: #{_forward_core.1} parent=1 // pred_check_branch
      %73 = sbr.rel (0) target = $region73
    $region72: #{_forward_core.1} parent=1 // pred_region
      _
    $region73: #{_forward_core.1} parent=1 // pred_fallthru
      _
    // Predicated region
    $region74: #{_forward_core.1} parent=1 // pred_check
      _
    $region75: #{_forward_core.1} parent=1 // pred_check_branch
      %75 = sbr.rel (0) target = $region77
    $region76: #{_forward_core.1} parent=1 // pred_region
      _
    $region77: #{_forward_core.1} parent=1 // pred_fallthru
      _
    // Predicated region
    $region78: #{_forward_core.1} parent=1 // pred_check
      _
    $region79: #{_forward_core.1} parent=1 // pred_check_branch
      %77 = sbr.rel (0) target = $region81
    $region80: #{_forward_core.1} parent=1 // pred_region
      _
    $region81: #{_forward_core.1} parent=1 // pred_fallthru
      _
    // Predicated region
    $region82: #{_forward_core.1} parent=1 // pred_check
      _
    $region83: #{_forward_core.1} parent=1 // pred_check_branch
      %79 = sbr.rel (0) target = $region85
    $region84: #{_forward_core.1} parent=1 // pred_region
      _
    $region85: #{_forward_core.1} parent=1 // pred_fallthru
      _
    // Predicated region
    $region86: #{_forward_core.1} parent=1 // pred_check
      _
    $region87: #{_forward_core.1} parent=1 // pred_check_branch
      %81 = sbr.rel (0) target = $region89
    $region88: #{_forward_core.1} parent=1 // pred_region
      _
    $region89: #{_forward_core.1} parent=1 // pred_fallthru
      _
    // Predicated region
    $region90: #{_forward_core.1} parent=1 // pred_check
      _
    $region91: #{_forward_core.1} parent=1 // pred_check_branch
      %83 = sbr.rel (0) target = $region93
    $region92: #{_forward_core.1} parent=1 // pred_region
      _
    $region93: #{_forward_core.1} parent=1 // pred_fallthru
      _
    // Predicated region
    $region94: #{_forward_core.1} parent=1 // pred_check
      _
    $region95: #{_forward_core.1} parent=1 // pred_check_branch
      %85 = sbr.rel (0) target = $region97
    $region96: #{_forward_core.1} parent=1 // pred_region
      %86 = dma.done [#allocation5], 16
    $region97: #{_forward_core.1} parent=1 // pred_fallthru
      _
    %87 = sfence
    %v89 = vld [vmem:[%s2] sm:$0xff]
    %v90 = vld [vmem:[%s2 + $0x8] sm:$0xff]
    %vm91 = vcmp.ne.s32.totalorder %v89, 0
    %vm92 = vcmp.ne.s32.totalorder %v90, 0
    %v93 = vsel %vm91, 1, 0
    %v94 = vsel %vm92, 1, 0
    %v95 = vcvt.s32.f32 %v93
    %v96 = vcvt.s32.f32 %v94
    %v97 = vld [vmem:[%s3] sm:$0xff]
    %v98 = vld [vmem:[%s3 + $0x8] sm:$0xff]
    %v99 = vld [vmem:[%s4] sm:$0xff]
    %v100 = vld [vmem:[%s4 + $0x8] sm:$0xff]
    %v101 = vlaneseq
    %v102 = vshrl.u32 %v101, 7
    %v103 = vadd.s32 %v102, 8
    %v104 = vlaneseq
    %v105 = vand.u32 %v104, 127
    %vm106 = vcmp.le.s32.totalorder %v105, %v102
    %vm107 = vcmp.le.s32.totalorder %v105, %v103
    %108 = vset.pattern.permute.xlu0 0
    %109 = vperm.xlu0 %108, %v89
    %v110 = vpop.permute.xlu0 %109
    %111 = vset.pattern.permute.xlu0 0
    %112 = vperm.xlu0 %111, %v90
    %v113 = vpop.permute.xlu0 %112
    %v114 = vsub.s32 %v102, %v110
    %v115 = vsub.s32 %v103, %v113
    %vm116 = vcmp.ge.s32.totalorder %v105, %v114
    %vm117 = vcmp.ge.s32.totalorder %v105, %v115
    %vm118 = vmand %vm106, %vm116
    %vm119 = vmand %vm107, %vm117
    %v120 = vld [vmem:[%s1] sm:$0xff]
    %v121 = vld [vmem:[%s1 + $0x8] sm:$0xff]
    %v122 = vld [vmem:[%s5] sm:$0x1]
    %v123 = vmul.f32 %v120, %v120
    %v124 = vmul.f32 %v121, %v121
    %vm125 = vcmask 261120
    %v126 = vsel %vm125, %v123, 0.0
    %127 = vadd.xlane.f32.xlu0 %v126
    %v128 = vpop.xlane.xlu0 %127
    %v129 = vsel %vm125, %v124, 0.0
    %130 = vadd.xlane.f32.xlu0 %v129
    %v131 = vpop.xlane.xlu0 %130
    %v132 = vrcp.pop 32.0
    %v133 = vmul.f32 %v128, %v132
    %v134 = vmul.f32 %v131, %v132
    %v135 = vadd.f32 %v133, 1e-06
    %v136 = vadd.f32 %v134, 1e-06
    %v137 = vrsqrt.pop %v135
    %v138 = vrsqrt.pop %v136
    %v139 = vmul.f32 %v120, %v137
    %v140 = vmul.f32 %v121, %v138
    %v142 = vlaneseq
    %v143 = vshrl.u32 %v142, 7
    %v144 = vsub.s32 0, %v143
    %v145 = vrot.slane %v122, %v144
    %v147 = vmul.f32 %v139, %v145
    %v148 = vmul.f32 %v140, %v145
    %v149 = vpack.c.bf16 %v148, %v147
    %v150 = vld [vmem:[%s6] sm:$0xf]
    %v151 = vld [vmem:[%s6 + $0x4] sm:$0xf]
    %v152 = vld [vmem:[%s6 + $0x8] sm:$0xf]
    %v153 = vld [vmem:[%s6 + $0xc] sm:$0xf]
    %v158 = vunpack.c.l.b16 %v150
    %v159 = vunpack.c.l.b16 %v151
    %v160 = vunpack.c.l.b16 %v152
    %v161 = vunpack.c.l.b16 %v153
    %v162 = vpack.c.b16 %v159, %v158
    %v163 = vpack.c.b16 %v161, %v160
    %v167 = vsel %vm125, %v149, 0
    %169 = vmatprep.subr.bf16.mxu0 0
    %170 = vmatpush1.bf16.msra.mxu0 %v162
    %171 = vmatprep.subr.bf16.mxu0 0
    %172 = vmatpush1.bf16.msra.mxu0 %v163
    %173 = vmatprep.subr.bf16.mxu0 0
    %174 = vmatpush1.bf16.msra.mxu0 0
    %175 = vmatprep.subr.bf16.mxu0 0
    %176 = vmatpush1.bf16.msra.mxu0 0
    %177 = vmatprep.subr.bf16.mxu0 0
    %178 = vmatpush1.bf16.msra.mxu0 0
    %179 = vmatprep.subr.bf16.mxu0 0
    %180 = vmatpush1.bf16.msra.mxu0 0
    %181 = vmatprep.subr.bf16.mxu0 0
    %182 = vmatpush1.bf16.msra.mxu0 0
    %183 = vmatprep.subr.bf16.mxu0 0
    %184 = vmatpush1.bf16.msra.mxu0 0
    %185 = vmatprep.subr.bf16.mxu0 0
    %186 = vmatpush1.bf16.msra.mxu0 0
    %187 = vmatprep.subr.bf16.mxu0 0
    %188 = vmatpush1.bf16.msra.mxu0 0
    %189 = vmatprep.subr.bf16.mxu0 0
    %190 = vmatpush1.bf16.msra.mxu0 0
    %191 = vmatprep.subr.bf16.mxu0 0
    %192 = vmatpush1.bf16.msra.mxu0 0
    %193 = vmatprep.subr.bf16.mxu0 0
    %194 = vmatpush1.bf16.msra.mxu0 0
    %195 = vmatprep.subr.bf16.mxu0 0
    %196 = vmatpush1.bf16.msra.mxu0 0
    %197 = vmatprep.subr.bf16.mxu0 0
    %198 = vmatpush1.bf16.msra.mxu0 0
    %199 = vmatprep.subr.bf16.mxu0 0
    %200 = vmatpush1.bf16.msra.mxu0 0
    %201 = vmatprep.mubr.bf16.mxu0 0
    %202 = vmatmul.mubr.bf16.gmra.mrb[0].mxu0 %v167
    %v203 = vpop.f32.mrb[0].mxu0
    %v204 = vadd.f32 0.0, %v203
    %v205 = vpop.f32.mrb[0].mxu0
    %v206 = vpop.f32.mrb[0].mxu0
    %v207 = vadd.f32 0.0, %v206
    %v208 = vpop.f32.mrb[0].mxu0
    %209 = vdwg.mxu0
    %v210 = vld [vmem:[%s7] sm:$0xf]
    %v211 = vlaneseq
    %v212 = vshrl.u32 %v211, 7
    %v213 = vsub.s32 0, %v212
    %v214 = vrot.slane %v210, %v213
    %v215 = vmul.f32 %v214, %v204
    %v216 = vmul.f32 %v214, %v207
    %vm219 = vcmask 1040384
    %v220 = vrot.slane %v204, 7
    %v221 = vrot.slane %v207, 7
    %v222 = vsel %vm219, %v220, %v221
    %v225 = vsel %vm219, 0.0, %v220
    %vm226 = vcmp.ge.s32.totalorder %v89, 1
    %vm227 = vcmp.ge.s32.totalorder %v90, 1
    %v228 = vsel %vm226, 1, 0
    %v229 = vsel %vm227, 1, 0
    %v230 = vcvt.s32.f32 %v228
    %v231 = vcvt.s32.f32 %v229
    %233 = vset.pattern.permute.xlu0 0
    %234 = vperm.xlu0 %233, %v230
    %v235 = vpop.permute.xlu0 %234
    %238 = vset.pattern.permute.xlu0 0
    %239 = vperm.xlu0 %238, %v231
    %v240 = vpop.permute.xlu0 %239
    %v242 = vmul.f32 %v225, %v235
    %v243 = vmul.f32 %v222, %v240
    %v244 = vlaneseq
    %v245 = vshrl.u32 %v244, 7
    %v246 = vsub.s32 1, %v245
    %v247 = vrot.slane %v210, %v246
    %v248 = vmul.f32 %v247, %v242
    %v249 = vmul.f32 %v247, %v243
    %v250 = vadd.f32 %v215, %v248
    %v251 = vadd.f32 %v216, %v249
    %vm252 = vcmask 1041408
    %v253 = vrot.slane %v204, 6
    %v254 = vrot.slane %v207, 6
    %v255 = vsel %vm252, %v253, %v254
    %v258 = vsel %vm252, 0.0, %v253
    %vm259 = vcmp.ge.s32.totalorder %v89, 2
    %vm260 = vcmp.ge.s32.totalorder %v90, 2
    %v261 = vsel %vm259, 1, 0
    %v262 = vsel %vm260, 1, 0
    %v263 = vcvt.s32.f32 %v261
    %v264 = vcvt.s32.f32 %v262
    %266 = vset.pattern.permute.xlu0 0
    %267 = vperm.xlu0 %266, %v263
    %v268 = vpop.permute.xlu0 %267
    %271 = vset.pattern.permute.xlu0 0
    %272 = vperm.xlu0 %271, %v264
    %v273 = vpop.permute.xlu0 %272
    %v275 = vmul.f32 %v258, %v268
    %v276 = vmul.f32 %v255, %v273
    %v277 = vlaneseq
    %v278 = vshrl.u32 %v277, 7
    %v279 = vsub.s32 2, %v278
    %v280 = vrot.slane %v210, %v279
    %v281 = vmul.f32 %v280, %v275
    %v282 = vmul.f32 %v280, %v276
    %v283 = vadd.f32 %v250, %v281
    %v284 = vadd.f32 %v251, %v282
    %vm285 = vcmask 1042432
    %v286 = vrot.slane %v204, 5
    %v287 = vrot.slane %v207, 5
    %v288 = vsel %vm285, %v286, %v287
    %v291 = vsel %vm285, 0.0, %v286
    %vm292 = vcmp.ge.s32.totalorder %v89, 3
    %vm293 = vcmp.ge.s32.totalorder %v90, 3
    %v294 = vsel %vm292, 1, 0
    %v295 = vsel %vm293, 1, 0
    %v296 = vcvt.s32.f32 %v294
    %v297 = vcvt.s32.f32 %v295
    %299 = vset.pattern.permute.xlu0 0
    %300 = vperm.xlu0 %299, %v296
    %v301 = vpop.permute.xlu0 %300
    %304 = vset.pattern.permute.xlu0 0
    %305 = vperm.xlu0 %304, %v297
    %v306 = vpop.permute.xlu0 %305
    %v308 = vmul.f32 %v291, %v301
    %v309 = vmul.f32 %v288, %v306
    %v310 = vlaneseq
    %v311 = vshrl.u32 %v310, 7
    %v312 = vsub.s32 3, %v311
    %v313 = vrot.slane %v210, %v312
    %v314 = vmul.f32 %v313, %v308
    %v315 = vmul.f32 %v313, %v309
    %v316 = vadd.f32 %v283, %v314
    %v317 = vadd.f32 %v284, %v315
    %v318 = vld [vmem:[%s8] sm:$0x1]
    %v320 = vlaneseq
    %v321 = vshrl.u32 %v320, 7
    %v322 = vsub.s32 0, %v321
    %v323 = vrot.slane %v318, %v322
    %v325 = vadd.f32 %v316, %v323
    %v326 = vadd.f32 %v317, %v323
    %v327 = vxor.u32 %v325, 2147483648
    %v328 = vxor.u32 %v326, 2147483648
    %v329 = vmul.f32 %v327, 1.442695
    %v330 = vpow.pop %v329
    %v331 = vmul.f32 %v328, 1.442695
    %v332 = vpow.pop %v331
    %v333 = vadd.f32 %v330, 1.0
    %v334 = vadd.f32 %v332, 1.0
    %v335 = vrcp.pop %v333
    %v336 = vmul.f32 1.0, %v335
    %v337 = vrcp.pop %v334
    %v338 = vmul.f32 1.0, %v337
    %v339 = vmul.f32 %v325, %v336
    %v340 = vmul.f32 %v326, %v338
    %v341 = vpack.c.bf16 %v340, %v339
    %v342 = vld [vmem:[%s9] sm:$0xf]
    %v343 = vld [vmem:[%s9 + $0x4] sm:$0xf]
    %v344 = vld [vmem:[%s9 + $0x8] sm:$0xf]
    %v345 = vld [vmem:[%s9 + $0xc] sm:$0xf]
    %v346 = vld [vmem:[%s9 + $0x10] sm:$0xf]
    %v347 = vld [vmem:[%s9 + $0x14] sm:$0xf]
    %v348 = vld [vmem:[%s9 + $0x18] sm:$0xf]
    %v349 = vld [vmem:[%s9 + $0x1c] sm:$0xf]
    %v358 = vunpack.c.l.b16 %v342
    %v359 = vunpack.c.l.b16 %v343
    %v360 = vunpack.c.l.b16 %v344
    %v361 = vunpack.c.l.b16 %v345
    %v362 = vunpack.c.l.b16 %v346
    %v363 = vunpack.c.l.b16 %v347
    %v364 = vunpack.c.l.b16 %v348
    %v365 = vunpack.c.l.b16 %v349
    %v366 = vpack.c.b16 %v359, %v358
    %v367 = vpack.c.b16 %v361, %v360
    %v368 = vpack.c.b16 %v363, %v362
    %v369 = vpack.c.b16 %v365, %v364
    %vm374 = vcmask 523264
    %v376 = vsel %vm374, %v341, 0
    %378 = vmatprep.subr.bf16.mxu0 0
    %379 = vmatpush1.bf16.msra.mxu0 %v366
    %380 = vmatprep.subr.bf16.mxu0 0
    %381 = vmatpush1.bf16.msra.mxu0 %v367
    %382 = vmatprep.subr.bf16.mxu0 0
    %383 = vmatpush1.bf16.msra.mxu0 %v368
    %384 = vmatprep.subr.bf16.mxu0 0
    %385 = vmatpush1.bf16.msra.mxu0 %v369
    %386 = vmatprep.subr.bf16.mxu0 0
    %387 = vmatpush1.bf16.msra.mxu0 0
    %388 = vmatprep.subr.bf16.mxu0 0
    %389 = vmatpush1.bf16.msra.mxu0 0
    %390 = vmatprep.subr.bf16.mxu0 0
    %391 = vmatpush1.bf16.msra.mxu0 0
    %392 = vmatprep.subr.bf16.mxu0 0
    %393 = vmatpush1.bf16.msra.mxu0 0
    %394 = vmatprep.subr.bf16.mxu0 0
    %395 = vmatpush1.bf16.msra.mxu0 0
    %396 = vmatprep.subr.bf16.mxu0 0
    %397 = vmatpush1.bf16.msra.mxu0 0
    %398 = vmatprep.subr.bf16.mxu0 0
    %399 = vmatpush1.bf16.msra.mxu0 0
    %400 = vmatprep.subr.bf16.mxu0 0
    %401 = vmatpush1.bf16.msra.mxu0 0
    %402 = vmatprep.subr.bf16.mxu0 0
    %403 = vmatpush1.bf16.msra.mxu0 0
    %404 = vmatprep.subr.bf16.mxu0 0
    %405 = vmatpush1.bf16.msra.mxu0 0
    %406 = vmatprep.subr.bf16.mxu0 0
    %407 = vmatpush1.bf16.msra.mxu0 0
    %408 = vmatprep.subr.bf16.mxu0 0
    %409 = vmatpush1.bf16.msra.mxu0 0
    %410 = vmatprep.mubr.bf16.mxu0 0
    %411 = vmatmul.mubr.bf16.gmra.mrb[0].mxu0 %v376
    %v412 = vpop.f32.mrb[0].mxu0
    %v413 = vadd.f32 0.0, %v412
    %v414 = vpop.f32.mrb[0].mxu0
    %v415 = vpop.f32.mrb[0].mxu0
    %v416 = vadd.f32 0.0, %v415
    %v417 = vpop.f32.mrb[0].mxu0
    %418 = vdwg.mxu0
    %v419 = vld [vmem:[%s11] sm:$0x1]
    %v420 = vld [vmem:[%s10] sm:$0x1]
    %422 = vset.pattern.permute.xlu0 32
    %423 = vperm.xlu0 %422, %v413
    %v424 = vpop.permute.xlu0 %423
    %427 = vset.pattern.permute.xlu0 32
    %428 = vperm.xlu0 %427, %v416
    %v429 = vpop.permute.xlu0 %428
    %v431 = vlaneseq
    %v432 = vshrl.u32 %v431, 7
    %v433 = vsub.s32 0, %v432
    %v434 = vrot.slane %v420, %v433
    %v435 = vmul.f32 %v424, %v434
    %v436 = vmul.f32 %v429, %v434
    %v438 = vlaneseq
    %v439 = vshrl.u32 %v438, 7
    %v440 = vsub.s32 0, %v439
    %v441 = vrot.slane %v419, %v440
    %v443 = vadd.f32 %v441, %v435
    %v444 = vadd.f32 %v441, %v436
    %v445 = vld [vmem:[%s10 + $0x1] sm:$0x1]
    %446 = vset.pattern.permute.xlu0 33
    %447 = vperm.xlu0 %446, %v413
    %v448 = vpop.permute.xlu0 %447
    %450 = vset.pattern.permute.xlu0 33
    %451 = vperm.xlu0 %450, %v416
    %v452 = vpop.permute.xlu0 %451
    %v454 = vlaneseq
    %v455 = vshrl.u32 %v454, 7
    %v456 = vsub.s32 0, %v455
    %v457 = vrot.slane %v445, %v456
    %v458 = vmul.f32 %v448, %v457
    %v459 = vmul.f32 %v452, %v457
    %v460 = vadd.f32 %v443, %v458
    %v461 = vadd.f32 %v444, %v459
    %v462 = vmax.f32 %v460, 0.0
    %v463 = vmax.f32 %v461, 0.0
    %v464 = vand.u32 2147483647, %v460
    %v465 = vand.u32 2147483647, %v461
    %v466 = vsub.f32 0.0, %v464
    %v467 = vsub.f32 0.0, %v465
    %v468 = vmul.f32 %v466, 1.442695
    %v469 = vpow.pop %v468
    %v470 = vmul.f32 %v467, 1.442695
    %v471 = vpow.pop %v470
    %v472 = vadd.f32 %v469, 1.0
    %v473 = vadd.f32 %v471, 1.0
    %v474 = vlog2.pop %v472
    %v475 = vmul.f32 %v474, 0.6931472
    %v476 = vlog2.pop %v473
    %v477 = vmul.f32 %v476, 0.6931472
    %v478 = vadd.f32 %v462, %v475
    %v479 = vadd.f32 %v463, %v477
    %v480 = vmul.f32 %v478, %v339
    %v481 = vmul.f32 %v479, %v340
    %v482 = vld [vmem:[%s12] sm:$0xff]
    %v483 = vld [vmem:[%s12 + $0x8] sm:$0xff]
    %v486 = vcombine.high %v478, %v478
    %v488 = vunpack.c.l.s4 1966171168
    %v489 = vunpack.c.0.s8 %v488
    %v490 = vlaneseq
    %v491 = vshrl.u32 %v490, 7
    %v492 = vsub.s32 %v489, %v491
    %v493 = vrot.slane %v478, %v492
    %v495 = vunpack.c.l.s4 1966171168
    %v496 = vunpack.c.0.s8 %v495
    %v497 = vlaneseq
    %v498 = vshrl.u32 %v497, 7
    %v499 = vsub.s32 %v496, %v498
    %v500 = vrot.slane %v486, %v499
    %v501 = vcombine.high %v493, %v493
    %v502 = vcombine.high %v500, %v500
    %v504 = vunpack.c.l.s4 1966171168
    %v505 = vunpack.c.0.s8 %v504
    %v506 = vlaneseq
    %v507 = vshrl.u32 %v506, 7
    %v508 = vsub.s32 %v505, %v507
    %v509 = vrot.slane %v493, %v508
    %v511 = vunpack.c.l.s4 1966171168
    %v512 = vunpack.c.0.s8 %v511
    %v513 = vlaneseq
    %v514 = vshrl.u32 %v513, 7
    %v515 = vsub.s32 %v512, %v514
    %v516 = vrot.slane %v500, %v515
    %v518 = vunpack.c.l.s4 1966171168
    %v519 = vunpack.c.0.s8 %v518
    %v520 = vlaneseq
    %v521 = vshrl.u32 %v520, 7
    %v522 = vsub.s32 %v519, %v521
    %v523 = vrot.slane %v501, %v522
    %v525 = vunpack.c.l.s4 1966171168
    %v526 = vunpack.c.0.s8 %v525
    %v527 = vlaneseq
    %v528 = vshrl.u32 %v527, 7
    %v529 = vsub.s32 %v526, %v528
    %v530 = vrot.slane %v502, %v529
    %v531 = vcombine.high %v509, %v509
    %v532 = vcombine.high %v516, %v516
    %v533 = vcombine.high %v523, %v523
    %v534 = vcombine.high %v530, %v530
    %v535 = vcombine.high %v479, %v479
    %v537 = vunpack.c.l.s4 1966171168
    %v538 = vunpack.c.0.s8 %v537
    %v539 = vlaneseq
    %v540 = vshrl.u32 %v539, 7
    %v541 = vsub.s32 %v538, %v540
    %v542 = vrot.slane %v479, %v541
    %v544 = vunpack.c.l.s4 1966171168
    %v545 = vunpack.c.0.s8 %v544
    %v546 = vlaneseq
    %v547 = vshrl.u32 %v546, 7
    %v548 = vsub.s32 %v545, %v547
    %v549 = vrot.slane %v535, %v548
    %v550 = vcombine.high %v542, %v542
    %v551 = vcombine.high %v549, %v549
    %v553 = vunpack.c.l.s4 1966171168
    %v554 = vunpack.c.0.s8 %v553
    %v555 = vlaneseq
    %v556 = vshrl.u32 %v555, 7
    %v557 = vsub.s32 %v554, %v556
    %v558 = vrot.slane %v542, %v557
    %v560 = vunpack.c.l.s4 1966171168
    %v561 = vunpack.c.0.s8 %v560
    %v562 = vlaneseq
    %v563 = vshrl.u32 %v562, 7
    %v564 = vsub.s32 %v561, %v563
    %v565 = vrot.slane %v549, %v564
    %v567 = vunpack.c.l.s4 1966171168
    %v568 = vunpack.c.0.s8 %v567
    %v569 = vlaneseq
    %v570 = vshrl.u32 %v569, 7
    %v571 = vsub.s32 %v568, %v570
    %v572 = vrot.slane %v550, %v571
    %v574 = vunpack.c.l.s4 1966171168
    %v575 = vunpack.c.0.s8 %v574
    %v576 = vlaneseq
    %v577 = vshrl.u32 %v576, 7
    %v578 = vsub.s32 %v575, %v577
    %v579 = vrot.slane %v551, %v578
    %v580 = vcombine.high %v558, %v558
    %v581 = vcombine.high %v565, %v565
    %v582 = vcombine.high %v572, %v572
    %v583 = vcombine.high %v579, %v579
    %v584 = vlaneseq
    %v585 = vshrl.u32 %v584, 7
    %v586 = vsub.s32 0, %v585
    %v587 = vrot.slane %v509, %v586
    %v588 = vlaneseq
    %v589 = vshrl.u32 %v588, 7
    %v590 = vsub.s32 0, %v589
    %v591 = vrot.slane %v523, %v590
    %v592 = vlaneseq
    %v593 = vshrl.u32 %v592, 7
    %v594 = vsub.s32 0, %v593
    %v595 = vrot.slane %v531, %v594
    %v596 = vlaneseq
    %v597 = vshrl.u32 %v596, 7
    %v598 = vsub.s32 0, %v597
    %v599 = vrot.slane %v533, %v598
    %v600 = vlaneseq
    %v601 = vshrl.u32 %v600, 7
    %v602 = vsub.s32 0, %v601
    %v603 = vrot.slane %v516, %v602
    %v604 = vlaneseq
    %v605 = vshrl.u32 %v604, 7
    %v606 = vsub.s32 0, %v605
    %v607 = vrot.slane %v530, %v606
    %v608 = vlaneseq
    %v609 = vshrl.u32 %v608, 7
    %v610 = vsub.s32 0, %v609
    %v611 = vrot.slane %v532, %v610
    %v612 = vlaneseq
    %v613 = vshrl.u32 %v612, 7
    %v614 = vsub.s32 0, %v613
    %v615 = vrot.slane %v534, %v614
    %v616 = vlaneseq
    %v617 = vshrl.u32 %v616, 7
    %v618 = vsub.s32 0, %v617
    %v619 = vrot.slane %v558, %v618
    %v620 = vlaneseq
    %v621 = vshrl.u32 %v620, 7
    %v622 = vsub.s32 0, %v621
    %v623 = vrot.slane %v572, %v622
    %v624 = vlaneseq
    %v625 = vshrl.u32 %v624, 7
    %v626 = vsub.s32 0, %v625
    %v627 = vrot.slane %v580, %v626
    %v628 = vlaneseq
    %v629 = vshrl.u32 %v628, 7
    %v630 = vsub.s32 0, %v629
    %v631 = vrot.slane %v582, %v630
    %v632 = vlaneseq
    %v633 = vshrl.u32 %v632, 7
    %v634 = vsub.s32 0, %v633
    %v635 = vrot.slane %v565, %v634
    %v636 = vlaneseq
    %v637 = vshrl.u32 %v636, 7
    %v638 = vsub.s32 0, %v637
    %v639 = vrot.slane %v579, %v638
    %v640 = vlaneseq
    %v641 = vshrl.u32 %v640, 7
    %v642 = vsub.s32 0, %v641
    %v643 = vrot.slane %v581, %v642
    %v644 = vlaneseq
    %v645 = vshrl.u32 %v644, 7
    %v646 = vsub.s32 0, %v645
    %v647 = vrot.slane %v583, %v646
    %v664 = vmul.f32 %v587, %v482
    %v665 = vmul.f32 %v587, %v483
    %v666 = vmul.f32 %v591, %v482
    %v667 = vmul.f32 %v591, %v483
    %v668 = vmul.f32 %v595, %v482
    %v669 = vmul.f32 %v595, %v483
    %v670 = vmul.f32 %v599, %v482
    %v671 = vmul.f32 %v599, %v483
    %v672 = vmul.f32 %v603, %v482
    %v673 = vmul.f32 %v603, %v483
    %v674 = vmul.f32 %v607, %v482
    %v675 = vmul.f32 %v607, %v483
    %v676 = vmul.f32 %v611, %v482
    %v677 = vmul.f32 %v611, %v483
    %v678 = vmul.f32 %v615, %v482
    %v679 = vmul.f32 %v615, %v483
    %v680 = vmul.f32 %v619, %v482
    %v681 = vmul.f32 %v619, %v483
    %v682 = vmul.f32 %v623, %v482
    %v683 = vmul.f32 %v623, %v483
    %v684 = vmul.f32 %v627, %v482
    %v685 = vmul.f32 %v627, %v483
    %v686 = vmul.f32 %v631, %v482
    %v687 = vmul.f32 %v631, %v483
    %v688 = vmul.f32 %v635, %v482
    %v689 = vmul.f32 %v635, %v483
    %v690 = vmul.f32 %v639, %v482
    %v691 = vmul.f32 %v639, %v483
    %v692 = vmul.f32 %v643, %v482
    %v693 = vmul.f32 %v643, %v483
    %v694 = vmul.f32 %v647, %v482
    %v695 = vmul.f32 %v647, %v483
    %v696 = vmul.f32 %v664, 1.442695
    %v697 = vpow.pop %v696
    %v698 = vmul.f32 %v665, 1.442695
    %v699 = vpow.pop %v698
    %v700 = vmul.f32 %v666, 1.442695
    %v701 = vpow.pop %v700
    %v702 = vmul.f32 %v667, 1.442695
    %v703 = vpow.pop %v702
    %v704 = vmul.f32 %v668, 1.442695
    %v705 = vpow.pop %v704
    %v706 = vmul.f32 %v669, 1.442695
    %v707 = vpow.pop %v706
    %v708 = vmul.f32 %v670, 1.442695
    %v709 = vpow.pop %v708
    %v710 = vmul.f32 %v671, 1.442695
    %v711 = vpow.pop %v710
    %v712 = vmul.f32 %v672, 1.442695
    %v713 = vpow.pop %v712
    %v714 = vmul.f32 %v673, 1.442695
    %v715 = vpow.pop %v714
    %v716 = vmul.f32 %v674, 1.442695
    %v717 = vpow.pop %v716
    %v718 = vmul.f32 %v675, 1.442695
    %v719 = vpow.pop %v718
    %v720 = vmul.f32 %v676, 1.442695
    %v721 = vpow.pop %v720
    %v722 = vmul.f32 %v677, 1.442695
    %v723 = vpow.pop %v722
    %v724 = vmul.f32 %v678, 1.442695
    %v725 = vpow.pop %v724
    %v726 = vmul.f32 %v679, 1.442695
    %v727 = vpow.pop %v726
    %v728 = vmul.f32 %v680, 1.442695
    %v729 = vpow.pop %v728
    %v730 = vmul.f32 %v681, 1.442695
    %v731 = vpow.pop %v730
    %v732 = vmul.f32 %v682, 1.442695
    %v733 = vpow.pop %v732
    %v734 = vmul.f32 %v683, 1.442695
    %v735 = vpow.pop %v734
    %v736 = vmul.f32 %v684, 1.442695
    %v737 = vpow.pop %v736
    %v738 = vmul.f32 %v685, 1.442695
    %v739 = vpow.pop %v738
    %v740 = vmul.f32 %v686, 1.442695
    %v741 = vpow.pop %v740
    %v742 = vmul.f32 %v687, 1.442695
    %v743 = vpow.pop %v742
    %v744 = vmul.f32 %v688, 1.442695
    %v745 = vpow.pop %v744
    %v746 = vmul.f32 %v689, 1.442695
    %v747 = vpow.pop %v746
    %v748 = vmul.f32 %v690, 1.442695
    %v749 = vpow.pop %v748
    %v750 = vmul.f32 %v691, 1.442695
    %v751 = vpow.pop %v750
    %v752 = vmul.f32 %v692, 1.442695
    %v753 = vpow.pop %v752
    %v754 = vmul.f32 %v693, 1.442695
    %v755 = vpow.pop %v754
    %v756 = vmul.f32 %v694, 1.442695
    %v757 = vpow.pop %v756
    %v758 = vmul.f32 %v695, 1.442695
    %v759 = vpow.pop %v758
    %v762 = vcombine.high %v95, %v95
    %v764 = vunpack.c.l.s4 1966171168
    %v765 = vunpack.c.0.s8 %v764
    %v766 = vlaneseq
    %v767 = vshrl.u32 %v766, 7
    %v768 = vsub.s32 %v765, %v767
    %v769 = vrot.slane %v95, %v768
    %v771 = vunpack.c.l.s4 1966171168
    %v772 = vunpack.c.0.s8 %v771
    %v773 = vlaneseq
    %v774 = vshrl.u32 %v773, 7
    %v775 = vsub.s32 %v772, %v774
    %v776 = vrot.slane %v762, %v775
    %v777 = vcombine.high %v769, %v769
    %v778 = vcombine.high %v776, %v776
    %v780 = vunpack.c.l.s4 1966171168
    %v781 = vunpack.c.0.s8 %v780
    %v782 = vlaneseq
    %v783 = vshrl.u32 %v782, 7
    %v784 = vsub.s32 %v781, %v783
    %v785 = vrot.slane %v769, %v784
    %v787 = vunpack.c.l.s4 1966171168
    %v788 = vunpack.c.0.s8 %v787
    %v789 = vlaneseq
    %v790 = vshrl.u32 %v789, 7
    %v791 = vsub.s32 %v788, %v790
    %v792 = vrot.slane %v776, %v791
    %v794 = vunpack.c.l.s4 1966171168
    %v795 = vunpack.c.0.s8 %v794
    %v796 = vlaneseq
    %v797 = vshrl.u32 %v796, 7
    %v798 = vsub.s32 %v795, %v797
    %v799 = vrot.slane %v777, %v798
    %v801 = vunpack.c.l.s4 1966171168
    %v802 = vunpack.c.0.s8 %v801
    %v803 = vlaneseq
    %v804 = vshrl.u32 %v803, 7
    %v805 = vsub.s32 %v802, %v804
    %v806 = vrot.slane %v778, %v805
    %v807 = vcombine.high %v785, %v785
    %v808 = vcombine.high %v792, %v792
    %v809 = vcombine.high %v799, %v799
    %v810 = vcombine.high %v806, %v806
    %v811 = vcombine.high %v96, %v96
    %v813 = vunpack.c.l.s4 1966171168
    %v814 = vunpack.c.0.s8 %v813
    %v815 = vlaneseq
    %v816 = vshrl.u32 %v815, 7
    %v817 = vsub.s32 %v814, %v816
    %v818 = vrot.slane %v96, %v817
    %v820 = vunpack.c.l.s4 1966171168
    %v821 = vunpack.c.0.s8 %v820
    %v822 = vlaneseq
    %v823 = vshrl.u32 %v822, 7
    %v824 = vsub.s32 %v821, %v823
    %v825 = vrot.slane %v811, %v824
    %v826 = vcombine.high %v818, %v818
    %v827 = vcombine.high %v825, %v825
    %v829 = vunpack.c.l.s4 1966171168
    %v830 = vunpack.c.0.s8 %v829
    %v831 = vlaneseq
    %v832 = vshrl.u32 %v831, 7
    %v833 = vsub.s32 %v830, %v832
    %v834 = vrot.slane %v818, %v833
    %v836 = vunpack.c.l.s4 1966171168
    %v837 = vunpack.c.0.s8 %v836
    %v838 = vlaneseq
    %v839 = vshrl.u32 %v838, 7
    %v840 = vsub.s32 %v837, %v839
    %v841 = vrot.slane %v825, %v840
    %v843 = vunpack.c.l.s4 1966171168
    %v844 = vunpack.c.0.s8 %v843
    %v845 = vlaneseq
    %v846 = vshrl.u32 %v845, 7
    %v847 = vsub.s32 %v844, %v846
    %v848 = vrot.slane %v826, %v847
    %v850 = vunpack.c.l.s4 1966171168
    %v851 = vunpack.c.0.s8 %v850
    %v852 = vlaneseq
    %v853 = vshrl.u32 %v852, 7
    %v854 = vsub.s32 %v851, %v853
    %v855 = vrot.slane %v827, %v854
    %v856 = vcombine.high %v834, %v834
    %v857 = vcombine.high %v841, %v841
    %v858 = vcombine.high %v848, %v848
    %v859 = vcombine.high %v855, %v855
    %v860 = vlaneseq
    %v861 = vshrl.u32 %v860, 7
    %v862 = vsub.s32 0, %v861
    %v863 = vrot.slane %v785, %v862
    %v864 = vlaneseq
    %v865 = vshrl.u32 %v864, 7
    %v866 = vsub.s32 0, %v865
    %v867 = vrot.slane %v799, %v866
    %v868 = vlaneseq
    %v869 = vshrl.u32 %v868, 7
    %v870 = vsub.s32 0, %v869
    %v871 = vrot.slane %v807, %v870
    %v872 = vlaneseq
    %v873 = vshrl.u32 %v872, 7
    %v874 = vsub.s32 0, %v873
    %v875 = vrot.slane %v809, %v874
    %v876 = vlaneseq
    %v877 = vshrl.u32 %v876, 7
    %v878 = vsub.s32 0, %v877
    %v879 = vrot.slane %v792, %v878
    %v880 = vlaneseq
    %v881 = vshrl.u32 %v880, 7
    %v882 = vsub.s32 0, %v881
    %v883 = vrot.slane %v806, %v882
    %v884 = vlaneseq
    %v885 = vshrl.u32 %v884, 7
    %v886 = vsub.s32 0, %v885
    %v887 = vrot.slane %v808, %v886
    %v888 = vlaneseq
    %v889 = vshrl.u32 %v888, 7
    %v890 = vsub.s32 0, %v889
    %v891 = vrot.slane %v810, %v890
    %v892 = vlaneseq
    %v893 = vshrl.u32 %v892, 7
    %v894 = vsub.s32 0, %v893
    %v895 = vrot.slane %v834, %v894
    %v896 = vlaneseq
    %v897 = vshrl.u32 %v896, 7
    %v898 = vsub.s32 0, %v897
    %v899 = vrot.slane %v848, %v898
    %v900 = vlaneseq
    %v901 = vshrl.u32 %v900, 7
    %v902 = vsub.s32 0, %v901
    %v903 = vrot.slane %v856, %v902
    %v904 = vlaneseq
    %v905 = vshrl.u32 %v904, 7
    %v906 = vsub.s32 0, %v905
    %v907 = vrot.slane %v858, %v906
    %v908 = vlaneseq
    %v909 = vshrl.u32 %v908, 7
    %v910 = vsub.s32 0, %v909
    %v911 = vrot.slane %v841, %v910
    %v912 = vlaneseq
    %v913 = vshrl.u32 %v912, 7
    %v914 = vsub.s32 0, %v913
    %v915 = vrot.slane %v855, %v914
    %v916 = vlaneseq
    %v917 = vshrl.u32 %v916, 7
    %v918 = vsub.s32 0, %v917
    %v919 = vrot.slane %v857, %v918
    %v920 = vlaneseq
    %v921 = vshrl.u32 %v920, 7
    %v922 = vsub.s32 0, %v921
    %v923 = vrot.slane %v859, %v922
    %924 = vset.pattern.permute.xlu0 0
    %925 = vperm.xlu0 %924, %v863
    %v926 = vpop.permute.xlu0 %925
    %928 = vset.pattern.permute.xlu0 0
    %929 = vperm.xlu0 %928, %v867
    %v930 = vpop.permute.xlu0 %929
    %932 = vset.pattern.permute.xlu0 0
    %933 = vperm.xlu0 %932, %v871
    %v934 = vpop.permute.xlu0 %933
    %936 = vset.pattern.permute.xlu0 0
    %937 = vperm.xlu0 %936, %v875
    %v938 = vpop.permute.xlu0 %937
    %940 = vset.pattern.permute.xlu0 0
    %941 = vperm.xlu0 %940, %v879
    %v942 = vpop.permute.xlu0 %941
    %944 = vset.pattern.permute.xlu0 0
    %945 = vperm.xlu0 %944, %v883
    %v946 = vpop.permute.xlu0 %945
    %948 = vset.pattern.permute.xlu0 0
    %949 = vperm.xlu0 %948, %v887
    %v950 = vpop.permute.xlu0 %949
    %952 = vset.pattern.permute.xlu0 0
    %953 = vperm.xlu0 %952, %v891
    %v954 = vpop.permute.xlu0 %953
    %956 = vset.pattern.permute.xlu0 0
    %957 = vperm.xlu0 %956, %v895
    %v958 = vpop.permute.xlu0 %957
    %960 = vset.pattern.permute.xlu0 0
    %961 = vperm.xlu0 %960, %v899
    %v962 = vpop.permute.xlu0 %961
    %964 = vset.pattern.permute.xlu0 0
    %965 = vperm.xlu0 %964, %v903
    %v966 = vpop.permute.xlu0 %965
    %968 = vset.pattern.permute.xlu0 0
    %969 = vperm.xlu0 %968, %v907
    %v970 = vpop.permute.xlu0 %969
    %972 = vset.pattern.permute.xlu0 0
    %973 = vperm.xlu0 %972, %v911
    %v974 = vpop.permute.xlu0 %973
    %976 = vset.pattern.permute.xlu0 0
    %977 = vperm.xlu0 %976, %v915
    %v978 = vpop.permute.xlu0 %977
    %980 = vset.pattern.permute.xlu0 0
    %981 = vperm.xlu0 %980, %v919
    %v982 = vpop.permute.xlu0 %981
    %984 = vset.pattern.permute.xlu0 0
    %985 = vperm.xlu0 %984, %v923
    %v986 = vpop.permute.xlu0 %985
    %v988 = vmul.f32 %v697, %v926
    %v989 = vmul.f32 %v699, %v926
    %v990 = vmul.f32 %v701, %v930
    %v991 = vmul.f32 %v703, %v930
    %v992 = vmul.f32 %v705, %v934
    %v993 = vmul.f32 %v707, %v934
    %v994 = vmul.f32 %v709, %v938
    %v995 = vmul.f32 %v711, %v938
    %v996 = vmul.f32 %v713, %v942
    %v997 = vmul.f32 %v715, %v942
    %v998 = vmul.f32 %v717, %v946
    %v999 = vmul.f32 %v719, %v946
    %v1000 = vmul.f32 %v721, %v950
    %v1001 = vmul.f32 %v723, %v950
    %v1002 = vmul.f32 %v725, %v954
    %v1003 = vmul.f32 %v727, %v954
    %v1004 = vmul.f32 %v729, %v958
    %v1005 = vmul.f32 %v731, %v958
    %v1006 = vmul.f32 %v733, %v962
    %v1007 = vmul.f32 %v735, %v962
    %v1008 = vmul.f32 %v737, %v966
    %v1009 = vmul.f32 %v739, %v966
    %v1010 = vmul.f32 %v741, %v970
    %v1011 = vmul.f32 %v743, %v970
    %v1012 = vmul.f32 %v745, %v974
    %v1013 = vmul.f32 %v747, %v974
    %v1014 = vmul.f32 %v749, %v978
    %v1015 = vmul.f32 %v751, %v978
    %v1016 = vmul.f32 %v753, %v982
    %v1017 = vmul.f32 %v755, %v982
    %v1018 = vmul.f32 %v757, %v986
    %v1019 = vmul.f32 %v759, %v986
    %v1020 = vlaneseq
    %v1021 = vshrl.u32 %v1020, 7
    %v1022 = vsub.s32 0, %v1021
    %v1023 = vrot.slane %v413, %v1022
    %1025 = vbcast.lane.b32.xlu0 %v1023, 256
    %v1026 = vpop.permute.xlu0 %1025
    %s1028 = sor.u32 256, 8
    %1029 = vbcast.lane.b32.xlu0 %v1023, %s1028
    %v1030 = vpop.permute.xlu0 %1029
    %v1031 = vlaneseq
    %v1032 = vshrl.u32 %v1031, 7
    %v1033 = vsub.s32 1, %v1032
    %v1034 = vrot.slane %v413, %v1033
    %1036 = vbcast.lane.b32.xlu0 %v1034, 256
    %v1037 = vpop.permute.xlu0 %1036
    %s1039 = sor.u32 256, 8
    %1040 = vbcast.lane.b32.xlu0 %v1034, %s1039
    %v1041 = vpop.permute.xlu0 %1040
    %v1042 = vlaneseq
    %v1043 = vshrl.u32 %v1042, 7
    %v1044 = vsub.s32 2, %v1043
    %v1045 = vrot.slane %v413, %v1044
    %1047 = vbcast.lane.b32.xlu0 %v1045, 256
    %v1048 = vpop.permute.xlu0 %1047
    %s1050 = sor.u32 256, 8
    %1051 = vbcast.lane.b32.xlu0 %v1045, %s1050
    %v1052 = vpop.permute.xlu0 %1051
    %v1053 = vlaneseq
    %v1054 = vshrl.u32 %v1053, 7
    %v1055 = vsub.s32 3, %v1054
    %v1056 = vrot.slane %v413, %v1055
    %1058 = vbcast.lane.b32.xlu0 %v1056, 256
    %v1059 = vpop.permute.xlu0 %1058
    %s1061 = sor.u32 256, 8
    %1062 = vbcast.lane.b32.xlu0 %v1056, %s1061
    %v1063 = vpop.permute.xlu0 %1062
    %v1064 = vlaneseq
    %v1065 = vshrl.u32 %v1064, 7
    %v1066 = vsub.s32 4, %v1065
    %v1067 = vrot.slane %v413, %v1066
    %1069 = vbcast.lane.b32.xlu0 %v1067, 256
    %v1070 = vpop.permute.xlu0 %1069
    %s1072 = sor.u32 256, 8
    %1073 = vbcast.lane.b32.xlu0 %v1067, %s1072
    %v1074 = vpop.permute.xlu0 %1073
    %v1075 = vlaneseq
    %v1076 = vshrl.u32 %v1075, 7
    %v1077 = vsub.s32 5, %v1076
    %v1078 = vrot.slane %v413, %v1077
    %1080 = vbcast.lane.b32.xlu0 %v1078, 256
    %v1081 = vpop.permute.xlu0 %1080
    %s1083 = sor.u32 256, 8
    %1084 = vbcast.lane.b32.xlu0 %v1078, %s1083
    %v1085 = vpop.permute.xlu0 %1084
    %v1086 = vlaneseq
    %v1087 = vshrl.u32 %v1086, 7
    %v1088 = vsub.s32 6, %v1087
    %v1089 = vrot.slane %v413, %v1088
    %1091 = vbcast.lane.b32.xlu0 %v1089, 256
    %v1092 = vpop.permute.xlu0 %1091
    %s1094 = sor.u32 256, 8
    %1095 = vbcast.lane.b32.xlu0 %v1089, %s1094
    %v1096 = vpop.permute.xlu0 %1095
    %v1097 = vlaneseq
    %v1098 = vshrl.u32 %v1097, 7
    %v1099 = vsub.s32 7, %v1098
    %v1100 = vrot.slane %v413, %v1099
    %1102 = vbcast.lane.b32.xlu0 %v1100, 256
    %v1103 = vpop.permute.xlu0 %1102
    %s1105 = sor.u32 256, 8
    %1106 = vbcast.lane.b32.xlu0 %v1100, %s1105
    %v1107 = vpop.permute.xlu0 %1106
    %v1108 = vlaneseq
    %v1109 = vshrl.u32 %v1108, 7
    %v1110 = vsub.s32 0, %v1109
    %v1111 = vrot.slane %v416, %v1110
    %1113 = vbcast.lane.b32.xlu0 %v1111, 256
    %v1114 = vpop.permute.xlu0 %1113
    %s1116 = sor.u32 256, 8
    %1117 = vbcast.lane.b32.xlu0 %v1111, %s1116
    %v1118 = vpop.permute.xlu0 %1117
    %v1119 = vlaneseq
    %v1120 = vshrl.u32 %v1119, 7
    %v1121 = vsub.s32 1, %v1120
    %v1122 = vrot.slane %v416, %v1121
    %1124 = vbcast.lane.b32.xlu0 %v1122, 256
    %v1125 = vpop.permute.xlu0 %1124
    %s1127 = sor.u32 256, 8
    %1128 = vbcast.lane.b32.xlu0 %v1122, %s1127
    %v1129 = vpop.permute.xlu0 %1128
    %v1130 = vlaneseq
    %v1131 = vshrl.u32 %v1130, 7
    %v1132 = vsub.s32 2, %v1131
    %v1133 = vrot.slane %v416, %v1132
    %1135 = vbcast.lane.b32.xlu0 %v1133, 256
    %v1136 = vpop.permute.xlu0 %1135
    %s1138 = sor.u32 256, 8
    %1139 = vbcast.lane.b32.xlu0 %v1133, %s1138
    %v1140 = vpop.permute.xlu0 %1139
    %v1141 = vlaneseq
    %v1142 = vshrl.u32 %v1141, 7
    %v1143 = vsub.s32 3, %v1142
    %v1144 = vrot.slane %v416, %v1143
    %1146 = vbcast.lane.b32.xlu0 %v1144, 256
    %v1147 = vpop.permute.xlu0 %1146
    %s1149 = sor.u32 256, 8
    %1150 = vbcast.lane.b32.xlu0 %v1144, %s1149
    %v1151 = vpop.permute.xlu0 %1150
    %v1152 = vlaneseq
    %v1153 = vshrl.u32 %v1152, 7
    %v1154 = vsub.s32 4, %v1153
    %v1155 = vrot.slane %v416, %v1154
    %1157 = vbcast.lane.b32.xlu0 %v1155, 256
    %v1158 = vpop.permute.xlu0 %1157
    %s1160 = sor.u32 256, 8
    %1161 = vbcast.lane.b32.xlu0 %v1155, %s1160
    %v1162 = vpop.permute.xlu0 %1161
    %v1163 = vlaneseq
    %v1164 = vshrl.u32 %v1163, 7
    %v1165 = vsub.s32 5, %v1164
    %v1166 = vrot.slane %v416, %v1165
    %1168 = vbcast.lane.b32.xlu0 %v1166, 256
    %v1169 = vpop.permute.xlu0 %1168
    %s1171 = sor.u32 256, 8
    %1172 = vbcast.lane.b32.xlu0 %v1166, %s1171
    %v1173 = vpop.permute.xlu0 %1172
    %v1174 = vlaneseq
    %v1175 = vshrl.u32 %v1174, 7
    %v1176 = vsub.s32 6, %v1175
    %v1177 = vrot.slane %v416, %v1176
    %1179 = vbcast.lane.b32.xlu0 %v1177, 256
    %v1180 = vpop.permute.xlu0 %1179
    %s1182 = sor.u32 256, 8
    %1183 = vbcast.lane.b32.xlu0 %v1177, %s1182
    %v1184 = vpop.permute.xlu0 %1183
    %v1185 = vlaneseq
    %v1186 = vshrl.u32 %v1185, 7
    %v1187 = vsub.s32 7, %v1186
    %v1188 = vrot.slane %v416, %v1187
    %1190 = vbcast.lane.b32.xlu0 %v1188, 256
    %v1191 = vpop.permute.xlu0 %1190
    %s1193 = sor.u32 256, 8
    %1194 = vbcast.lane.b32.xlu0 %v1188, %s1193
    %v1195 = vpop.permute.xlu0 %1194
    %v1198 = vcombine.high %v480, %v480
    %v1200 = vunpack.c.l.s4 1966171168
    %v1201 = vunpack.c.0.s8 %v1200
    %v1202 = vlaneseq
    %v1203 = vshrl.u32 %v1202, 7
    %v1204 = vsub.s32 %v1201, %v1203
    %v1205 = vrot.slane %v480, %v1204
    %v1207 = vunpack.c.l.s4 1966171168
    %v1208 = vunpack.c.0.s8 %v1207
    %v1209 = vlaneseq
    %v1210 = vshrl.u32 %v1209, 7
    %v1211 = vsub.s32 %v1208, %v1210
    %v1212 = vrot.slane %v1198, %v1211
    %v1213 = vcombine.high %v1205, %v1205
    %v1214 = vcombine.high %v1212, %v1212
    %v1216 = vunpack.c.l.s4 1966171168
    %v1217 = vunpack.c.0.s8 %v1216
    %v1218 = vlaneseq
    %v1219 = vshrl.u32 %v1218, 7
    %v1220 = vsub.s32 %v1217, %v1219
    %v1221 = vrot.slane %v1205, %v1220
    %v1223 = vunpack.c.l.s4 1966171168
    %v1224 = vunpack.c.0.s8 %v1223
    %v1225 = vlaneseq
    %v1226 = vshrl.u32 %v1225, 7
    %v1227 = vsub.s32 %v1224, %v1226
    %v1228 = vrot.slane %v1212, %v1227
    %v1230 = vunpack.c.l.s4 1966171168
    %v1231 = vunpack.c.0.s8 %v1230
    %v1232 = vlaneseq
    %v1233 = vshrl.u32 %v1232, 7
    %v1234 = vsub.s32 %v1231, %v1233
    %v1235 = vrot.slane %v1213, %v1234
    %v1237 = vunpack.c.l.s4 1966171168
    %v1238 = vunpack.c.0.s8 %v1237
    %v1239 = vlaneseq
    %v1240 = vshrl.u32 %v1239, 7
    %v1241 = vsub.s32 %v1238, %v1240
    %v1242 = vrot.slane %v1214, %v1241
    %v1243 = vcombine.high %v1221, %v1221
    %v1244 = vcombine.high %v1228, %v1228
    %v1245 = vcombine.high %v1235, %v1235
    %v1246 = vcombine.high %v1242, %v1242
    %v1247 = vcombine.high %v481, %v481
    %v1249 = vunpack.c.l.s4 1966171168
    %v1250 = vunpack.c.0.s8 %v1249
    %v1251 = vlaneseq
    %v1252 = vshrl.u32 %v1251, 7
    %v1253 = vsub.s32 %v1250, %v1252
    %v1254 = vrot.slane %v481, %v1253
    %v1256 = vunpack.c.l.s4 1966171168
    %v1257 = vunpack.c.0.s8 %v1256
    %v1258 = vlaneseq
    %v1259 = vshrl.u32 %v1258, 7
    %v1260 = vsub.s32 %v1257, %v1259
    %v1261 = vrot.slane %v1247, %v1260
    %v1262 = vcombine.high %v1254, %v1254
    %v1263 = vcombine.high %v1261, %v1261
    %v1265 = vunpack.c.l.s4 1966171168
    %v1266 = vunpack.c.0.s8 %v1265
    %v1267 = vlaneseq
    %v1268 = vshrl.u32 %v1267, 7
    %v1269 = vsub.s32 %v1266, %v1268
    %v1270 = vrot.slane %v1254, %v1269
    %v1272 = vunpack.c.l.s4 1966171168
    %v1273 = vunpack.c.0.s8 %v1272
    %v1274 = vlaneseq
    %v1275 = vshrl.u32 %v1274, 7
    %v1276 = vsub.s32 %v1273, %v1275
    %v1277 = vrot.slane %v1261, %v1276
    %v1279 = vunpack.c.l.s4 1966171168
    %v1280 = vunpack.c.0.s8 %v1279
    %v1281 = vlaneseq
    %v1282 = vshrl.u32 %v1281, 7
    %v1283 = vsub.s32 %v1280, %v1282
    %v1284 = vrot.slane %v1262, %v1283
    %v1286 = vunpack.c.l.s4 1966171168
    %v1287 = vunpack.c.0.s8 %v1286
    %v1288 = vlaneseq
    %v1289 = vshrl.u32 %v1288, 7
    %v1290 = vsub.s32 %v1287, %v1289
    %v1291 = vrot.slane %v1263, %v1290
    %v1292 = vcombine.high %v1270, %v1270
    %v1293 = vcombine.high %v1277, %v1277
    %v1294 = vcombine.high %v1284, %v1284
    %v1295 = vcombine.high %v1291, %v1291
    %v1296 = vlaneseq
    %v1297 = vshrl.u32 %v1296, 7
    %v1298 = vsub.s32 0, %v1297
    %v1299 = vrot.slane %v1221, %v1298
    %v1300 = vlaneseq
    %v1301 = vshrl.u32 %v1300, 7
    %v1302 = vsub.s32 0, %v1301
    %v1303 = vrot.slane %v1235, %v1302
    %v1304 = vlaneseq
    %v1305 = vshrl.u32 %v1304, 7
    %v1306 = vsub.s32 0, %v1305
    %v1307 = vrot.slane %v1243, %v1306
    %v1308 = vlaneseq
    %v1309 = vshrl.u32 %v1308, 7
    %v1310 = vsub.s32 0, %v1309
    %v1311 = vrot.slane %v1245, %v1310
    %v1312 = vlaneseq
    %v1313 = vshrl.u32 %v1312, 7
    %v1314 = vsub.s32 0, %v1313
    %v1315 = vrot.slane %v1228, %v1314
    %v1316 = vlaneseq
    %v1317 = vshrl.u32 %v1316, 7
    %v1318 = vsub.s32 0, %v1317
    %v1319 = vrot.slane %v1242, %v1318
    %v1320 = vlaneseq
    %v1321 = vshrl.u32 %v1320, 7
    %v1322 = vsub.s32 0, %v1321
    %v1323 = vrot.slane %v1244, %v1322
    %v1324 = vlaneseq
    %v1325 = vshrl.u32 %v1324, 7
    %v1326 = vsub.s32 0, %v1325
    %v1327 = vrot.slane %v1246, %v1326
    %v1328 = vlaneseq
    %v1329 = vshrl.u32 %v1328, 7
    %v1330 = vsub.s32 0, %v1329
    %v1331 = vrot.slane %v1270, %v1330
    %v1332 = vlaneseq
    %v1333 = vshrl.u32 %v1332, 7
    %v1334 = vsub.s32 0, %v1333
    %v1335 = vrot.slane %v1284, %v1334
    %v1336 = vlaneseq
    %v1337 = vshrl.u32 %v1336, 7
    %v1338 = vsub.s32 0, %v1337
    %v1339 = vrot.slane %v1292, %v1338
    %v1340 = vlaneseq
    %v1341 = vshrl.u32 %v1340, 7
    %v1342 = vsub.s32 0, %v1341
    %v1343 = vrot.slane %v1294, %v1342
    %v1344 = vlaneseq
    %v1345 = vshrl.u32 %v1344, 7
    %v1346 = vsub.s32 0, %v1345
    %v1347 = vrot.slane %v1277, %v1346
    %v1348 = vlaneseq
    %v1349 = vshrl.u32 %v1348, 7
    %v1350 = vsub.s32 0, %v1349
    %v1351 = vrot.slane %v1291, %v1350
    %v1352 = vlaneseq
    %v1353 = vshrl.u32 %v1352, 7
    %v1354 = vsub.s32 0, %v1353
    %v1355 = vrot.slane %v1293, %v1354
    %v1356 = vlaneseq
    %v1357 = vshrl.u32 %v1356, 7
    %v1358 = vsub.s32 0, %v1357
    %v1359 = vrot.slane %v1295, %v1358
    %v1376 = vmul.f32 %v1026, %v1299
    %v1377 = vmul.f32 %v1030, %v1299
    %v1378 = vmul.f32 %v1037, %v1303
    %v1379 = vmul.f32 %v1041, %v1303
    %v1380 = vmul.f32 %v1048, %v1307
    %v1381 = vmul.f32 %v1052, %v1307
    %v1382 = vmul.f32 %v1059, %v1311
    %v1383 = vmul.f32 %v1063, %v1311
    %v1384 = vmul.f32 %v1070, %v1315
    %v1385 = vmul.f32 %v1074, %v1315
    %v1386 = vmul.f32 %v1081, %v1319
    %v1387 = vmul.f32 %v1085, %v1319
    %v1388 = vmul.f32 %v1092, %v1323
    %v1389 = vmul.f32 %v1096, %v1323
    %v1390 = vmul.f32 %v1103, %v1327
    %v1391 = vmul.f32 %v1107, %v1327
    %v1392 = vmul.f32 %v1114, %v1331
    %v1393 = vmul.f32 %v1118, %v1331
    %v1394 = vmul.f32 %v1125, %v1335
    %v1395 = vmul.f32 %v1129, %v1335
    %v1396 = vmul.f32 %v1136, %v1339
    %v1397 = vmul.f32 %v1140, %v1339
    %v1398 = vmul.f32 %v1147, %v1343
    %v1399 = vmul.f32 %v1151, %v1343
    %v1400 = vmul.f32 %v1158, %v1347
    %v1401 = vmul.f32 %v1162, %v1347
    %v1402 = vmul.f32 %v1169, %v1351
    %v1403 = vmul.f32 %v1173, %v1351
    %v1404 = vmul.f32 %v1180, %v1355
    %v1405 = vmul.f32 %v1184, %v1355
    %v1406 = vmul.f32 %v1191, %v1359
    %v1407 = vmul.f32 %v1195, %v1359
    %v1408 = vmul.f32 %v988, 0.0
    %v1409 = vmul.f32 %v989, 0.0
    %v1410 = vadd.f32 %v1408, %v1376
    %v1411 = vadd.f32 %v1409, %v1377
    %v1412 = vmul.f32 %v1410, %v990
    %v1413 = vmul.f32 %v1411, %v991
    %v1414 = vadd.f32 %v1412, %v1378
    %v1415 = vadd.f32 %v1413, %v1379
    %v1416 = vmul.f32 %v1414, %v992
    %v1417 = vmul.f32 %v1415, %v993
    %v1418 = vadd.f32 %v1416, %v1380
    %v1419 = vadd.f32 %v1417, %v1381
    %v1420 = vmul.f32 %v1418, %v994
    %v1421 = vmul.f32 %v1419, %v995
    %v1422 = vadd.f32 %v1420, %v1382
    %v1423 = vadd.f32 %v1421, %v1383
    %v1424 = vmul.f32 %v1422, %v996
    %v1425 = vmul.f32 %v1423, %v997
    %v1426 = vadd.f32 %v1424, %v1384
    %v1427 = vadd.f32 %v1425, %v1385
    %v1428 = vmul.f32 %v1426, %v998
    %v1429 = vmul.f32 %v1427, %v999
    %v1430 = vadd.f32 %v1428, %v1386
    %v1431 = vadd.f32 %v1429, %v1387
    %v1432 = vmul.f32 %v1430, %v1000
    %v1433 = vmul.f32 %v1431, %v1001
    %v1434 = vadd.f32 %v1432, %v1388
    %v1435 = vadd.f32 %v1433, %v1389
    %v1436 = vmul.f32 %v1434, %v1002
    %v1437 = vmul.f32 %v1435, %v1003
    %v1438 = vadd.f32 %v1436, %v1390
    %v1439 = vadd.f32 %v1437, %v1391
    %v1440 = vmul.f32 %v1438, %v1004
    %v1441 = vmul.f32 %v1439, %v1005
    %v1442 = vadd.f32 %v1440, %v1392
    %v1443 = vadd.f32 %v1441, %v1393
    %v1444 = vmul.f32 %v1442, %v1006
    %v1445 = vmul.f32 %v1443, %v1007
    %v1446 = vadd.f32 %v1444, %v1394
    %v1447 = vadd.f32 %v1445, %v1395
    %v1448 = vmul.f32 %v1446, %v1008
    %v1449 = vmul.f32 %v1447, %v1009
    %v1450 = vadd.f32 %v1448, %v1396
    %v1451 = vadd.f32 %v1449, %v1397
    %v1452 = vmul.f32 %v1450, %v1010
    %v1453 = vmul.f32 %v1451, %v1011
    %v1454 = vadd.f32 %v1452, %v1398
    %v1455 = vadd.f32 %v1453, %v1399
    %v1456 = vmul.f32 %v1454, %v1012
    %v1457 = vmul.f32 %v1455, %v1013
    %v1458 = vadd.f32 %v1456, %v1400
    %v1459 = vadd.f32 %v1457, %v1401
    %v1460 = vmul.f32 %v1458, %v1014
    %v1461 = vmul.f32 %v1459, %v1015
    %v1462 = vadd.f32 %v1460, %v1402
    %v1463 = vadd.f32 %v1461, %v1403
    %v1464 = vmul.f32 %v1462, %v1016
    %v1465 = vmul.f32 %v1463, %v1017
    %v1466 = vadd.f32 %v1464, %v1404
    %v1467 = vadd.f32 %v1465, %v1405
    %v1468 = vmul.f32 %v1466, %v1018
    %v1469 = vmul.f32 %v1467, %v1019
    %v1470 = vadd.f32 %v1468, %v1406
    %v1471 = vadd.f32 %v1469, %v1407
    %s1473 = sor.u32 256, 16
    %1474 = vbcast.lane.b32.xlu0 %v1023, %s1473
    %v1475 = vpop.permute.xlu0 %1474
    %s1477 = sor.u32 256, 24
    %1478 = vbcast.lane.b32.xlu0 %v1023, %s1477
    %v1479 = vpop.permute.xlu0 %1478
    %s1481 = sor.u32 256, 16
    %1482 = vbcast.lane.b32.xlu0 %v1034, %s1481
    %v1483 = vpop.permute.xlu0 %1482
    %s1485 = sor.u32 256, 24
    %1486 = vbcast.lane.b32.xlu0 %v1034, %s1485
    %v1487 = vpop.permute.xlu0 %1486
    %s1489 = sor.u32 256, 16
    %1490 = vbcast.lane.b32.xlu0 %v1045, %s1489
    %v1491 = vpop.permute.xlu0 %1490
    %s1493 = sor.u32 256, 24
    %1494 = vbcast.lane.b32.xlu0 %v1045, %s1493
    %v1495 = vpop.permute.xlu0 %1494
    %s1497 = sor.u32 256, 16
    %1498 = vbcast.lane.b32.xlu0 %v1056, %s1497
    %v1499 = vpop.permute.xlu0 %1498
    %s1501 = sor.u32 256, 24
    %1502 = vbcast.lane.b32.xlu0 %v1056, %s1501
    %v1503 = vpop.permute.xlu0 %1502
    %s1505 = sor.u32 256, 16
    %1506 = vbcast.lane.b32.xlu0 %v1067, %s1505
    %v1507 = vpop.permute.xlu0 %1506
    %s1509 = sor.u32 256, 24
    %1510 = vbcast.lane.b32.xlu0 %v1067, %s1509
    %v1511 = vpop.permute.xlu0 %1510
    %s1513 = sor.u32 256, 16
    %1514 = vbcast.lane.b32.xlu0 %v1078, %s1513
    %v1515 = vpop.permute.xlu0 %1514
    %s1517 = sor.u32 256, 24
    %1518 = vbcast.lane.b32.xlu0 %v1078, %s1517
    %v1519 = vpop.permute.xlu0 %1518
    %s1521 = sor.u32 256, 16
    %1522 = vbcast.lane.b32.xlu0 %v1089, %s1521
    %v1523 = vpop.permute.xlu0 %1522
    %s1525 = sor.u32 256, 24
    %1526 = vbcast.lane.b32.xlu0 %v1089, %s1525
    %v1527 = vpop.permute.xlu0 %1526
    %s1529 = sor.u32 256, 16
    %1530 = vbcast.lane.b32.xlu0 %v1100, %s1529
    %v1531 = vpop.permute.xlu0 %1530
    %s1533 = sor.u32 256, 24
    %1534 = vbcast.lane.b32.xlu0 %v1100, %s1533
    %v1535 = vpop.permute.xlu0 %1534
    %s1537 = sor.u32 256, 16
    %1538 = vbcast.lane.b32.xlu0 %v1111, %s1537
    %v1539 = vpop.permute.xlu0 %1538
    %s1541 = sor.u32 256, 24
    %1542 = vbcast.lane.b32.xlu0 %v1111, %s1541
    %v1543 = vpop.permute.xlu0 %1542
    %s1545 = sor.u32 256, 16
    %1546 = vbcast.lane.b32.xlu0 %v1122, %s1545
    %v1547 = vpop.permute.xlu0 %1546
    %s1549 = sor.u32 256, 24
    %1550 = vbcast.lane.b32.xlu0 %v1122, %s1549
    %v1551 = vpop.permute.xlu0 %1550
    %s1553 = sor.u32 256, 16
    %1554 = vbcast.lane.b32.xlu0 %v1133, %s1553
    %v1555 = vpop.permute.xlu0 %1554
    %s1557 = sor.u32 256, 24
    %1558 = vbcast.lane.b32.xlu0 %v1133, %s1557
    %v1559 = vpop.permute.xlu0 %1558
    %s1561 = sor.u32 256, 16
    %1562 = vbcast.lane.b32.xlu0 %v1144, %s1561
    %v1563 = vpop.permute.xlu0 %1562
    %s1565 = sor.u32 256, 24
    %1566 = vbcast.lane.b32.xlu0 %v1144, %s1565
    %v1567 = vpop.permute.xlu0 %1566
    %s1569 = sor.u32 256, 16
    %1570 = vbcast.lane.b32.xlu0 %v1155, %s1569
    %v1571 = vpop.permute.xlu0 %1570
    %s1573 = sor.u32 256, 24
    %1574 = vbcast.lane.b32.xlu0 %v1155, %s1573
    %v1575 = vpop.permute.xlu0 %1574
    %s1577 = sor.u32 256, 16
    %1578 = vbcast.lane.b32.xlu0 %v1166, %s1577
    %v1579 = vpop.permute.xlu0 %1578
    %s1581 = sor.u32 256, 24
    %1582 = vbcast.lane.b32.xlu0 %v1166, %s1581
    %v1583 = vpop.permute.xlu0 %1582
    %s1585 = sor.u32 256, 16
    %1586 = vbcast.lane.b32.xlu0 %v1177, %s1585
    %v1587 = vpop.permute.xlu0 %1586
    %s1589 = sor.u32 256, 24
    %1590 = vbcast.lane.b32.xlu0 %v1177, %s1589
    %v1591 = vpop.permute.xlu0 %1590
    %s1593 = sor.u32 256, 16
    %1594 = vbcast.lane.b32.xlu0 %v1188, %s1593
    %v1595 = vpop.permute.xlu0 %1594
    %s1597 = sor.u32 256, 24
    %1598 = vbcast.lane.b32.xlu0 %v1188, %s1597
    %v1599 = vpop.permute.xlu0 %1598
    %v1600 = vmul.f32 %v1475, %v1410
    %v1601 = vmul.f32 %v1479, %v1411
    %v1602 = vmul.f32 %v1483, %v1414
    %v1603 = vmul.f32 %v1487, %v1415
    %v1604 = vmul.f32 %v1491, %v1418
    %v1605 = vmul.f32 %v1495, %v1419
    %v1606 = vmul.f32 %v1499, %v1422
    %v1607 = vmul.f32 %v1503, %v1423
    %v1608 = vmul.f32 %v1507, %v1426
    %v1609 = vmul.f32 %v1511, %v1427
    %v1610 = vmul.f32 %v1515, %v1430
    %v1611 = vmul.f32 %v1519, %v1431
    %v1612 = vmul.f32 %v1523, %v1434
    %v1613 = vmul.f32 %v1527, %v1435
    %v1614 = vmul.f32 %v1531, %v1438
    %v1615 = vmul.f32 %v1535, %v1439
    %v1616 = vmul.f32 %v1539, %v1442
    %v1617 = vmul.f32 %v1543, %v1443
    %v1618 = vmul.f32 %v1547, %v1446
    %v1619 = vmul.f32 %v1551, %v1447
    %v1620 = vmul.f32 %v1555, %v1450
    %v1621 = vmul.f32 %v1559, %v1451
    %v1622 = vmul.f32 %v1563, %v1454
    %v1623 = vmul.f32 %v1567, %v1455
    %v1624 = vmul.f32 %v1571, %v1458
    %v1625 = vmul.f32 %v1575, %v1459
    %v1626 = vmul.f32 %v1579, %v1462
    %v1627 = vmul.f32 %v1583, %v1463
    %v1628 = vmul.f32 %v1587, %v1466
    %v1629 = vmul.f32 %v1591, %v1467
    %v1630 = vmul.f32 %v1595, %v1470
    %v1631 = vmul.f32 %v1599, %v1471
    %v1632 = vsel %vm374, %v1600, 0.0
    %v1633 = vsel %vm374, %v1601, 0.0
    %v1634 = vadd.f32 %v1632, %v1633
    %v1635 = vrot.slane %v1634, 4
    %v1636 = vadd.f32 %v1634, %v1635
    %v1637 = vrot.slane %v1636, 2
    %v1638 = vadd.f32 %v1636, %v1637
    %v1639 = vrot.slane %v1638, 1
    %v1640 = vadd.f32 %v1638, %v1639
    %v1641 = vsel %vm374, %v1602, 0.0
    %v1642 = vsel %vm374, %v1603, 0.0
    %v1643 = vadd.f32 %v1641, %v1642
    %v1644 = vrot.slane %v1643, 4
    %v1645 = vadd.f32 %v1643, %v1644
    %v1646 = vrot.slane %v1645, 2
    %v1647 = vadd.f32 %v1645, %v1646
    %v1648 = vrot.slane %v1647, 1
    %v1649 = vadd.f32 %v1647, %v1648
    %v1650 = vsel %vm374, %v1604, 0.0
    %v1651 = vsel %vm374, %v1605, 0.0
    %v1652 = vadd.f32 %v1650, %v1651
    %v1653 = vrot.slane %v1652, 4
    %v1654 = vadd.f32 %v1652, %v1653
    %v1655 = vrot.slane %v1654, 2
    %v1656 = vadd.f32 %v1654, %v1655
    %v1657 = vrot.slane %v1656, 1
    %v1658 = vadd.f32 %v1656, %v1657
    %v1659 = vsel %vm374, %v1606, 0.0
    %v1660 = vsel %vm374, %v1607, 0.0
    %v1661 = vadd.f32 %v1659, %v1660
    %v1662 = vrot.slane %v1661, 4
    %v1663 = vadd.f32 %v1661, %v1662
    %v1664 = vrot.slane %v1663, 2
    %v1665 = vadd.f32 %v1663, %v1664
    %v1666 = vrot.slane %v1665, 1
    %v1667 = vadd.f32 %v1665, %v1666
    %v1668 = vsel %vm374, %v1608, 0.0
    %v1669 = vsel %vm374, %v1609, 0.0
    %v1670 = vadd.f32 %v1668, %v1669
    %v1671 = vrot.slane %v1670, 4
    %v1672 = vadd.f32 %v1670, %v1671
    %v1673 = vrot.slane %v1672, 2
    %v1674 = vadd.f32 %v1672, %v1673
    %v1675 = vrot.slane %v1674, 1
    %v1676 = vadd.f32 %v1674, %v1675
    %v1677 = vsel %vm374, %v1610, 0.0
    %v1678 = vsel %vm374, %v1611, 0.0
    %v1679 = vadd.f32 %v1677, %v1678
    %v1680 = vrot.slane %v1679, 4
    %v1681 = vadd.f32 %v1679, %v1680
    %v1682 = vrot.slane %v1681, 2
    %v1683 = vadd.f32 %v1681, %v1682
    %v1684 = vrot.slane %v1683, 1
    %v1685 = vadd.f32 %v1683, %v1684
    %v1686 = vsel %vm374, %v1612, 0.0
    %v1687 = vsel %vm374, %v1613, 0.0
    %v1688 = vadd.f32 %v1686, %v1687
    %v1689 = vrot.slane %v1688, 4
    %v1690 = vadd.f32 %v1688, %v1689
    %v1691 = vrot.slane %v1690, 2
    %v1692 = vadd.f32 %v1690, %v1691
    %v1693 = vrot.slane %v1692, 1
    %v1694 = vadd.f32 %v1692, %v1693
    %v1695 = vsel %vm374, %v1614, 0.0
    %v1696 = vsel %vm374, %v1615, 0.0
    %v1697 = vadd.f32 %v1695, %v1696
    %v1698 = vrot.slane %v1697, 4
    %v1699 = vadd.f32 %v1697, %v1698
    %v1700 = vrot.slane %v1699, 2
    %v1701 = vadd.f32 %v1699, %v1700
    %v1702 = vrot.slane %v1701, 1
    %v1703 = vadd.f32 %v1701, %v1702
    %v1704 = vsel %vm374, %v1616, 0.0
    %v1705 = vsel %vm374, %v1617, 0.0
    %v1706 = vadd.f32 %v1704, %v1705
    %v1707 = vrot.slane %v1706, 4
    %v1708 = vadd.f32 %v1706, %v1707
    %v1709 = vrot.slane %v1708, 2
    %v1710 = vadd.f32 %v1708, %v1709
    %v1711 = vrot.slane %v1710, 1
    %v1712 = vadd.f32 %v1710, %v1711
    %v1713 = vsel %vm374, %v1618, 0.0
    %v1714 = vsel %vm374, %v1619, 0.0
    %v1715 = vadd.f32 %v1713, %v1714
    %v1716 = vrot.slane %v1715, 4
    %v1717 = vadd.f32 %v1715, %v1716
    %v1718 = vrot.slane %v1717, 2
    %v1719 = vadd.f32 %v1717, %v1718
    %v1720 = vrot.slane %v1719, 1
    %v1721 = vadd.f32 %v1719, %v1720
    %v1722 = vsel %vm374, %v1620, 0.0
    %v1723 = vsel %vm374, %v1621, 0.0
    %v1724 = vadd.f32 %v1722, %v1723
    %v1725 = vrot.slane %v1724, 4
    %v1726 = vadd.f32 %v1724, %v1725
    %v1727 = vrot.slane %v1726, 2
    %v1728 = vadd.f32 %v1726, %v1727
    %v1729 = vrot.slane %v1728, 1
    %v1730 = vadd.f32 %v1728, %v1729
    %v1731 = vsel %vm374, %v1622, 0.0
    %v1732 = vsel %vm374, %v1623, 0.0
    %v1733 = vadd.f32 %v1731, %v1732
    %v1734 = vrot.slane %v1733, 4
    %v1735 = vadd.f32 %v1733, %v1734
    %v1736 = vrot.slane %v1735, 2
    %v1737 = vadd.f32 %v1735, %v1736
    %v1738 = vrot.slane %v1737, 1
    %v1739 = vadd.f32 %v1737, %v1738
    %v1740 = vsel %vm374, %v1624, 0.0
    %v1741 = vsel %vm374, %v1625, 0.0
    %v1742 = vadd.f32 %v1740, %v1741
    %v1743 = vrot.slane %v1742, 4
    %v1744 = vadd.f32 %v1742, %v1743
    %v1745 = vrot.slane %v1744, 2
    %v1746 = vadd.f32 %v1744, %v1745
    %v1747 = vrot.slane %v1746, 1
    %v1748 = vadd.f32 %v1746, %v1747
    %v1749 = vsel %vm374, %v1626, 0.0
    %v1750 = vsel %vm374, %v1627, 0.0
    %v1751 = vadd.f32 %v1749, %v1750
    %v1752 = vrot.slane %v1751, 4
    %v1753 = vadd.f32 %v1751, %v1752
    %v1754 = vrot.slane %v1753, 2
    %v1755 = vadd.f32 %v1753, %v1754
    %v1756 = vrot.slane %v1755, 1
    %v1757 = vadd.f32 %v1755, %v1756
    %v1758 = vsel %vm374, %v1628, 0.0
    %v1759 = vsel %vm374, %v1629, 0.0
    %v1760 = vadd.f32 %v1758, %v1759
    %v1761 = vrot.slane %v1760, 4
    %v1762 = vadd.f32 %v1760, %v1761
    %v1763 = vrot.slane %v1762, 2
    %v1764 = vadd.f32 %v1762, %v1763
    %v1765 = vrot.slane %v1764, 1
    %v1766 = vadd.f32 %v1764, %v1765
    %v1767 = vsel %vm374, %v1630, 0.0
    %v1768 = vsel %vm374, %v1631, 0.0
    %v1769 = vadd.f32 %v1767, %v1768
    %v1770 = vrot.slane %v1769, 4
    %v1771 = vadd.f32 %v1769, %v1770
    %v1772 = vrot.slane %v1771, 2
    %v1773 = vadd.f32 %v1771, %v1772
    %v1774 = vrot.slane %v1773, 1
    %v1775 = vadd.f32 %v1773, %v1774
    %v1776 = vld [vmem:[%s13] sm:$0x1]
    %v1778 = vlaneseq
    %v1779 = vshrl.u32 %v1778, 7
    %v1780 = vsub.s32 0, %v1779
    %v1781 = vrot.slane %v1776, %v1780
    %v1783 = vmul.f32 %v1781, %v339
    %v1784 = vmul.f32 %v1781, %v340
    %v1787 = vrot.slane %v1783, 1
    %v1788 = vrot.slane %v1783, 2
    %v1789 = vrot.slane %v1783, 3
    %v1790 = vrot.slane %v1783, 4
    %v1791 = vrot.slane %v1783, 5
    %v1792 = vrot.slane %v1783, 6
    %v1793 = vrot.slane %v1783, 7
    %v1794 = vrot.slane %v1784, 1
    %v1795 = vrot.slane %v1784, 2
    %v1796 = vrot.slane %v1784, 3
    %v1797 = vrot.slane %v1784, 4
    %v1798 = vrot.slane %v1784, 5
    %v1799 = vrot.slane %v1784, 6
    %v1800 = vrot.slane %v1784, 7
    %v1817 = vadd.f32 %v1640, %v1783
    %v1818 = vadd.f32 %v1649, %v1787
    %v1819 = vadd.f32 %v1658, %v1788
    %v1820 = vadd.f32 %v1667, %v1789
    %v1821 = vadd.f32 %v1676, %v1790
    %v1822 = vadd.f32 %v1685, %v1791
    %v1823 = vadd.f32 %v1694, %v1792
    %v1824 = vadd.f32 %v1703, %v1793
    %v1825 = vadd.f32 %v1712, %v1784
    %v1826 = vadd.f32 %v1721, %v1794
    %v1827 = vadd.f32 %v1730, %v1795
    %v1828 = vadd.f32 %v1739, %v1796
    %v1829 = vadd.f32 %v1748, %v1797
    %v1830 = vadd.f32 %v1757, %v1798
    %v1831 = vadd.f32 %v1766, %v1799
    %v1832 = vadd.f32 %v1775, %v1800
    %v1833 = vxor.u32 %v204, 2147483648
    %v1834 = vxor.u32 %v207, 2147483648
    %v1835 = vmul.f32 %v1833, 1.442695
    %v1836 = vpow.pop %v1835
    %v1837 = vmul.f32 %v1834, 1.442695
    %v1838 = vpow.pop %v1837
    %v1839 = vadd.f32 %v1836, 1.0
    %v1840 = vadd.f32 %v1838, 1.0
    %v1841 = vrcp.pop %v1839
    %v1842 = vmul.f32 1.0, %v1841
    %v1843 = vrcp.pop %v1840
    %v1844 = vmul.f32 1.0, %v1843
    %v1845 = vmul.f32 %v204, %v1842
    %v1846 = vmul.f32 %v207, %v1844
    %v1849 = vrot.slane %v1845, 1
    %v1850 = vrot.slane %v1845, 2
    %v1851 = vrot.slane %v1845, 3
    %v1852 = vrot.slane %v1845, 4
    %v1853 = vrot.slane %v1845, 5
    %v1854 = vrot.slane %v1845, 6
    %v1855 = vrot.slane %v1845, 7
    %v1856 = vrot.slane %v1846, 1
    %v1857 = vrot.slane %v1846, 2
    %v1858 = vrot.slane %v1846, 3
    %v1859 = vrot.slane %v1846, 4
    %v1860 = vrot.slane %v1846, 5
    %v1861 = vrot.slane %v1846, 6
    %v1862 = vrot.slane %v1846, 7
    %1863 = vrot.lane.b32.xlu0 %v1845, 64
    %v1864 = vpop.permute.xlu0 %1863
    %1865 = vrot.lane.b32.xlu0 %v1849, 64
    %v1866 = vpop.permute.xlu0 %1865
    %1867 = vrot.lane.b32.xlu0 %v1850, 64
    %v1868 = vpop.permute.xlu0 %1867
    %1869 = vrot.lane.b32.xlu0 %v1851, 64
    %v1870 = vpop.permute.xlu0 %1869
    %1871 = vrot.lane.b32.xlu0 %v1852, 64
    %v1872 = vpop.permute.xlu0 %1871
    %1873 = vrot.lane.b32.xlu0 %v1853, 64
    %v1874 = vpop.permute.xlu0 %1873
    %1875 = vrot.lane.b32.xlu0 %v1854, 64
    %v1876 = vpop.permute.xlu0 %1875
    %1877 = vrot.lane.b32.xlu0 %v1855, 64
    %v1878 = vpop.permute.xlu0 %1877
    %1879 = vrot.lane.b32.xlu0 %v1846, 64
    %v1880 = vpop.permute.xlu0 %1879
    %1881 = vrot.lane.b32.xlu0 %v1856, 64
    %v1882 = vpop.permute.xlu0 %1881
    %1883 = vrot.lane.b32.xlu0 %v1857, 64
    %v1884 = vpop.permute.xlu0 %1883
    %1885 = vrot.lane.b32.xlu0 %v1858, 64
    %v1886 = vpop.permute.xlu0 %1885
    %1887 = vrot.lane.b32.xlu0 %v1859, 64
    %v1888 = vpop.permute.xlu0 %1887
    %1889 = vrot.lane.b32.xlu0 %v1860, 64
    %v1890 = vpop.permute.xlu0 %1889
    %1891 = vrot.lane.b32.xlu0 %v1861, 64
    %v1892 = vpop.permute.xlu0 %1891
    %1893 = vrot.lane.b32.xlu0 %v1862, 64
    %v1894 = vpop.permute.xlu0 %1893
    %v1911 = vmul.f32 %v1817, %v1864
    %v1912 = vmul.f32 %v1818, %v1866
    %v1913 = vmul.f32 %v1819, %v1868
    %v1914 = vmul.f32 %v1820, %v1870
    %v1915 = vmul.f32 %v1821, %v1872
    %v1916 = vmul.f32 %v1822, %v1874
    %v1917 = vmul.f32 %v1823, %v1876
    %v1918 = vmul.f32 %v1824, %v1878
    %v1919 = vmul.f32 %v1825, %v1880
    %v1920 = vmul.f32 %v1826, %v1882
    %v1921 = vmul.f32 %v1827, %v1884
    %v1922 = vmul.f32 %v1828, %v1886
    %v1923 = vmul.f32 %v1829, %v1888
    %v1924 = vmul.f32 %v1830, %v1890
    %v1925 = vmul.f32 %v1831, %v1892
    %v1926 = vmul.f32 %v1832, %v1894
    %v1927 = vpack.c.bf16 %v1911, %v1911
    %v1928 = vpack.c.bf16 %v1912, %v1912
    %v1929 = vpack.c.bf16 %v1913, %v1913
    %v1930 = vpack.c.bf16 %v1914, %v1914
    %v1931 = vpack.c.bf16 %v1915, %v1915
    %v1932 = vpack.c.bf16 %v1916, %v1916
    %v1933 = vpack.c.bf16 %v1917, %v1917
    %v1934 = vpack.c.bf16 %v1918, %v1918
    %v1935 = vpack.c.bf16 %v1919, %v1919
    %v1936 = vpack.c.bf16 %v1920, %v1920
    %v1937 = vpack.c.bf16 %v1921, %v1921
    %v1938 = vpack.c.bf16 %v1922, %v1922
    %v1939 = vpack.c.bf16 %v1923, %v1923
    %v1940 = vpack.c.bf16 %v1924, %v1924
    %v1941 = vpack.c.bf16 %v1925, %v1925
    %v1942 = vpack.c.bf16 %v1926, %v1926
    %v1943 = vld [vmem:[%s14] sm:$0xf]
    %v1944 = vld [vmem:[%s14 + $0x4] sm:$0xf]
    %v1945 = vld [vmem:[%s14 + $0x8] sm:$0xf]
    %v1946 = vld [vmem:[%s14 + $0xc] sm:$0xf]
    %v1947 = vld [vmem:[%s14 + $0x10] sm:$0xf]
    %v1948 = vld [vmem:[%s14 + $0x14] sm:$0xf]
    %v1949 = vld [vmem:[%s14 + $0x18] sm:$0xf]
    %v1950 = vld [vmem:[%s14 + $0x1c] sm:$0xf]
    %v1967 = vunpack.c.l.b16 %v1927
    %v1968 = vunpack.c.l.b16 %v1928
    %v1969 = vunpack.c.l.b16 %v1929
    %v1970 = vunpack.c.l.b16 %v1930
    %v1971 = vunpack.c.l.b16 %v1931
    %v1972 = vunpack.c.l.b16 %v1932
    %v1973 = vunpack.c.l.b16 %v1933
    %v1974 = vunpack.c.l.b16 %v1934
    %v1975 = vunpack.c.l.b16 %v1935
    %v1976 = vunpack.c.l.b16 %v1936
    %v1977 = vunpack.c.l.b16 %v1937
    %v1978 = vunpack.c.l.b16 %v1938
    %v1979 = vunpack.c.l.b16 %v1939
    %v1980 = vunpack.c.l.b16 %v1940
    %v1981 = vunpack.c.l.b16 %v1941
    %v1982 = vunpack.c.l.b16 %v1942
    %v1983 = vrot.slane %v1968, 7
    %vm1984 = vcmask 1041409
    %v1985 = vsel %vm1984, %v1983, %v1967
    %v1986 = vrot.slane %v1969, 6
    %vm1987 = vcmask 1042434
    %v1988 = vsel %vm1987, %v1986, %v1985
    %v1989 = vrot.slane %v1970, 5
    %vm1990 = vcmask 1043459
    %v1991 = vsel %vm1990, %v1989, %v1988
    %v1992 = vrot.slane %v1971, 4
    %vm1993 = vcmask 1044484
    %v1994 = vsel %vm1993, %v1992, %v1991
    %v1995 = vrot.slane %v1972, 3
    %vm1996 = vcmask 1045509
    %v1997 = vsel %vm1996, %v1995, %v1994
    %v1998 = vrot.slane %v1973, 2
    %vm1999 = vcmask 1046534
    %v2000 = vsel %vm1999, %v1998, %v1997
    %v2001 = vrot.slane %v1974, 1
    %vm2002 = vcmask 1047559
    %v2003 = vsel %vm2002, %v2001, %v2000
    %v2004 = vrot.slane %v1976, 7
    %v2005 = vsel %vm1984, %v2004, %v1975
    %v2006 = vrot.slane %v1977, 6
    %v2007 = vsel %vm1987, %v2006, %v2005
    %v2008 = vrot.slane %v1978, 5
    %v2009 = vsel %vm1990, %v2008, %v2007
    %v2010 = vrot.slane %v1979, 4
    %v2011 = vsel %vm1993, %v2010, %v2009
    %v2012 = vrot.slane %v1980, 3
    %v2013 = vsel %vm1996, %v2012, %v2011
    %v2014 = vrot.slane %v1981, 2
    %v2015 = vsel %vm1999, %v2014, %v2013
    %v2016 = vrot.slane %v1982, 1
    %v2017 = vsel %vm2002, %v2016, %v2015
    %v2018 = vpack.c.b16 %v2017, %v2003
    %v2027 = vunpack.c.l.b16 %v1943
    %v2028 = vunpack.c.l.b16 %v1944
    %v2029 = vunpack.c.l.b16 %v1945
    %v2030 = vunpack.c.l.b16 %v1946
    %v2031 = vunpack.c.l.b16 %v1947
    %v2032 = vunpack.c.l.b16 %v1948
    %v2033 = vunpack.c.l.b16 %v1949
    %v2034 = vunpack.c.l.b16 %v1950
    %v2035 = vpack.c.b16 %v2028, %v2027
    %v2036 = vpack.c.b16 %v2030, %v2029
    %v2037 = vpack.c.b16 %v2032, %v2031
    %v2038 = vpack.c.b16 %v2034, %v2033
    %v2044 = vsel %vm374, %v2018, 0
    %2046 = vmatprep.subr.bf16.mxu0 0
    %2047 = vmatpush1.bf16.msra.mxu0 %v2035
    %2048 = vmatprep.subr.bf16.mxu0 0
    %2049 = vmatpush1.bf16.msra.mxu0 %v2036
    %2050 = vmatprep.subr.bf16.mxu0 0
    %2051 = vmatpush1.bf16.msra.mxu0 %v2037
    %2052 = vmatprep.subr.bf16.mxu0 0
    %2053 = vmatpush1.bf16.msra.mxu0 %v2038
    %2054 = vmatprep.subr.bf16.mxu0 0
    %2055 = vmatpush1.bf16.msra.mxu0 0
    %2056 = vmatprep.subr.bf16.mxu0 0
    %2057 = vmatpush1.bf16.msra.mxu0 0
    %2058 = vmatprep.subr.bf16.mxu0 0
    %2059 = vmatpush1.bf16.msra.mxu0 0
    %2060 = vmatprep.subr.bf16.mxu0 0
    %2061 = vmatpush1.bf16.msra.mxu0 0
    %2062 = vmatprep.subr.bf16.mxu0 0
    %2063 = vmatpush1.bf16.msra.mxu0 0
    %2064 = vmatprep.subr.bf16.mxu0 0
    %2065 = vmatpush1.bf16.msra.mxu0 0
    %2066 = vmatprep.subr.bf16.mxu0 0
    %2067 = vmatpush1.bf16.msra.mxu0 0
    %2068 = vmatprep.subr.bf16.mxu0 0
    %2069 = vmatpush1.bf16.msra.mxu0 0
    %2070 = vmatprep.subr.bf16.mxu0 0
    %2071 = vmatpush1.bf16.msra.mxu0 0
    %2072 = vmatprep.subr.bf16.mxu0 0
    %2073 = vmatpush1.bf16.msra.mxu0 0
    %2074 = vmatprep.subr.bf16.mxu0 0
    %2075 = vmatpush1.bf16.msra.mxu0 0
    %2076 = vmatprep.subr.bf16.mxu0 0
    %2077 = vmatpush1.bf16.msra.mxu0 0
    %2078 = vmatprep.mubr.bf16.mxu0 0
    %2079 = vmatmul.mubr.bf16.gmra.mrb[0].mxu0 %v2044
    %v2080 = vpop.f32.mrb[0].mxu0
    %v2081 = vadd.f32 0.0, %v2080
    %v2082 = vpop.f32.mrb[0].mxu0
    %v2083 = vpop.f32.mrb[0].mxu0
    %v2084 = vadd.f32 0.0, %v2083
    %v2085 = vpop.f32.mrb[0].mxu0
    %2086 = vdwg.mxu0
    %v2087 = vadd.f32 %v120, %v2081
    %v2088 = vadd.f32 %v121, %v2084
    %v2089 = vld [vmem:[%s15] sm:$0x1]
    %v2090 = vmul.f32 %v2087, %v2087
    %v2091 = vmul.f32 %v2088, %v2088
    %v2092 = vsel %vm125, %v2090, 0.0
    %2093 = vadd.xlane.f32.xlu0 %v2092
    %v2094 = vpop.xlane.xlu0 %2093
    %v2095 = vsel %vm125, %v2091, 0.0
    %2096 = vadd.xlane.f32.xlu0 %v2095
    %v2097 = vpop.xlane.xlu0 %2096
    %v2098 = vmul.f32 %v2094, %v132
    %v2099 = vmul.f32 %v2097, %v132
    %v2100 = vadd.f32 %v2098, 1e-06
    %v2101 = vadd.f32 %v2099, 1e-06
    %v2102 = vrsqrt.pop %v2100
    %v2103 = vrsqrt.pop %v2101
    %v2104 = vmul.f32 %v2087, %v2102
    %v2105 = vmul.f32 %v2088, %v2103
    %v2107 = vlaneseq
    %v2108 = vshrl.u32 %v2107, 7
    %v2109 = vsub.s32 0, %v2108
    %v2110 = vrot.slane %v2089, %v2109
    %v2112 = vmul.f32 %v2104, %v2110
    %v2113 = vmul.f32 %v2105, %v2110
    %v2114 = vpack.c.bf16 %v2113, %v2112
    %v2115 = vld [vmem:[%s16] sm:$0xff]
    %v2116 = vld [vmem:[%s16 + $0x8] sm:$0xff]
    %v2117 = vld [vmem:[%s16 + $0x10] sm:$0xff]
    %v2118 = vld [vmem:[%s16 + $0x18] sm:$0xff]
    %v2123 = vunpack.c.l.b16 %v2115
    %v2124 = vunpack.c.h.b16 %v2115
    %v2125 = vunpack.c.l.b16 %v2116
    %v2126 = vunpack.c.h.b16 %v2116
    %v2127 = vunpack.c.l.b16 %v2117
    %v2128 = vunpack.c.h.b16 %v2117
    %v2129 = vunpack.c.l.b16 %v2118
    %v2130 = vunpack.c.h.b16 %v2118
    %v2131 = vpack.c.b16 %v2125, %v2123
    %v2132 = vpack.c.b16 %v2126, %v2124
    %v2133 = vpack.c.b16 %v2129, %v2127
    %v2134 = vpack.c.b16 %v2130, %v2128
    %v2140 = vsel %vm125, %v2114, 0
    %2142 = vmatprep.subr.bf16.mxu0 %v2132
    %2143 = vmatpush1.bf16.msra.mxu0 %v2131
    %2144 = vmatprep.subr.bf16.mxu0 %v2134
    %2145 = vmatpush1.bf16.msra.mxu0 %v2133
    %2146 = vmatprep.subr.bf16.mxu0 0
    %2147 = vmatpush1.bf16.msra.mxu0 0
    %2148 = vmatprep.subr.bf16.mxu0 0
    %2149 = vmatpush1.bf16.msra.mxu0 0
    %2150 = vmatprep.subr.bf16.mxu0 0
    %2151 = vmatpush1.bf16.msra.mxu0 0
    %2152 = vmatprep.subr.bf16.mxu0 0
    %2153 = vmatpush1.bf16.msra.mxu0 0
    %2154 = vmatprep.subr.bf16.mxu0 0
    %2155 = vmatpush1.bf16.msra.mxu0 0
    %2156 = vmatprep.subr.bf16.mxu0 0
    %2157 = vmatpush1.bf16.msra.mxu0 0
    %2158 = vmatprep.subr.bf16.mxu0 0
    %2159 = vmatpush1.bf16.msra.mxu0 0
    %2160 = vmatprep.subr.bf16.mxu0 0
    %2161 = vmatpush1.bf16.msra.mxu0 0
    %2162 = vmatprep.subr.bf16.mxu0 0
    %2163 = vmatpush1.bf16.msra.mxu0 0
    %2164 = vmatprep.subr.bf16.mxu0 0
    %2165 = vmatpush1.bf16.msra.mxu0 0
    %2166 = vmatprep.subr.bf16.mxu0 0
    %2167 = vmatpush1.bf16.msra.mxu0 0
    %2168 = vmatprep.subr.bf16.mxu0 0
    %2169 = vmatpush1.bf16.msra.mxu0 0
    %2170 = vmatprep.subr.bf16.mxu0 0
    %2171 = vmatpush1.bf16.msra.mxu0 0
    %2172 = vmatprep.subr.bf16.mxu0 0
    %2173 = vmatpush1.bf16.msra.mxu0 0
    %2174 = vmatprep.mubr.bf16.mxu0 0
    %2175 = vmatmul.mubr.bf16.gmra.mrb[0].mxu0 %v2140
    %v2176 = vpop.f32.mrb[0].mxu0
    %v2177 = vadd.f32 0.0, %v2176
    %v2178 = vpop.f32.mrb[0].mxu0
    %v2179 = vadd.f32 0.0, %v2178
    %v2180 = vpop.f32.mrb[0].mxu0
    %v2181 = vadd.f32 0.0, %v2180
    %v2182 = vpop.f32.mrb[0].mxu0
    %v2183 = vadd.f32 0.0, %v2182
    %2184 = vdwg.mxu0
    %v2185 = vmul.f32 %v2177, %v97
    %v2186 = vmul.f32 %v2181, %v98
    %2189 = vrot.lane.b32.xlu0 %v99, 96
    %v2190 = vpop.permute.xlu0 %2189
    %2191 = vrot.lane.b32.xlu0 %v100, 96
    %v2192 = vpop.permute.xlu0 %2191
    %v2195 = vmul.f32 %v2177, %v2190
    %v2196 = vmul.f32 %v2181, %v2192
    %2199 = vrot.lane.b32.xlu0 %v2195, 32
    %v2200 = vpop.permute.xlu0 %2199
    %2201 = vrot.lane.b32.xlu0 %v2196, 32
    %v2202 = vpop.permute.xlu0 %2201
    %v2205 = vadd.f32 %v2185, %v2200
    %v2206 = vadd.f32 %v2186, %v2202
    %2209 = vrot.lane.b32.xlu0 %v97, 32
    %v2210 = vpop.permute.xlu0 %2209
    %2211 = vrot.lane.b32.xlu0 %v98, 32
    %v2212 = vpop.permute.xlu0 %2211
    %v2215 = vmul.f32 %v2177, %v2210
    %v2216 = vmul.f32 %v2181, %v2212
    %v2217 = vmul.f32 %v2179, %v99
    %v2218 = vmul.f32 %v2183, %v100
    %2221 = vrot.lane.b32.xlu0 %v2217, 32
    %v2222 = vpop.permute.xlu0 %2221
    %2223 = vrot.lane.b32.xlu0 %v2218, 32
    %v2224 = vpop.permute.xlu0 %2223
    %v2227 = vadd.f32 %v2215, %v2222
    %v2228 = vadd.f32 %v2216, %v2224
    %2231 = vrot.lane.b32.xlu0 %v2205, 120
    %v2232 = vpop.permute.xlu0 %2231
    %2233 = vrot.lane.b32.xlu0 %v2206, 120
    %v2234 = vpop.permute.xlu0 %2233
    %2237 = vrot.lane.b32.xlu0 %v2205, 112
    %v2238 = vpop.permute.xlu0 %2237
    %2239 = vrot.lane.b32.xlu0 %v2206, 112
    %v2240 = vpop.permute.xlu0 %2239
    %2243 = vrot.lane.b32.xlu0 %v2205, 104
    %v2244 = vpop.permute.xlu0 %2243
    %2245 = vrot.lane.b32.xlu0 %v2206, 104
    %v2246 = vpop.permute.xlu0 %2245
    %2251 = vrot.lane.b32.xlu0 %v2227, 120
    %v2252 = vpop.permute.xlu0 %2251
    %2253 = vrot.lane.b32.xlu0 %v2228, 120
    %v2254 = vpop.permute.xlu0 %2253
    %2257 = vrot.lane.b32.xlu0 %v2227, 112
    %v2258 = vpop.permute.xlu0 %2257
    %2259 = vrot.lane.b32.xlu0 %v2228, 112
    %v2260 = vpop.permute.xlu0 %2259
    %2263 = vrot.lane.b32.xlu0 %v2227, 104
    %v2264 = vpop.permute.xlu0 %2263
    %2265 = vrot.lane.b32.xlu0 %v2228, 104
    %v2266 = vpop.permute.xlu0 %2265
    %2271 = vrot.lane.b32.xlu0 %v2177, 120
    %v2272 = vpop.permute.xlu0 %2271
    %2273 = vrot.lane.b32.xlu0 %v2181, 120
    %v2274 = vpop.permute.xlu0 %2273
    %2277 = vrot.lane.b32.xlu0 %v2177, 112
    %v2278 = vpop.permute.xlu0 %2277
    %2279 = vrot.lane.b32.xlu0 %v2181, 112
    %v2280 = vpop.permute.xlu0 %2279
    %2283 = vrot.lane.b32.xlu0 %v2177, 104
    %v2284 = vpop.permute.xlu0 %2283
    %2285 = vrot.lane.b32.xlu0 %v2181, 104
    %v2286 = vpop.permute.xlu0 %2285
    %v2289 = vpack.c.bf16 %v2206, %v2205
    %v2290 = vpack.c.bf16 %v2234, %v2232
    %v2291 = vpack.c.bf16 %v2240, %v2238
    %v2292 = vpack.c.bf16 %v2246, %v2244
    %v2293 = vpack.c.bf16 %v2228, %v2227
    %v2294 = vpack.c.bf16 %v2254, %v2252
    %v2295 = vpack.c.bf16 %v2260, %v2258
    %v2296 = vpack.c.bf16 %v2266, %v2264
    %2298 = vrot.lane.b32.xlu0 %v2293, 96
    %v2299 = vpop.permute.xlu0 %2298
    %vm2300 = vcmask 64512
    %v2302 = vsel %vm2300, %v2289, 0
    %v2305 = vsel %vm2300, %v2299, 0
    %2307 = vmatprep.subr.bf16.mxu0 0
    %2308 = vmatpush1.bf16.xpose.msra.mxu0 %v2305
    %2309 = vmatprep.subr.bf16.mxu0 0
    %2310 = vmatpush1.bf16.xpose.msra.mxu0 0
    %2311 = vmatprep.subr.bf16.mxu0 0
    %2312 = vmatpush1.bf16.xpose.msra.mxu0 0
    %2313 = vmatprep.subr.bf16.mxu0 0
    %2314 = vmatpush1.bf16.xpose.msra.mxu0 0
    %2315 = vmatprep.subr.bf16.mxu0 0
    %2316 = vmatpush1.bf16.xpose.msra.mxu0 0
    %2317 = vmatprep.subr.bf16.mxu0 0
    %2318 = vmatpush1.bf16.xpose.msra.mxu0 0
    %2319 = vmatprep.subr.bf16.mxu0 0
    %2320 = vmatpush1.bf16.xpose.msra.mxu0 0
    %2321 = vmatprep.subr.bf16.mxu0 0
    %2322 = vmatpush1.bf16.xpose.msra.mxu0 0
    %2323 = vmatprep.subr.bf16.mxu0 0
    %2324 = vmatpush1.bf16.xpose.msra.mxu0 0
    %2325 = vmatprep.subr.bf16.mxu0 0
    %2326 = vmatpush1.bf16.xpose.msra.mxu0 0
    %2327 = vmatprep.subr.bf16.mxu0 0
    %2328 = vmatpush1.bf16.xpose.msra.mxu0 0
    %2329 = vmatprep.subr.bf16.mxu0 0
    %2330 = vmatpush1.bf16.xpose.msra.mxu0 0
    %2331 = vmatprep.subr.bf16.mxu0 0
    %2332 = vmatpush1.bf16.xpose.msra.mxu0 0
    %2333 = vmatprep.subr.bf16.mxu0 0
    %2334 = vmatpush1.bf16.xpose.msra.mxu0 0
    %2335 = vmatprep.subr.bf16.mxu0 0
    %2336 = vmatpush1.bf16.xpose.msra.mxu0 0
    %2337 = vmatprep.subr.bf16.mxu0 0
    %2338 = vmatpush1.bf16.xpose.msra.mxu0 0
    %2339 = vmatprep.mubr.bf16.mxu0 0
    %2340 = vmatmul.mubr.bf16.gmra.mrb[0].mxu0 %v2302
    %v2341 = vpop.f32.mrb[0].mxu0
    %v2342 = vadd.f32 0.0, %v2341
    %v2343 = vpop.f32.mrb[0].mxu0
    %v2344 = vpop.f32.mrb[0].mxu0
    %v2345 = vadd.f32 0.0, %v2344
    %v2346 = vpop.f32.mrb[0].mxu0
    %2347 = vdwg.mxu0
    %2349 = vrot.lane.b32.xlu0 %v2294, 96
    %v2350 = vpop.permute.xlu0 %2349
    %v2352 = vsel %vm2300, %v2290, 0
    %v2355 = vsel %vm2300, %v2350, 0
    %2357 = vmatprep.subr.bf16.mxu0 0
    %2358 = vmatpush1.bf16.xpose.msra.mxu0 %v2355
    %2359 = vmatprep.subr.bf16.mxu0 0
    %2360 = vmatpush1.bf16.xpose.msra.mxu0 0
    %2361 = vmatprep.subr.bf16.mxu0 0
    %2362 = vmatpush1.bf16.xpose.msra.mxu0 0
    %2363 = vmatprep.subr.bf16.mxu0 0
    %2364 = vmatpush1.bf16.xpose.msra.mxu0 0
    %2365 = vmatprep.subr.bf16.mxu0 0
    %2366 = vmatpush1.bf16.xpose.msra.mxu0 0
    %2367 = vmatprep.subr.bf16.mxu0 0
    %2368 = vmatpush1.bf16.xpose.msra.mxu0 0
    %2369 = vmatprep.subr.bf16.mxu0 0
    %2370 = vmatpush1.bf16.xpose.msra.mxu0 0
    %2371 = vmatprep.subr.bf16.mxu0 0
    %2372 = vmatpush1.bf16.xpose.msra.mxu0 0
    %2373 = vmatprep.subr.bf16.mxu0 0
    %2374 = vmatpush1.bf16.xpose.msra.mxu0 0
    %2375 = vmatprep.subr.bf16.mxu0 0
    %2376 = vmatpush1.bf16.xpose.msra.mxu0 0
    %2377 = vmatprep.subr.bf16.mxu0 0
    %2378 = vmatpush1.bf16.xpose.msra.mxu0 0
    %2379 = vmatprep.subr.bf16.mxu0 0
    %2380 = vmatpush1.bf16.xpose.msra.mxu0 0
    %2381 = vmatprep.subr.bf16.mxu0 0
    %2382 = vmatpush1.bf16.xpose.msra.mxu0 0
    %2383 = vmatprep.subr.bf16.mxu0 0
    %2384 = vmatpush1.bf16.xpose.msra.mxu0 0
    %2385 = vmatprep.subr.bf16.mxu0 0
    %2386 = vmatpush1.bf16.xpose.msra.mxu0 0
    %2387 = vmatprep.subr.bf16.mxu0 0
    %2388 = vmatpush1.bf16.xpose.msra.mxu0 0
    %2389 = vmatprep.mubr.bf16.mxu0 0
    %2390 = vmatmul.mubr.bf16.gmra.mrb[0].mxu0 %v2352
    %v2391 = vpop.f32.mrb[0].mxu0
    %v2392 = vadd.f32 0.0, %v2391
    %v2393 = vpop.f32.mrb[0].mxu0
    %v2394 = vpop.f32.mrb[0].mxu0
    %v2395 = vadd.f32 0.0, %v2394
    %v2396 = vpop.f32.mrb[0].mxu0
    %2397 = vdwg.mxu0
    %2399 = vrot.lane.b32.xlu0 %v2295, 96
    %v2400 = vpop.permute.xlu0 %2399
    %v2402 = vsel %vm2300, %v2291, 0
    %v2405 = vsel %vm2300, %v2400, 0
    %2407 = vmatprep.subr.bf16.mxu0 0
    %2408 = vmatpush1.bf16.xpose.msra.mxu0 %v2405
    %2409 = vmatprep.subr.bf16.mxu0 0
    %2410 = vmatpush1.bf16.xpose.msra.mxu0 0
    %2411 = vmatprep.subr.bf16.mxu0 0
    %2412 = vmatpush1.bf16.xpose.msra.mxu0 0
    %2413 = vmatprep.subr.bf16.mxu0 0
    %2414 = vmatpush1.bf16.xpose.msra.mxu0 0
    %2415 = vmatprep.subr.bf16.mxu0 0
    %2416 = vmatpush1.bf16.xpose.msra.mxu0 0
    %2417 = vmatprep.subr.bf16.mxu0 0
    %2418 = vmatpush1.bf16.xpose.msra.mxu0 0
    %2419 = vmatprep.subr.bf16.mxu0 0
    %2420 = vmatpush1.bf16.xpose.msra.mxu0 0
    %2421 = vmatprep.subr.bf16.mxu0 0
    %2422 = vmatpush1.bf16.xpose.msra.mxu0 0
    %2423 = vmatprep.subr.bf16.mxu0 0
    %2424 = vmatpush1.bf16.xpose.msra.mxu0 0
    %2425 = vmatprep.subr.bf16.mxu0 0
    %2426 = vmatpush1.bf16.xpose.msra.mxu0 0
    %2427 = vmatprep.subr.bf16.mxu0 0
    %2428 = vmatpush1.bf16.xpose.msra.mxu0 0
    %2429 = vmatprep.subr.bf16.mxu0 0
    %2430 = vmatpush1.bf16.xpose.msra.mxu0 0
    %2431 = vmatprep.subr.bf16.mxu0 0
    %2432 = vmatpush1.bf16.xpose.msra.mxu0 0
    %2433 = vmatprep.subr.bf16.mxu0 0
    %2434 = vmatpush1.bf16.xpose.msra.mxu0 0
    %2435 = vmatprep.subr.bf16.mxu0 0
    %2436 = vmatpush1.bf16.xpose.msra.mxu0 0
    %2437 = vmatprep.subr.bf16.mxu0 0
    %2438 = vmatpush1.bf16.xpose.msra.mxu0 0
    %2439 = vmatprep.mubr.bf16.mxu0 0
    %2440 = vmatmul.mubr.bf16.gmra.mrb[0].mxu0 %v2402
    %v2441 = vpop.f32.mrb[0].mxu0
    %v2442 = vadd.f32 0.0, %v2441
    %v2443 = vpop.f32.mrb[0].mxu0
    %v2444 = vpop.f32.mrb[0].mxu0
    %v2445 = vadd.f32 0.0, %v2444
    %v2446 = vpop.f32.mrb[0].mxu0
    %2447 = vdwg.mxu0
    %2449 = vrot.lane.b32.xlu0 %v2296, 96
    %v2450 = vpop.permute.xlu0 %2449
    %v2452 = vsel %vm2300, %v2292, 0
    %v2455 = vsel %vm2300, %v2450, 0
    %2457 = vmatprep.subr.bf16.mxu0 0
    %2458 = vmatpush1.bf16.xpose.msra.mxu0 %v2455
    %2459 = vmatprep.subr.bf16.mxu0 0
    %2460 = vmatpush1.bf16.xpose.msra.mxu0 0
    %2461 = vmatprep.subr.bf16.mxu0 0
    %2462 = vmatpush1.bf16.xpose.msra.mxu0 0
    %2463 = vmatprep.subr.bf16.mxu0 0
    %2464 = vmatpush1.bf16.xpose.msra.mxu0 0
    %2465 = vmatprep.subr.bf16.mxu0 0
    %2466 = vmatpush1.bf16.xpose.msra.mxu0 0
    %2467 = vmatprep.subr.bf16.mxu0 0
    %2468 = vmatpush1.bf16.xpose.msra.mxu0 0
    %2469 = vmatprep.subr.bf16.mxu0 0
    %2470 = vmatpush1.bf16.xpose.msra.mxu0 0
    %2471 = vmatprep.subr.bf16.mxu0 0
    %2472 = vmatpush1.bf16.xpose.msra.mxu0 0
    %2473 = vmatprep.subr.bf16.mxu0 0
    %2474 = vmatpush1.bf16.xpose.msra.mxu0 0
    %2475 = vmatprep.subr.bf16.mxu0 0
    %2476 = vmatpush1.bf16.xpose.msra.mxu0 0
    %2477 = vmatprep.subr.bf16.mxu0 0
    %2478 = vmatpush1.bf16.xpose.msra.mxu0 0
    %2479 = vmatprep.subr.bf16.mxu0 0
    %2480 = vmatpush1.bf16.xpose.msra.mxu0 0
    %2481 = vmatprep.subr.bf16.mxu0 0
    %2482 = vmatpush1.bf16.xpose.msra.mxu0 0
    %2483 = vmatprep.subr.bf16.mxu0 0
    %2484 = vmatpush1.bf16.xpose.msra.mxu0 0
    %2485 = vmatprep.subr.bf16.mxu0 0
    %2486 = vmatpush1.bf16.xpose.msra.mxu0 0
    %2487 = vmatprep.subr.bf16.mxu0 0
    %2488 = vmatpush1.bf16.xpose.msra.mxu0 0
    %2489 = vmatprep.mubr.bf16.mxu0 0
    %2490 = vmatmul.mubr.bf16.gmra.mrb[0].mxu0 %v2452
    %v2491 = vpop.f32.mrb[0].mxu0
    %v2492 = vadd.f32 0.0, %v2491
    %v2493 = vpop.f32.mrb[0].mxu0
    %v2494 = vpop.f32.mrb[0].mxu0
    %v2495 = vadd.f32 0.0, %v2494
    %v2496 = vpop.f32.mrb[0].mxu0
    %2497 = vdwg.mxu0
    %v2498 = vmul.f32 %v2342, 0.35355338
    %v2499 = vmul.f32 %v2345, 0.35355338
    %v2500 = vmul.f32 %v2392, 0.35355338
    %v2501 = vmul.f32 %v2395, 0.35355338
    %v2502 = vmul.f32 %v2442, 0.35355338
    %v2503 = vmul.f32 %v2445, 0.35355338
    %v2504 = vmul.f32 %v2492, 0.35355338
    %v2505 = vmul.f32 %v2495, 0.35355338
    %v2506 = vsel %vm118, 1, 0
    %v2507 = vsel %vm119, 1, 0
    %vm2508 = vcmp.eq.s32.totalorder %v2506, 1
    %vm2509 = vcmp.eq.s32.totalorder %v2507, 1
    %v2510 = vsel %vm2508, %v2498, -1e+30
    %v2511 = vsel %vm2509, %v2499, -1e+30
    %v2512 = vsel %vm2508, %v2500, -1e+30
    %v2513 = vsel %vm2509, %v2501, -1e+30
    %v2514 = vsel %vm2508, %v2502, -1e+30
    %v2515 = vsel %vm2509, %v2503, -1e+30
    %v2516 = vsel %vm2508, %v2504, -1e+30
    %v2517 = vsel %vm2509, %v2505, -1e+30
    %vm2518 = vcmask 130048
    %v2519 = vsel %vm2518, %v2510, -inf
    %2520 = vmax.xlane.f32.xlu0 %v2519
    %v2521 = vpop.xlane.xlu0 %2520
    %v2522 = vsel %vm2518, %v2511, -inf
    %2523 = vmax.xlane.f32.xlu0 %v2522
    %v2524 = vpop.xlane.xlu0 %2523
    %v2525 = vsel %vm2518, %v2512, -inf
    %2526 = vmax.xlane.f32.xlu0 %v2525
    %v2527 = vpop.xlane.xlu0 %2526
    %v2528 = vsel %vm2518, %v2513, -inf
    %2529 = vmax.xlane.f32.xlu0 %v2528
    %v2530 = vpop.xlane.xlu0 %2529
    %v2531 = vsel %vm2518, %v2514, -inf
    %2532 = vmax.xlane.f32.xlu0 %v2531
    %v2533 = vpop.xlane.xlu0 %2532
    %v2534 = vsel %vm2518, %v2515, -inf
    %2535 = vmax.xlane.f32.xlu0 %v2534
    %v2536 = vpop.xlane.xlu0 %2535
    %v2537 = vsel %vm2518, %v2516, -inf
    %2538 = vmax.xlane.f32.xlu0 %v2537
    %v2539 = vpop.xlane.xlu0 %2538
    %v2540 = vsel %vm2518, %v2517, -inf
    %2541 = vmax.xlane.f32.xlu0 %v2540
    %v2542 = vpop.xlane.xlu0 %2541
    %v2543 = vsub.f32 %v2510, %v2521
    %v2544 = vsub.f32 %v2511, %v2524
    %v2545 = vsub.f32 %v2512, %v2527
    %v2546 = vsub.f32 %v2513, %v2530
    %v2547 = vsub.f32 %v2514, %v2533
    %v2548 = vsub.f32 %v2515, %v2536
    %v2549 = vsub.f32 %v2516, %v2539
    %v2550 = vsub.f32 %v2517, %v2542
    %v2551 = vmul.f32 %v2543, 1.442695
    %v2552 = vpow.pop %v2551
    %v2553 = vmul.f32 %v2544, 1.442695
    %v2554 = vpow.pop %v2553
    %v2555 = vmul.f32 %v2545, 1.442695
    %v2556 = vpow.pop %v2555
    %v2557 = vmul.f32 %v2546, 1.442695
    %v2558 = vpow.pop %v2557
    %v2559 = vmul.f32 %v2547, 1.442695
    %v2560 = vpow.pop %v2559
    %v2561 = vmul.f32 %v2548, 1.442695
    %v2562 = vpow.pop %v2561
    %v2563 = vmul.f32 %v2549, 1.442695
    %v2564 = vpow.pop %v2563
    %v2565 = vmul.f32 %v2550, 1.442695
    %v2566 = vpow.pop %v2565
    %v2567 = vsel %vm2518, %v2552, 0.0
    %2568 = vadd.xlane.f32.xlu0 %v2567
    %v2569 = vpop.xlane.xlu0 %2568
    %v2570 = vsel %vm2518, %v2554, 0.0
    %2571 = vadd.xlane.f32.xlu0 %v2570
    %v2572 = vpop.xlane.xlu0 %2571
    %v2573 = vsel %vm2518, %v2556, 0.0
    %2574 = vadd.xlane.f32.xlu0 %v2573
    %v2575 = vpop.xlane.xlu0 %2574
    %v2576 = vsel %vm2518, %v2558, 0.0
    %2577 = vadd.xlane.f32.xlu0 %v2576
    %v2578 = vpop.xlane.xlu0 %2577
    %v2579 = vsel %vm2518, %v2560, 0.0
    %2580 = vadd.xlane.f32.xlu0 %v2579
    %v2581 = vpop.xlane.xlu0 %2580
    %v2582 = vsel %vm2518, %v2562, 0.0
    %2583 = vadd.xlane.f32.xlu0 %v2582
    %v2584 = vpop.xlane.xlu0 %2583
    %v2585 = vsel %vm2518, %v2564, 0.0
    %2586 = vadd.xlane.f32.xlu0 %v2585
    %v2587 = vpop.xlane.xlu0 %2586
    %v2588 = vsel %vm2518, %v2566, 0.0
    %2589 = vadd.xlane.f32.xlu0 %v2588
    %v2590 = vpop.xlane.xlu0 %2589
    %v2591 = vrcp.pop %v2569
    %v2592 = vrcp.pop %v2572
    %v2593 = vrcp.pop %v2575
    %v2594 = vrcp.pop %v2578
    %v2595 = vrcp.pop %v2581
    %v2596 = vrcp.pop %v2584
    %v2597 = vrcp.pop %v2587
    %v2598 = vrcp.pop %v2590
    %v2599 = vmul.f32 %v2552, %v2591
    %v2600 = vmul.f32 %v2554, %v2592
    %v2601 = vmul.f32 %v2556, %v2593
    %v2602 = vmul.f32 %v2558, %v2594
    %v2603 = vmul.f32 %v2560, %v2595
    %v2604 = vmul.f32 %v2562, %v2596
    %v2605 = vmul.f32 %v2564, %v2597
    %v2606 = vmul.f32 %v2566, %v2598
    %v2607 = vpack.c.bf16 %v2600, %v2599
    %v2608 = vpack.c.bf16 %v2602, %v2601
    %v2609 = vpack.c.bf16 %v2604, %v2603
    %v2610 = vpack.c.bf16 %v2606, %v2605
    %v2611 = vpack.c.bf16 %v2181, %v2177
    %v2612 = vpack.c.bf16 %v2274, %v2272
    %v2613 = vpack.c.bf16 %v2280, %v2278
    %v2614 = vpack.c.bf16 %v2286, %v2284
    %2616 = vrot.lane.b32.xlu0 %v2611, 64
    %v2617 = vpop.permute.xlu0 %2616
    %v2620 = vsel %vm2518, %v2607, 0
    %2622 = vmatprep.subr.bf16.mxu0 0
    %2623 = vmatpush1.bf16.msra.mxu0 %v2617
    %2624 = vmatprep.subr.bf16.mxu0 0
    %2625 = vmatpush1.bf16.msra.mxu0 0
    %2626 = vmatprep.subr.bf16.mxu0 0
    %2627 = vmatpush1.bf16.msra.mxu0 0
    %2628 = vmatprep.subr.bf16.mxu0 0
    %2629 = vmatpush1.bf16.msra.mxu0 0
    %2630 = vmatprep.subr.bf16.mxu0 0
    %2631 = vmatpush1.bf16.msra.mxu0 0
    %2632 = vmatprep.subr.bf16.mxu0 0
    %2633 = vmatpush1.bf16.msra.mxu0 0
    %2634 = vmatprep.subr.bf16.mxu0 0
    %2635 = vmatpush1.bf16.msra.mxu0 0
    %2636 = vmatprep.subr.bf16.mxu0 0
    %2637 = vmatpush1.bf16.msra.mxu0 0
    %2638 = vmatprep.subr.bf16.mxu0 0
    %2639 = vmatpush1.bf16.msra.mxu0 0
    %2640 = vmatprep.subr.bf16.mxu0 0
    %2641 = vmatpush1.bf16.msra.mxu0 0
    %2642 = vmatprep.subr.bf16.mxu0 0
    %2643 = vmatpush1.bf16.msra.mxu0 0
    %2644 = vmatprep.subr.bf16.mxu0 0
    %2645 = vmatpush1.bf16.msra.mxu0 0
    %2646 = vmatprep.subr.bf16.mxu0 0
    %2647 = vmatpush1.bf16.msra.mxu0 0
    %2648 = vmatprep.subr.bf16.mxu0 0
    %2649 = vmatpush1.bf16.msra.mxu0 0
    %2650 = vmatprep.subr.bf16.mxu0 0
    %2651 = vmatpush1.bf16.msra.mxu0 0
    %2652 = vmatprep.subr.bf16.mxu0 0
    %2653 = vmatpush1.bf16.msra.mxu0 0
    %2654 = vmatprep.mubr.bf16.mxu0 0
    %2655 = vmatmul.mubr.bf16.gmra.mrb[0].mxu0 %v2620
    %v2656 = vpop.f32.mrb[0].mxu0
    %v2657 = vadd.f32 0.0, %v2656
    %v2658 = vpop.f32.mrb[0].mxu0
    %v2659 = vpop.f32.mrb[0].mxu0
    %v2660 = vadd.f32 0.0, %v2659
    %v2661 = vpop.f32.mrb[0].mxu0
    %2662 = vdwg.mxu0
    %2664 = vrot.lane.b32.xlu0 %v2612, 64
    %v2665 = vpop.permute.xlu0 %2664
    %v2668 = vsel %vm2518, %v2608, 0
    %2670 = vmatprep.subr.bf16.mxu0 0
    %2671 = vmatpush1.bf16.msra.mxu0 %v2665
    %2672 = vmatprep.subr.bf16.mxu0 0
    %2673 = vmatpush1.bf16.msra.mxu0 0
    %2674 = vmatprep.subr.bf16.mxu0 0
    %2675 = vmatpush1.bf16.msra.mxu0 0
    %2676 = vmatprep.subr.bf16.mxu0 0
    %2677 = vmatpush1.bf16.msra.mxu0 0
    %2678 = vmatprep.subr.bf16.mxu0 0
    %2679 = vmatpush1.bf16.msra.mxu0 0
    %2680 = vmatprep.subr.bf16.mxu0 0
    %2681 = vmatpush1.bf16.msra.mxu0 0
    %2682 = vmatprep.subr.bf16.mxu0 0
    %2683 = vmatpush1.bf16.msra.mxu0 0
    %2684 = vmatprep.subr.bf16.mxu0 0
    %2685 = vmatpush1.bf16.msra.mxu0 0
    %2686 = vmatprep.subr.bf16.mxu0 0
    %2687 = vmatpush1.bf16.msra.mxu0 0
    %2688 = vmatprep.subr.bf16.mxu0 0
    %2689 = vmatpush1.bf16.msra.mxu0 0
    %2690 = vmatprep.subr.bf16.mxu0 0
    %2691 = vmatpush1.bf16.msra.mxu0 0
    %2692 = vmatprep.subr.bf16.mxu0 0
    %2693 = vmatpush1.bf16.msra.mxu0 0
    %2694 = vmatprep.subr.bf16.mxu0 0
    %2695 = vmatpush1.bf16.msra.mxu0 0
    %2696 = vmatprep.subr.bf16.mxu0 0
    %2697 = vmatpush1.bf16.msra.mxu0 0
    %2698 = vmatprep.subr.bf16.mxu0 0
    %2699 = vmatpush1.bf16.msra.mxu0 0
    %2700 = vmatprep.subr.bf16.mxu0 0
    %2701 = vmatpush1.bf16.msra.mxu0 0
    %2702 = vmatprep.mubr.bf16.mxu0 0
    %2703 = vmatmul.mubr.bf16.gmra.mrb[0].mxu0 %v2668
    %v2704 = vpop.f32.mrb[0].mxu0
    %v2705 = vadd.f32 0.0, %v2704
    %v2706 = vpop.f32.mrb[0].mxu0
    %v2707 = vpop.f32.mrb[0].mxu0
    %v2708 = vadd.f32 0.0, %v2707
    %v2709 = vpop.f32.mrb[0].mxu0
    %2710 = vdwg.mxu0
    %2712 = vrot.lane.b32.xlu0 %v2613, 64
    %v2713 = vpop.permute.xlu0 %2712
    %v2716 = vsel %vm2518, %v2609, 0
    %2718 = vmatprep.subr.bf16.mxu0 0
    %2719 = vmatpush1.bf16.msra.mxu0 %v2713
    %2720 = vmatprep.subr.bf16.mxu0 0
    %2721 = vmatpush1.bf16.msra.mxu0 0
    %2722 = vmatprep.subr.bf16.mxu0 0
    %2723 = vmatpush1.bf16.msra.mxu0 0
    %2724 = vmatprep.subr.bf16.mxu0 0
    %2725 = vmatpush1.bf16.msra.mxu0 0
    %2726 = vmatprep.subr.bf16.mxu0 0
    %2727 = vmatpush1.bf16.msra.mxu0 0
    %2728 = vmatprep.subr.bf16.mxu0 0
    %2729 = vmatpush1.bf16.msra.mxu0 0
    %2730 = vmatprep.subr.bf16.mxu0 0
    %2731 = vmatpush1.bf16.msra.mxu0 0
    %2732 = vmatprep.subr.bf16.mxu0 0
    %2733 = vmatpush1.bf16.msra.mxu0 0
    %2734 = vmatprep.subr.bf16.mxu0 0
    %2735 = vmatpush1.bf16.msra.mxu0 0
    %2736 = vmatprep.subr.bf16.mxu0 0
    %2737 = vmatpush1.bf16.msra.mxu0 0
    %2738 = vmatprep.subr.bf16.mxu0 0
    %2739 = vmatpush1.bf16.msra.mxu0 0
    %2740 = vmatprep.subr.bf16.mxu0 0
    %2741 = vmatpush1.bf16.msra.mxu0 0
    %2742 = vmatprep.subr.bf16.mxu0 0
    %2743 = vmatpush1.bf16.msra.mxu0 0
    %2744 = vmatprep.subr.bf16.mxu0 0
    %2745 = vmatpush1.bf16.msra.mxu0 0
    %2746 = vmatprep.subr.bf16.mxu0 0
    %2747 = vmatpush1.bf16.msra.mxu0 0
    %2748 = vmatprep.subr.bf16.mxu0 0
    %2749 = vmatpush1.bf16.msra.mxu0 0
    %2750 = vmatprep.mubr.bf16.mxu0 0
    %2751 = vmatmul.mubr.bf16.gmra.mrb[0].mxu0 %v2716
    %v2752 = vpop.f32.mrb[0].mxu0
    %v2753 = vadd.f32 0.0, %v2752
    %v2754 = vpop.f32.mrb[0].mxu0
    %v2755 = vpop.f32.mrb[0].mxu0
    %v2756 = vadd.f32 0.0, %v2755
    %v2757 = vpop.f32.mrb[0].mxu0
    %2758 = vdwg.mxu0
    %2760 = vrot.lane.b32.xlu0 %v2614, 64
    %v2761 = vpop.permute.xlu0 %2760
    %v2764 = vsel %vm2518, %v2610, 0
    %2766 = vmatprep.subr.bf16.mxu0 0
    %2767 = vmatpush1.bf16.msra.mxu0 %v2761
    %2768 = vmatprep.subr.bf16.mxu0 0
    %2769 = vmatpush1.bf16.msra.mxu0 0
    %2770 = vmatprep.subr.bf16.mxu0 0
    %2771 = vmatpush1.bf16.msra.mxu0 0
    %2772 = vmatprep.subr.bf16.mxu0 0
    %2773 = vmatpush1.bf16.msra.mxu0 0
    %2774 = vmatprep.subr.bf16.mxu0 0
    %2775 = vmatpush1.bf16.msra.mxu0 0
    %2776 = vmatprep.subr.bf16.mxu0 0
    %2777 = vmatpush1.bf16.msra.mxu0 0
    %2778 = vmatprep.subr.bf16.mxu0 0
    %2779 = vmatpush1.bf16.msra.mxu0 0
    %2780 = vmatprep.subr.bf16.mxu0 0
    %2781 = vmatpush1.bf16.msra.mxu0 0
    %2782 = vmatprep.subr.bf16.mxu0 0
    %2783 = vmatpush1.bf16.msra.mxu0 0
    %2784 = vmatprep.subr.bf16.mxu0 0
    %2785 = vmatpush1.bf16.msra.mxu0 0
    %2786 = vmatprep.subr.bf16.mxu0 0
    %2787 = vmatpush1.bf16.msra.mxu0 0
    %2788 = vmatprep.subr.bf16.mxu0 0
    %2789 = vmatpush1.bf16.msra.mxu0 0
    %2790 = vmatprep.subr.bf16.mxu0 0
    %2791 = vmatpush1.bf16.msra.mxu0 0
    %2792 = vmatprep.subr.bf16.mxu0 0
    %2793 = vmatpush1.bf16.msra.mxu0 0
    %2794 = vmatprep.subr.bf16.mxu0 0
    %2795 = vmatpush1.bf16.msra.mxu0 0
    %2796 = vmatprep.subr.bf16.mxu0 0
    %2797 = vmatpush1.bf16.msra.mxu0 0
    %2798 = vmatprep.mubr.bf16.mxu0 0
    %2799 = vmatmul.mubr.bf16.gmra.mrb[0].mxu0 %v2764
    %v2800 = vpop.f32.mrb[0].mxu0
    %v2801 = vadd.f32 0.0, %v2800
    %v2802 = vpop.f32.mrb[0].mxu0
    %v2803 = vpop.f32.mrb[0].mxu0
    %v2804 = vadd.f32 0.0, %v2803
    %v2805 = vpop.f32.mrb[0].mxu0
    %2806 = vdwg.mxu0
    %2809 = vrot.lane.b32.xlu0 %v2705, 8
    %v2810 = vpop.permute.xlu0 %2809
    %2811 = vrot.lane.b32.xlu0 %v2708, 8
    %v2812 = vpop.permute.xlu0 %2811
    %2817 = vrot.lane.b32.xlu0 %v2753, 16
    %v2818 = vpop.permute.xlu0 %2817
    %2819 = vrot.lane.b32.xlu0 %v2756, 16
    %v2820 = vpop.permute.xlu0 %2819
    %2825 = vrot.lane.b32.xlu0 %v2801, 24
    %v2826 = vpop.permute.xlu0 %2825
    %2827 = vrot.lane.b32.xlu0 %v2804, 24
    %v2828 = vpop.permute.xlu0 %2827
    %v2831 = vsel %vm2300, %v2657, %v2810
    %v2832 = vsel %vm2300, %v2660, %v2812
    %v2833 = vsel %vm2518, %v2831, %v2818
    %v2834 = vsel %vm2518, %v2832, %v2820
    %vm2835 = vcmask 195584
    %v2836 = vsel %vm2835, %v2833, %v2826
    %v2837 = vsel %vm2835, %v2834, %v2828
    %v2838 = vpack.c.bf16 %v2837, %v2836
    %v2839 = vld [vmem:[%s17] sm:$0xf]
    %v2840 = vld [vmem:[%s17 + $0x4] sm:$0xf]
    %v2841 = vld [vmem:[%s17 + $0x8] sm:$0xf]
    %v2842 = vld [vmem:[%s17 + $0xc] sm:$0xf]
    %v2847 = vunpack.c.l.b16 %v2839
    %v2848 = vunpack.c.l.b16 %v2840
    %v2849 = vunpack.c.l.b16 %v2841
    %v2850 = vunpack.c.l.b16 %v2842
    %v2851 = vpack.c.b16 %v2848, %v2847
    %v2852 = vpack.c.b16 %v2850, %v2849
    %v2856 = vsel %vm125, %v2838, 0
    %2858 = vmatprep.subr.bf16.mxu0 0
    %2859 = vmatpush1.bf16.msra.mxu0 %v2851
    %2860 = vmatprep.subr.bf16.mxu0 0
    %2861 = vmatpush1.bf16.msra.mxu0 %v2852
    %2862 = vmatprep.subr.bf16.mxu0 0
    %2863 = vmatpush1.bf16.msra.mxu0 0
    %2864 = vmatprep.subr.bf16.mxu0 0
    %2865 = vmatpush1.bf16.msra.mxu0 0
    %2866 = vmatprep.subr.bf16.mxu0 0
    %2867 = vmatpush1.bf16.msra.mxu0 0
    %2868 = vmatprep.subr.bf16.mxu0 0
    %2869 = vmatpush1.bf16.msra.mxu0 0
    %2870 = vmatprep.subr.bf16.mxu0 0
    %2871 = vmatpush1.bf16.msra.mxu0 0
    %2872 = vmatprep.subr.bf16.mxu0 0
    %2873 = vmatpush1.bf16.msra.mxu0 0
    %2874 = vmatprep.subr.bf16.mxu0 0
    %2875 = vmatpush1.bf16.msra.mxu0 0
    %2876 = vmatprep.subr.bf16.mxu0 0
    %2877 = vmatpush1.bf16.msra.mxu0 0
    %2878 = vmatprep.subr.bf16.mxu0 0
    %2879 = vmatpush1.bf16.msra.mxu0 0
    %2880 = vmatprep.subr.bf16.mxu0 0
    %2881 = vmatpush1.bf16.msra.mxu0 0
    %2882 = vmatprep.subr.bf16.mxu0 0
    %2883 = vmatpush1.bf16.msra.mxu0 0
    %2884 = vmatprep.subr.bf16.mxu0 0
    %2885 = vmatpush1.bf16.msra.mxu0 0
    %2886 = vmatprep.subr.bf16.mxu0 0
    %2887 = vmatpush1.bf16.msra.mxu0 0
    %2888 = vmatprep.subr.bf16.mxu0 0
    %2889 = vmatpush1.bf16.msra.mxu0 0
    %2890 = vmatprep.mubr.bf16.mxu0 0
    %2891 = vmatmul.mubr.bf16.gmra.mrb[0].mxu0 %v2856
    %v2892 = vpop.f32.mrb[0].mxu0
    %v2893 = vadd.f32 0.0, %v2892
    %v2894 = vpop.f32.mrb[0].mxu0
    %v2895 = vpop.f32.mrb[0].mxu0
    %v2896 = vadd.f32 0.0, %v2895
    %v2897 = vpop.f32.mrb[0].mxu0
    %2898 = vdwg.mxu0
    %v2899 = vadd.f32 %v2087, %v2893
    %v2900 = vadd.f32 %v2088, %v2896
    %v2901 = vld [vmem:[%s18] sm:$0x1]
    %v2902 = vmul.f32 %v2899, %v2899
    %v2903 = vmul.f32 %v2900, %v2900
    %v2904 = vsel %vm125, %v2902, 0.0
    %2905 = vadd.xlane.f32.xlu0 %v2904
    %v2906 = vpop.xlane.xlu0 %2905
    %v2907 = vsel %vm125, %v2903, 0.0
    %2908 = vadd.xlane.f32.xlu0 %v2907
    %v2909 = vpop.xlane.xlu0 %2908
    %v2910 = vmul.f32 %v2906, %v132
    %v2911 = vmul.f32 %v2909, %v132
    %v2912 = vadd.f32 %v2910, 1e-06
    %v2913 = vadd.f32 %v2911, 1e-06
    %v2914 = vrsqrt.pop %v2912
    %v2915 = vrsqrt.pop %v2913
    %v2916 = vmul.f32 %v2899, %v2914
    %v2917 = vmul.f32 %v2900, %v2915
    %v2919 = vlaneseq
    %v2920 = vshrl.u32 %v2919, 7
    %v2921 = vsub.s32 0, %v2920
    %v2922 = vrot.slane %v2901, %v2921
    %v2924 = vmul.f32 %v2916, %v2922
    %v2925 = vmul.f32 %v2917, %v2922
    %v2926 = vpack.c.bf16 %v2925, %v2924
    %v2927 = vld [vmem:[%s19] sm:$0xf]
    %v2928 = vld [vmem:[%s19 + $0x4] sm:$0xf]
    %v2929 = vld [vmem:[%s19 + $0x8] sm:$0xf]
    %v2930 = vld [vmem:[%s19 + $0xc] sm:$0xf]
    %v2935 = vunpack.c.l.b16 %v2927
    %v2936 = vunpack.c.l.b16 %v2928
    %v2937 = vunpack.c.l.b16 %v2929
    %v2938 = vunpack.c.l.b16 %v2930
    %v2939 = vpack.c.b16 %v2936, %v2935
    %v2940 = vpack.c.b16 %v2938, %v2937
    %v2944 = vsel %vm125, %v2926, 0
    %2946 = vmatprep.subr.bf16.mxu0 0
    %2947 = vmatpush1.bf16.msra.mxu0 %v2939
    %2948 = vmatprep.subr.bf16.mxu0 0
    %2949 = vmatpush1.bf16.msra.mxu0 %v2940
    %2950 = vmatprep.subr.bf16.mxu0 0
    %2951 = vmatpush1.bf16.msra.mxu0 0
    %2952 = vmatprep.subr.bf16.mxu0 0
    %2953 = vmatpush1.bf16.msra.mxu0 0
    %2954 = vmatprep.subr.bf16.mxu0 0
    %2955 = vmatpush1.bf16.msra.mxu0 0
    %2956 = vmatprep.subr.bf16.mxu0 0
    %2957 = vmatpush1.bf16.msra.mxu0 0
    %2958 = vmatprep.subr.bf16.mxu0 0
    %2959 = vmatpush1.bf16.msra.mxu0 0
    %2960 = vmatprep.subr.bf16.mxu0 0
    %2961 = vmatpush1.bf16.msra.mxu0 0
    %2962 = vmatprep.subr.bf16.mxu0 0
    %2963 = vmatpush1.bf16.msra.mxu0 0
    %2964 = vmatprep.subr.bf16.mxu0 0
    %2965 = vmatpush1.bf16.msra.mxu0 0
    %2966 = vmatprep.subr.bf16.mxu0 0
    %2967 = vmatpush1.bf16.msra.mxu0 0
    %2968 = vmatprep.subr.bf16.mxu0 0
    %2969 = vmatpush1.bf16.msra.mxu0 0
    %2970 = vmatprep.subr.bf16.mxu0 0
    %2971 = vmatpush1.bf16.msra.mxu0 0
    %2972 = vmatprep.subr.bf16.mxu0 0
    %2973 = vmatpush1.bf16.msra.mxu0 0
    %2974 = vmatprep.subr.bf16.mxu0 0
    %2975 = vmatpush1.bf16.msra.mxu0 0
    %2976 = vmatprep.subr.bf16.mxu0 0
    %2977 = vmatpush1.bf16.msra.mxu0 0
    %2978 = vmatprep.mubr.bf16.mxu0 0
    %2979 = vmatmul.mubr.bf16.gmra.mrb[0].mxu0 %v2944
    %v2980 = vpop.f32.mrb[0].mxu0
    %v2981 = vadd.f32 0.0, %v2980
    %v2982 = vpop.f32.mrb[0].mxu0
    %v2983 = vpop.f32.mrb[0].mxu0
    %v2984 = vadd.f32 0.0, %v2983
    %v2985 = vpop.f32.mrb[0].mxu0
    %2986 = vdwg.mxu0
    %v2987 = vxor.u32 %v2981, 2147483648
    %v2988 = vxor.u32 %v2984, 2147483648
    %v2989 = vmul.f32 %v2987, 1.442695
    %v2990 = vpow.pop %v2989
    %v2991 = vmul.f32 %v2988, 1.442695
    %v2992 = vpow.pop %v2991
    %v2993 = vadd.f32 %v2990, 1.0
    %v2994 = vadd.f32 %v2992, 1.0
    %v2995 = vrcp.pop %v2993
    %v2996 = vmul.f32 1.0, %v2995
    %v2997 = vrcp.pop %v2994
    %v2998 = vmul.f32 1.0, %v2997
    %v2999 = vmul.f32 %v2981, %v2996
    %v3000 = vmul.f32 %v2984, %v2998
    %3003 = vrot.lane.b32.xlu0 %v2981, 64
    %v3004 = vpop.permute.xlu0 %3003
    %3005 = vrot.lane.b32.xlu0 %v2984, 64
    %v3006 = vpop.permute.xlu0 %3005
    %v3009 = vmul.f32 %v2999, %v3004
    %v3010 = vmul.f32 %v3000, %v3006
    %v3011 = vpack.c.bf16 %v3010, %v3009
    %v3012 = vld [vmem:[%s20] sm:$0xf]
    %v3013 = vld [vmem:[%s20 + $0x4] sm:$0xf]
    %v3014 = vld [vmem:[%s20 + $0x8] sm:$0xf]
    %v3015 = vld [vmem:[%s20 + $0xc] sm:$0xf]
    %v3016 = vld [vmem:[%s20 + $0x10] sm:$0xf]
    %v3017 = vld [vmem:[%s20 + $0x14] sm:$0xf]
    %v3018 = vld [vmem:[%s20 + $0x18] sm:$0xf]
    %v3019 = vld [vmem:[%s20 + $0x1c] sm:$0xf]
    %v3028 = vunpack.c.l.b16 %v3012
    %v3029 = vunpack.c.l.b16 %v3013
    %v3030 = vunpack.c.l.b16 %v3014
    %v3031 = vunpack.c.l.b16 %v3015
    %v3032 = vunpack.c.l.b16 %v3016
    %v3033 = vunpack.c.l.b16 %v3017
    %v3034 = vunpack.c.l.b16 %v3018
    %v3035 = vunpack.c.l.b16 %v3019
    %v3036 = vpack.c.b16 %v3029, %v3028
    %v3037 = vpack.c.b16 %v3031, %v3030
    %v3038 = vpack.c.b16 %v3033, %v3032
    %v3039 = vpack.c.b16 %v3035, %v3034
    %v3045 = vsel %vm374, %v3011, 0
    %3047 = vmatprep.subr.bf16.mxu0 0
    %3048 = vmatpush1.bf16.msra.mxu0 %v3036
    %3049 = vmatprep.subr.bf16.mxu0 0
    %3050 = vmatpush1.bf16.msra.mxu0 %v3037
    %3051 = vmatprep.subr.bf16.mxu0 0
    %3052 = vmatpush1.bf16.msra.mxu0 %v3038
    %3053 = vmatprep.subr.bf16.mxu0 0
    %3054 = vmatpush1.bf16.msra.mxu0 %v3039
    %3055 = vmatprep.subr.bf16.mxu0 0
    %3056 = vmatpush1.bf16.msra.mxu0 0
    %3057 = vmatprep.subr.bf16.mxu0 0
    %3058 = vmatpush1.bf16.msra.mxu0 0
    %3059 = vmatprep.subr.bf16.mxu0 0
    %3060 = vmatpush1.bf16.msra.mxu0 0
    %3061 = vmatprep.subr.bf16.mxu0 0
    %3062 = vmatpush1.bf16.msra.mxu0 0
    %3063 = vmatprep.subr.bf16.mxu0 0
    %3064 = vmatpush1.bf16.msra.mxu0 0
    %3065 = vmatprep.subr.bf16.mxu0 0
    %3066 = vmatpush1.bf16.msra.mxu0 0
    %3067 = vmatprep.subr.bf16.mxu0 0
    %3068 = vmatpush1.bf16.msra.mxu0 0
    %3069 = vmatprep.subr.bf16.mxu0 0
    %3070 = vmatpush1.bf16.msra.mxu0 0
    %3071 = vmatprep.subr.bf16.mxu0 0
    %3072 = vmatpush1.bf16.msra.mxu0 0
    %3073 = vmatprep.subr.bf16.mxu0 0
    %3074 = vmatpush1.bf16.msra.mxu0 0
    %3075 = vmatprep.subr.bf16.mxu0 0
    %3076 = vmatpush1.bf16.msra.mxu0 0
    %3077 = vmatprep.subr.bf16.mxu0 0
    %3078 = vmatpush1.bf16.msra.mxu0 0
    %3079 = vmatprep.mubr.bf16.mxu0 0
    %3080 = vmatmul.mubr.bf16.gmra.mrb[0].mxu0 %v3045
    %v3081 = vpop.f32.mrb[0].mxu0
    %v3082 = vadd.f32 0.0, %v3081
    %v3083 = vpop.f32.mrb[0].mxu0
    %v3084 = vpop.f32.mrb[0].mxu0
    %v3085 = vadd.f32 0.0, %v3084
    %v3086 = vpop.f32.mrb[0].mxu0
    %3087 = vdwg.mxu0
    %v3088 = vadd.f32 %v2899, %v3082
    %v3089 = vadd.f32 %v2900, %v3085
    %3090 = vst.msk [vmem:[#allocation2] sm:$0xff] %vm125, %v3088
    %3091 = vst.msk [vmem:[#allocation2 + $0x8] sm:$0xff] %vm125, %v3089
    %s3092 = sld [smem:[#allocation3]]
    %s3093 = scalar_lea.vmem [#allocation2], %s3092
    %v3094 = vld [vmem:[%s3093] sm:$0x1]
    %s3095 = sld [smem:[#allocation3 + $0x1]]
    %s3096 = scalar_lea.vmem [#allocation2], %s3095
    %v3097 = vld [vmem:[%s3096] sm:$0x1]
    %v3099 = vrot.slane %v3097, 7
    %v3101 = vsel %vm219, %v3094, %v3099
    %v3102 = vld [vmem:[%s21] sm:$0x1]
    %v3103 = vmul.f32 %v3101, %v3101
    %vm3104 = vcmask 254976
    %v3105 = vsel %vm3104, %v3103, 0.0
    %3106 = vadd.xlane.f32.xlu0 %v3105
    %v3107 = vpop.xlane.xlu0 %3106
    %v3108 = vmul.f32 %v3107, %v132
    %v3109 = vadd.f32 %v3108, 1e-06
    %v3110 = vrsqrt.pop %v3109
    %v3111 = vmul.f32 %v3101, %v3110
    %v3113 = vlaneseq
    %v3114 = vshrl.u32 %v3113, 7
    %v3115 = vsub.s32 0, %v3114
    %v3116 = vrot.slane %v3102, %v3115
    %v3118 = vmul.f32 %v3111, %v3116
    %v3119 = vpack.c.bf16 %v3118, %v3118
    %v3120 = vld [vmem:[%s22] sm:$0xf]
    %v3121 = vld [vmem:[%s22 + $0x4] sm:$0xf]
    %v3122 = vld [vmem:[%s22 + $0x8] sm:$0xf]
    %v3123 = vld [vmem:[%s22 + $0xc] sm:$0xf]
    %v3128 = vunpack.c.l.b16 %v3120
    %v3129 = vunpack.c.l.b16 %v3121
    %v3130 = vunpack.c.l.b16 %v3122
    %v3131 = vunpack.c.l.b16 %v3123
    %v3132 = vpack.c.b16 %v3129, %v3128
    %v3133 = vpack.c.b16 %v3131, %v3130
    %v3137 = vsel %vm125, %v3119, 0
    %3139 = vmatprep.subr.bf16.mxu0 0
    %3140 = vmatpush1.bf16.msra.mxu0 %v3132
    %3141 = vmatprep.subr.bf16.mxu0 0
    %3142 = vmatpush1.bf16.msra.mxu0 %v3133
    %3143 = vmatprep.subr.bf16.mxu0 0
    %3144 = vmatpush1.bf16.msra.mxu0 0
    %3145 = vmatprep.subr.bf16.mxu0 0
    %3146 = vmatpush1.bf16.msra.mxu0 0
    %3147 = vmatprep.subr.bf16.mxu0 0
    %3148 = vmatpush1.bf16.msra.mxu0 0
    %3149 = vmatprep.subr.bf16.mxu0 0
    %3150 = vmatpush1.bf16.msra.mxu0 0
    %3151 = vmatprep.subr.bf16.mxu0 0
    %3152 = vmatpush1.bf16.msra.mxu0 0
    %3153 = vmatprep.subr.bf16.mxu0 0
    %3154 = vmatpush1.bf16.msra.mxu0 0
    %3155 = vmatprep.subr.bf16.mxu0 0
    %3156 = vmatpush1.bf16.msra.mxu0 0
    %3157 = vmatprep.subr.bf16.mxu0 0
    %3158 = vmatpush1.bf16.msra.mxu0 0
    %3159 = vmatprep.subr.bf16.mxu0 0
    %3160 = vmatpush1.bf16.msra.mxu0 0
    %3161 = vmatprep.subr.bf16.mxu0 0
    %3162 = vmatpush1.bf16.msra.mxu0 0
    %3163 = vmatprep.subr.bf16.mxu0 0
    %3164 = vmatpush1.bf16.msra.mxu0 0
    %3165 = vmatprep.subr.bf16.mxu0 0
    %3166 = vmatpush1.bf16.msra.mxu0 0
    %3167 = vmatprep.subr.bf16.mxu0 0
    %3168 = vmatpush1.bf16.msra.mxu0 0
    %3169 = vmatprep.subr.bf16.mxu0 0
    %3170 = vmatpush1.bf16.msra.mxu0 0
    %3171 = vmatprep.mubr.bf16.mxu0 0
    %3172 = vmatmul.mubr.bf16.gmra.mrb[0].mxu0 %v3137
    %v3173 = vpop.f32.mrb[0].mxu0
    %v3174 = vadd.f32 0.0, %v3173
    %v3175 = vpop.f32.mrb[0].mxu0
    %v3176 = vpop.f32.mrb[0].mxu0
    %v3177 = vpop.f32.mrb[0].mxu0
    %3178 = vdwg.mxu0
    %3179 = vst [vmem:[#allocation6] sm:$0x3] %v3174
    // Predicated region
    $region98: #{_forward_core.1} parent=1 // pred_check
      _
    $region99: #{_forward_core.1} parent=1 // pred_check_branch
      %3181 = sbr.rel (0) target = $region101
    $region100: #{_forward_core.1} parent=1 // pred_region
      %s3183 = ssub.s32 32, 32
      %3184 = vsyncadd [#allocation4], %s3183
      %s3186 = sshll.u32 [#allocation6], 4
      %s3187 = int_to_ptr.vmem [resolvable:$true] %s3186
      %3189 = dma.vmem_to_hbm [thread:$0]  %s3187, 32, %s23, [#allocation4]
    $region101: #{_forward_core.1} parent=1 // pred_fallthru
      _
    // Predicated region
    $region102: #{_forward_core.1} parent=1 // pred_check
      _
    $region103: #{_forward_core.1} parent=1 // pred_check_branch
      %3191 = sbr.rel (0) target = $region105
    $region104: #{_forward_core.1} parent=1 // pred_region
      %3192 = dma.done [#allocation4], 32
    $region105: #{_forward_core.1} parent=1 // pred_fallthru
      _
    %3193 = vsyncpa [#allocation4], 1
    %3194 = vsyncpa [#allocation5], 1

</llo_original>
